<compile_context>
chip_gen: v7x
topology: tpu7x:2x2x1
jax: 0.10.0
libtpu: 0.0.40
codegen_flags: <defaults>
</compile_context>

<pallas_src>
import functools

import jax
import jax.numpy as jnp
from jax import lax
from jax.experimental import pallas as pl
from jax.experimental.pallas import tpu as pltpu

# ---------------- model dimensions (efficientnet_b0 flavour) ----------------
NUM_REGIONS = 15
EMB_DIM = 128
IMG_FEAT_DIM = 1280          # efficientnet_b0 pooled feature dim
STEM_CH = 32                 # efficientnet stem width
KSIZE, STRIDE, PAD = 3, 2, 1
H1, H2, OUT = 512, 256, 2
PATCH = KSIZE * KSIZE * 3    # im2col patch length = 27

TILE_ALIGN = 128             # keep HW tiles lane/sublane friendly


def _round_up(x, m):
    return (x + m - 1) // m * m


def _tpu_generation():
    try:
        kind = jax.devices()[0].device_kind.lower()
    except Exception:
        return 6
    for g in (7, 6, 5, 4):
        if f"v{g}" in kind or f"tpu{g}" in kind:
            return g
    return 6


_GEN = _tpu_generation()
# bf16 VPU/EUP only on v6e/v7x; v5e (and older) keep the f32 elementwise path.
_BF16_EPILOGUE = _GEN >= 6
# v7x: 64 MiB physical VMEM per TC -> cap at 48 MiB; v5e/v6e: 128 MiB -> 64 MiB.
_VMEM_LIMIT = (48 if _GEN >= 7 else 64) * 1024 * 1024


# ----------------------------- Pallas kernel ---------------------------------
def _fused_kernel(p_ref, ws_ref, bs_ref, wh_ref, bh_ref,
                  emb_ref, w1a_ref, w1b_ref, b1_ref, w2_ref, b2_ref,
                  w3_ref, b3_ref, o_ref, acc_ref, *,
                  inv_hw, real_hw, tile, needs_mask, bf16_epilogue):
    """Grid = (batch, hw_tiles).  Per HW tile: stem conv (im2col matmul) + SiLU,
    1x1 head conv + SiLU, running (masked) pooled-sum accumulation.  On the last
    tile of each image: finish the average pool and run the classifier MLP."""
    t = pl.program_id(1)

    @pl.when(t == 0)
    def _init():
        acc_ref[...] = jnp.zeros_like(acc_ref)

    # --- stem conv (bf16 MXU, f32 accumulate); small (T,32) epilogue kept f32 ---
    h = jnp.dot(p_ref[...], ws_ref[...],
                preferred_element_type=jnp.float32) + bs_ref[...]     # (T, 32)
    h = h * jax.nn.sigmoid(h)                                         # SiLU

    # --- 1x1 head conv to 1280 channels (bf16 MXU, f32 accumulate) ---
    f = jnp.dot(h.astype(jnp.bfloat16), wh_ref[...],
                preferred_element_type=jnp.float32)                   # (T, 1280)

    if bf16_epilogue:
        # v6e/v7x: bf16 bias add + SiLU (bf16 VPU/EUP), pooled sum on the MXU
        # (mask/ones row @ f, f32 accumulate) -> frees the binding VALU slot.
        fb = f.astype(jnp.bfloat16) + bh_ref[...].astype(jnp.bfloat16)
        fb = fb * jax.nn.sigmoid(fb)
        if needs_mask:
            idx = lax.broadcasted_iota(jnp.int32, (1, tile), 1) + t * tile
            row = (idx < real_hw).astype(jnp.bfloat16)                # masks pad rows
        else:
            row = jnp.ones((1, tile), jnp.bfloat16)
        acc_ref[...] += jnp.dot(row, fb, preferred_element_type=jnp.float32)
    else:
        # v5e: f32-only VPU/EUP; keep f32 epilogue and a VPU/XLU reduction.
        fv = f + bh_ref[...]
        fv = fv * jax.nn.sigmoid(fv)
        if needs_mask:
            idx = lax.broadcasted_iota(jnp.int32, (tile, 1), 0) + t * tile
            fv = jnp.where(idx < real_hw, fv, 0.0)
        acc_ref[...] += jnp.sum(fv, axis=0, keepdims=True)

    # --- last HW tile: finalize avgpool and run fused classifier MLP ---
    @pl.when(t == pl.num_programs(1) - 1)
    def _finalize():
        feat = (acc_ref[...] * inv_hw).astype(jnp.bfloat16)           # (1, 1280)
        # concat([img, emb]) @ W1 as split matmul: img @ W1a + emb @ W1b
        z = (jnp.dot(feat, w1a_ref[...], preferred_element_type=jnp.float32)
             + jnp.dot(emb_ref[...], w1b_ref[...],
                       preferred_element_type=jnp.float32)
             + b1_ref[...])
        z = jnp.maximum(z, 0.0)          # ReLU; Dropout(0.2) = identity (eval)
        z = jnp.dot(z.astype(jnp.bfloat16), w2_ref[...],
                    preferred_element_type=jnp.float32) + b2_ref[...]
        z = jnp.maximum(z, 0.0)          # ReLU; Dropout(0.1) = identity (eval)
        o_ref[...] = (jnp.dot(z.astype(jnp.bfloat16), w3_ref[...],
                              preferred_element_type=jnp.float32)
                      + b3_ref[...])                                   # (1, 2)


# ------------------------------ wrappers --------------------------------------
def _im2col(x_nhwc):
    """3x3 / stride-2 / pad-1 patch extraction (pure data movement, JAX glue)."""
    B, H, W, C = x_nhwc.shape
    xp = jnp.pad(x_nhwc, ((0, 0), (PAD, PAD), (PAD, PAD), (0, 0)))
    Ho = (H + 2 * PAD - KSIZE) // STRIDE + 1
    Wo = (W + 2 * PAD - KSIZE) // STRIDE + 1
    taps = []
    for di in range(KSIZE):
        for dj in range(KSIZE):
            taps.append(xp[:, di:di + STRIDE * Ho:STRIDE,
                           dj:dj + STRIDE * Wo:STRIDE, :])
    p = jnp.stack(taps, axis=-2)               # (B, Ho, Wo, 9, C)
    return p.reshape(B, Ho * Wo, KSIZE * KSIZE * C), Ho * Wo


def _fused_forward_call(patches, stem_w, stem_b, head_w, head_b,
                        region_emb, w1a, w1b, b1, w2, b2, w3, b3, *, hw_tile):
    B, HW, P = patches.shape
    assert hw_tile % TILE_ALIGN == 0, "hw_tile must be a multiple of 128"
    tile = min(hw_tile, _round_up(HW, TILE_ALIGN))
    hw_pad = _round_up(HW, tile)
    needs_mask = hw_pad != HW
    if needs_mask:
        # Zero-pad the spatial axis; padded rows are masked out of the pooled sum
        # inside the kernel (zero patches would otherwise bias it through the biases).
        patches = jnp.pad(patches, ((0, 0), (0, hw_pad - HW), (0, 0)))
    n_tiles = hw_pad // tile
    inv_hw = 1.0 / float(HW)

    def const(shape):
        return pl.BlockSpec(shape, lambda b, t: (0, 0))

    flops = int(2 * B * hw_pad * (P * STEM_CH + STEM_CH * IMG_FEAT_DIM
                                  + IMG_FEAT_DIM)
                + 2 * B * ((IMG_FEAT_DIM + EMB_DIM) * H1 + H1 * H2 + H2 * OUT))
    transcendentals = int(B * hw_pad * (STEM_CH + IMG_FEAT_DIM))
    bytes_accessed = int(
        patches.size * patches.dtype.itemsize
        + sum(a.size * a.dtype.itemsize for a in
              (stem_w, stem_b, head_w, head_b, region_emb,
               w1a, w1b, b1, w2, b2, w3, b3))
        + B * OUT * 4)

    kernel = functools.partial(
        _fused_kernel, inv_hw=inv_hw, real_hw=HW, tile=tile,
        needs_mask=needs_mask, bf16_epilogue=_BF16_EPILOGUE)

    out = pl.pallas_call(
        kernel,
        out_shape=jax.ShapeDtypeStruct((B, 1, OUT), jnp.float32),
        grid_spec=pltpu.PrefetchScalarGridSpec(
            num_scalar_prefetch=0,
            grid=(B, n_tiles),
            in_specs=[
                # patches: batch dim squeezed, HW tiled, full 27-wide patch dim
                pl.BlockSpec((None, tile, P), lambda b, t: (b, t, 0)),
                const((P, STEM_CH)), const((1, STEM_CH)),
                const((STEM_CH, IMG_FEAT_DIM)), const((1, IMG_FEAT_DIM)),
                # region embedding: (B, 1, 128), batch dim squeezed
                pl.BlockSpec((None, 1, EMB_DIM), lambda b, t: (b, 0, 0)),
                const((IMG_FEAT_DIM, H1)), const((EMB_DIM, H1)), const((1, H1)),
                const((H1, H2)), const((1, H2)),
                const((H2, OUT)), const((1, OUT)),
            ],
            out_specs=pl.BlockSpec((None, 1, OUT), lambda b, t: (b, 0, 0)),
            scratch_shapes=[pltpu.VMEM((1, IMG_FEAT_DIM), jnp.float32)],
        ),
        compiler_params=pltpu.CompilerParams(
            dimension_semantics=("parallel", "arbitrary"),
            vmem_limit_bytes=_VMEM_LIMIT),
        cost_estimate=pl.CostEstimate(
            flops=flops, transcendentals=transcendentals,
            bytes_accessed=bytes_accessed),
    )(patches, stem_w, stem_b, head_w, head_b, region_emb,
      w1a, w1b, b1, w2, b2, w3, b3)
    return out.reshape(B, OUT)


# --------------------------- parameter init ------------------------------------
def init_params(key):
    ks = jax.random.split(key, 12)

    def lin(k, fan_in, shape):
        bound = 1.0 / jnp.sqrt(jnp.float32(fan_in))
        return jax.random.uniform(k, shape, jnp.float32, -bound, bound)

    in_dim = IMG_FEAT_DIM + EMB_DIM
    return dict(
        stem_w=lin(ks[0], PATCH, (PATCH, STEM_CH)),
        stem_b=lin(ks[1], PATCH, (1, STEM_CH)),
        head_w=lin(ks[2], STEM_CH, (STEM_CH, IMG_FEAT_DIM)),
        head_b=lin(ks[3], STEM_CH, (1, IMG_FEAT_DIM)),
        region_emb=jax.random.normal(ks[4], (NUM_REGIONS, EMB_DIM), jnp.float32),
        w1=lin(ks[5], in_dim, (in_dim, H1)),
        b1=lin(ks[6], in_dim, (1, H1)),
        w2=lin(ks[7], H1, (H1, H2)),
        b2=lin(ks[8], H1, (1, H2)),
        w3=lin(ks[9], H2, (H2, OUT)),
        b3=lin(ks[10], H2, (1, OUT)),
    )


# ------------------------------ forward ----------------------------------------
@functools.partial(jax.jit, static_argnames=("has_region", "hw_tile"))
def forward(params, image_nchw, region_id, has_region=True, hw_tile=2048):
    B = image_nchw.shape[0]
    # bf16 BEFORE the 9x im2col expansion -> halves the (B,HW,27) HBM intermediate.
    x = jnp.transpose(image_nchw.astype(jnp.bfloat16), (0, 2, 3, 1))  # NCHW -> NHWC
    patches, _ = _im2col(x)

    if has_region:
        region_emb = jnp.take(params["region_emb"], region_id, axis=0)
    else:
        region_emb = jnp.zeros((B, EMB_DIM), jnp.float32)
    region_emb = region_emb.astype(jnp.bfloat16).reshape(B, 1, EMB_DIM)

    bf = lambda a: a.astype(jnp.bfloat16)
    w1a = params["w1"][:IMG_FEAT_DIM]
    w1b = params["w1"][IMG_FEAT_DIM:]
    return _fused_forward_call(
        patches,
        bf(params["stem_w"]), params["stem_b"],
        bf(params["head_w"]), params["head_b"],
        region_emb,
        bf(w1a), bf(w1b), params["b1"],
        bf(params["w2"]), params["b2"],
        bf(params["w3"]), params["b3"],
        hw_tile=hw_tile)


# ------------------------- pure-JAX reference (f32) ----------------------------
def forward_reference(params, image_nchw, region_id, has_region=True):
    B = image_nchw.shape[0]
    x = jnp.transpose(image_nchw, (0, 2, 3, 1)).astype(jnp.float32)
    patches, hw = _im2col(x)
    h = patches.reshape(-1, PATCH) @ params["stem_w"] + params["stem_b"]
    h = h * jax.nn.sigmoid(h)
    f = h @ params["head_w"] + params["head_b"]
    f = f * jax.nn.sigmoid(f)
    feat = f.reshape(B, hw, IMG_FEAT_DIM).mean(axis=1)
    if has_region:
        emb = jnp.take(params["region_emb"], region_id, axis=0)
    else:
        emb = jnp.zeros((B, EMB_DIM), jnp.float32)
    z = jnp.concatenate([feat, emb], axis=1) @ params["w1"] + params["b1"]
    z = jnp.maximum(z, 0.0)
    z = z @ params["w2"] + params["b2"]
    z = jnp.maximum(z, 0.0)
    return z @ params["w3"] + params["b3"]


if __name__ == "__main__":
    key = jax.random.PRNGKey(0)
    pkey, k1, k2 = jax.random.split(key, 3)
    params = init_params(pkey)

    # PyTorch-convention inputs: image (B, C, H, W), region ids (B,)
    image_a = jax.random.normal(k1, (2, 3, 32, 32), jnp.float32)  # HW=256 -> 2 tiles, no padding
    image_b = jax.random.normal(k2, (2, 3, 30, 30), jnp.float32)  # HW=225 -> padded+masked path
    region_id = jnp.array([3, 7], dtype=jnp.int32)

    out_a = forward(params, image_a, region_id, has_region=True, hw_tile=128)
    out_b = forward(params, image_b, region_id, has_region=False, hw_tile=2048)
    jax.block_until_ready(out_a)
    jax.block_until_ready(out_b)

    ref_a = forward_reference(params, image_a, region_id, has_region=True)
    ref_b = forward_reference(params, image_b, region_id, has_region=False)

    assert out_a.shape == (2, 2) and out_b.shape == (2, 2)
    assert bool(jnp.all(jnp.isfinite(out_a))) and bool(jnp.all(jnp.isfinite(out_b)))
    # loose tolerance: kernel uses bf16 MXU inputs / bf16 epilogue vs f32 reference
    assert bool(jnp.allclose(out_a, ref_a, atol=5e-2, rtol=5e-2)), (out_a, ref_a)
    assert bool(jnp.allclose(out_b, ref_b, atol=5e-2, rtol=5e-2)), (out_b, ref_b)
    print("KERNEL_OK")
</pallas_src>

<mosaic_0001>
module attributes {stable_mosaic.version = 11 : i64} {
  func.func @_fused_kernel(%arg0: i32, %arg1: i32, %arg2: memref<1x128x27xbf16, #tpu.memory_space<vmem>>, %arg3: memref<27x32xbf16, #tpu.memory_space<vmem>>, %arg4: memref<1x32xf32, #tpu.memory_space<vmem>>, %arg5: memref<32x1280xbf16, #tpu.memory_space<vmem>>, %arg6: memref<1x1280xf32, #tpu.memory_space<vmem>>, %arg7: memref<1x1x128xbf16, #tpu.memory_space<vmem>>, %arg8: memref<1280x512xbf16, #tpu.memory_space<vmem>>, %arg9: memref<128x512xbf16, #tpu.memory_space<vmem>>, %arg10: memref<1x512xf32, #tpu.memory_space<vmem>>, %arg11: memref<512x256xbf16, #tpu.memory_space<vmem>>, %arg12: memref<1x256xf32, #tpu.memory_space<vmem>>, %arg13: memref<256x2xbf16, #tpu.memory_space<vmem>>, %arg14: memref<1x2xf32, #tpu.memory_space<vmem>>, %arg15: memref<1x1x2xf32, #tpu.memory_space<vmem>>, %arg16: memref<1x1280xf32, #tpu.memory_space<vmem>>) attributes {dimension_semantics = [#tpu.dimension_semantics<parallel>, #tpu.dimension_semantics<arbitrary>], iteration_bounds = array<i64: 2, 2>, scalar_prefetch = 0 : i64, scratch_operands = 1 : i64, tpu.core_type = #tpu.core_type<tc>, window_params = [{transform_indices = @transform_0, window_bounds = array<i64: 1, 128, 27>}, {pipeline_mode = #tpu.pipeline_mode<synchronous>, transform_indices = @transform_1, window_bounds = array<i64: 27, 32>}, {pipeline_mode = #tpu.pipeline_mode<synchronous>, transform_indices = @transform_2, window_bounds = array<i64: 1, 32>}, {pipeline_mode = #tpu.pipeline_mode<synchronous>, transform_indices = @transform_3, window_bounds = array<i64: 32, 1280>}, {pipeline_mode = #tpu.pipeline_mode<synchronous>, transform_indices = @transform_4, window_bounds = array<i64: 1, 1280>}, {transform_indices = @transform_5, window_bounds = array<i64: 1, 1, 128>}, {pipeline_mode = #tpu.pipeline_mode<synchronous>, transform_indices = @transform_6, window_bounds = array<i64: 1280, 512>}, {pipeline_mode = #tpu.pipeline_mode<synchronous>, transform_indices = @transform_7, window_bounds = array<i64: 128, 512>}, {pipeline_mode = #tpu.pipeline_mode<synchronous>, transform_indices = @transform_8, window_bounds = array<i64: 1, 512>}, {pipeline_mode = #tpu.pipeline_mode<synchronous>, transform_indices = @transform_9, window_bounds = array<i64: 512, 256>}, {pipeline_mode = #tpu.pipeline_mode<synchronous>, transform_indices = @transform_10, window_bounds = array<i64: 1, 256>}, {pipeline_mode = #tpu.pipeline_mode<synchronous>, transform_indices = @transform_11, window_bounds = array<i64: 256, 2>}, {pipeline_mode = #tpu.pipeline_mode<synchronous>, transform_indices = @transform_12, window_bounds = array<i64: 1, 2>}, {transform_indices = @transform_13, window_bounds = array<i64: 1, 1, 2>}]} {
    %c0_i32 = arith.constant 0 : i32
    %0 = arith.cmpi eq, %arg1, %c0_i32 : i32
    %1 = arith.extui %0 : i1 to i32
    %c0_i32_0 = arith.constant 0 : i32
    %2 = arith.cmpi ne, %1, %c0_i32_0 : i32
    scf.if %2 {
      %cst_21 = arith.constant 0.000000e+00 : f32
      %38 = vector.broadcast %cst_21 : f32 to vector<1x1280xf32>
      %c0_22 = arith.constant 0 : index
      %c0_23 = arith.constant 0 : index
      %39 = vector.load %arg16[%c0_22, %c0_23] : memref<1x1280xf32, #tpu.memory_space<vmem>>, vector<1x1280xf32>
      tpu.vector_store %arg16[%c0_22, %c0_23], %38 {strides = array<i32>} : memref<1x1280xf32, #tpu.memory_space<vmem>>, vector<1x1280xf32>,
    } else {
    }
    %c0 = arith.constant 0 : index
    %c0_1 = arith.constant 0 : index
    %c0_2 = arith.constant 0 : index
    %3 = vector.load %arg2[%c0, %c0_1, %c0_2] : memref<1x128x27xbf16, #tpu.memory_space<vmem>>, vector<1x128x27xbf16>
    %4 = vector.shape_cast %3 : vector<1x128x27xbf16> to vector<128x27xbf16>
    %c0_3 = arith.constant 0 : index
    %c0_4 = arith.constant 0 : index
    %5 = vector.load %arg3[%c0_3, %c0_4] : memref<27x32xbf16, #tpu.memory_space<vmem>>, vector<27x32xbf16>
    %cst = arith.constant dense<0.000000e+00> : vector<128x32xf32>
    %6 = tpu.matmul %4, %5, %cst {dimension_numbers = #tpu.dot_dimension_numbers<[1], [0], [0], [1], [0, 0, 1, 1], [], []>} : vector<128x27xbf16>, vector<27x32xbf16>, vector<128x32xf32> -> vector<128x32xf32>
    %c0_5 = arith.constant 0 : index
    %c0_6 = arith.constant 0 : index
    %7 = vector.load %arg4[%c0_5, %c0_6] : memref<1x32xf32, #tpu.memory_space<vmem>>, vector<1x32xf32>
    %8 = vector.broadcast %7 : vector<1x32xf32> to vector<128x32xf32>
    %9 = arith.addf %6, %8 : vector<128x32xf32>
    %10 = arith.negf %9 : vector<128x32xf32>
    %11 = math.exp %10 : vector<128x32xf32>
    %cst_7 = arith.constant 1.000000e+00 : f32
    %12 = vector.broadcast %cst_7 : f32 to vector<128x32xf32>
    %13 = arith.addf %12, %11 : vector<128x32xf32>
    %14 = arith.divf %12, %13 : vector<128x32xf32>
    %15 = arith.mulf %9, %14 : vector<128x32xf32>
    %16 = arith.truncf %15 : vector<128x32xf32> to vector<128x32xbf16>
    %c0_8 = arith.constant 0 : index
    %c0_9 = arith.constant 0 : index
    %17 = vector.load %arg5[%c0_8, %c0_9] : memref<32x1280xbf16, #tpu.memory_space<vmem>>, vector<32x1280xbf16>
    %cst_10 = arith.constant dense<0.000000e+00> : vector<128x1280xf32>
    %18 = tpu.matmul %16, %17, %cst_10 {dimension_numbers = #tpu.dot_dimension_numbers<[1], [0], [0], [1], [0, 0, 1, 1], [], []>} : vector<128x32xbf16>, vector<32x1280xbf16>, vector<128x1280xf32> -> vector<128x1280xf32>
    %19 = arith.truncf %18 : vector<128x1280xf32> to vector<128x1280xbf16>
    %c0_11 = arith.constant 0 : index
    %c0_12 = arith.constant 0 : index
    %20 = vector.load %arg6[%c0_11, %c0_12] : memref<1x1280xf32, #tpu.memory_space<vmem>>, vector<1x1280xf32>
    %21 = arith.truncf %20 : vector<1x1280xf32> to vector<1x1280xbf16>
    %22 = vector.broadcast %21 : vector<1x1280xbf16> to vector<128x1280xbf16>
    %23 = arith.addf %19, %22 : vector<128x1280xbf16>
    %24 = arith.negf %23 : vector<128x1280xbf16>
    %25 = math.exp %24 : vector<128x1280xbf16>
    %cst_13 = arith.constant 1.000000e+00 : bf16
    %26 = vector.broadcast %cst_13 : bf16 to vector<128x1280xbf16>
    %27 = arith.addf %26, %25 : vector<128x1280xbf16>
    %28 = arith.divf %26, %27 : vector<128x1280xbf16>
    %29 = arith.mulf %23, %28 : vector<128x1280xbf16>
    %cst_14 = arith.constant 1.000000e+00 : bf16
    %30 = vector.broadcast %cst_14 : bf16 to vector<1x128xbf16>
    %c0_15 = arith.constant 0 : index
    %c0_16 = arith.constant 0 : index
    %31 = vector.load %arg16[%c0_15, %c0_16] : memref<1x1280xf32, #tpu.memory_space<vmem>>, vector<1x1280xf32>
    %cst_17 = arith.constant dense<0.000000e+00> : vector<1x1280xf32>
    %32 = tpu.matmul %30, %29, %cst_17 {dimension_numbers = #tpu.dot_dimension_numbers<[1], [0], [0], [1], [0, 0, 1, 1], [], []>} : vector<1x128xbf16>, vector<128x1280xbf16>, vector<1x1280xf32> -> vector<1x1280xf32>
    %33 = arith.addf %31, %32 : vector<1x1280xf32>
    %c0_18 = arith.constant 0 : index
    %c0_19 = arith.constant 0 : index
    %34 = vector.load %arg16[%c0_18, %c0_19] : memref<1x1280xf32, #tpu.memory_space<vmem>>, vector<1x1280xf32>
    tpu.vector_store %arg16[%c0_18, %c0_19], %33 {strides = array<i32>} : memref<1x1280xf32, #tpu.memory_space<vmem>>, vector<1x1280xf32>,
    %c1_i32 = arith.constant 1 : i32
    %35 = arith.cmpi eq, %arg1, %c1_i32 : i32
    %36 = arith.extui %35 : i1 to i32
    %c0_i32_20 = arith.constant 0 : i32
    %37 = arith.cmpi ne, %36, %c0_i32_20 : i32
    scf.if %37 {
      %c0_21 = arith.constant 0 : index
      %c0_22 = arith.constant 0 : index
      %38 = vector.load %arg16[%c0_21, %c0_22] : memref<1x1280xf32, #tpu.memory_space<vmem>>, vector<1x1280xf32>
      %cst_23 = arith.constant 3.906250e-03 : f32
      %39 = vector.broadcast %cst_23 : f32 to vector<1x1280xf32>
      %40 = arith.mulf %38, %39 : vector<1x1280xf32>
      %41 = arith.truncf %40 : vector<1x1280xf32> to vector<1x1280xbf16>
      %c0_24 = arith.constant 0 : index
      %c0_25 = arith.constant 0 : index
      %42 = vector.load %arg8[%c0_24, %c0_25] : memref<1280x512xbf16, #tpu.memory_space<vmem>>, vector<1280x512xbf16>
      %cst_26 = arith.constant dense<0.000000e+00> : vector<1x512xf32>
      %43 = tpu.matmul %41, %42, %cst_26 {dimension_numbers = #tpu.dot_dimension_numbers<[1], [0], [0], [1], [0, 0, 1, 1], [], []>} : vector<1x1280xbf16>, vector<1280x512xbf16>, vector<1x512xf32> -> vector<1x512xf32>
      %c0_27 = arith.constant 0 : index
      %c0_28 = arith.constant 0 : index
      %c0_29 = arith.constant 0 : index
      %44 = vector.load %arg7[%c0_27, %c0_28, %c0_29] : memref<1x1x128xbf16, #tpu.memory_space<vmem>>, vector<1x1x128xbf16>
      %45 = vector.shape_cast %44 : vector<1x1x128xbf16> to vector<1x128xbf16>
      %c0_30 = arith.constant 0 : index
      %c0_31 = arith.constant 0 : index
      %46 = vector.load %arg9[%c0_30, %c0_31] : memref<128x512xbf16, #tpu.memory_space<vmem>>, vector<128x512xbf16>
      %cst_32 = arith.constant dense<0.000000e+00> : vector<1x512xf32>
      %47 = tpu.matmul %45, %46, %cst_32 {dimension_numbers = #tpu.dot_dimension_numbers<[1], [0], [0], [1], [0, 0, 1, 1], [], []>} : vector<1x128xbf16>, vector<128x512xbf16>, vector<1x512xf32> -> vector<1x512xf32>
      %48 = arith.addf %43, %47 : vector<1x512xf32>
      %c0_33 = arith.constant 0 : index
      %c0_34 = arith.constant 0 : index
      %49 = vector.load %arg10[%c0_33, %c0_34] : memref<1x512xf32, #tpu.memory_space<vmem>>, vector<1x512xf32>
      %50 = arith.addf %48, %49 : vector<1x512xf32>
      %cst_35 = arith.constant 0.000000e+00 : f32
      %51 = vector.broadcast %cst_35 : f32 to vector<1x512xf32>
      %52 = arith.maximumf %50, %51 : vector<1x512xf32>
      %53 = arith.truncf %52 : vector<1x512xf32> to vector<1x512xbf16>
      %c0_36 = arith.constant 0 : index
      %c0_37 = arith.constant 0 : index
      %54 = vector.load %arg11[%c0_36, %c0_37] : memref<512x256xbf16, #tpu.memory_space<vmem>>, vector<512x256xbf16>
      %cst_38 = arith.constant dense<0.000000e+00> : vector<1x256xf32>
      %55 = tpu.matmul %53, %54, %cst_38 {dimension_numbers = #tpu.dot_dimension_numbers<[1], [0], [0], [1], [0, 0, 1, 1], [], []>} : vector<1x512xbf16>, vector<512x256xbf16>, vector<1x256xf32> -> vector<1x256xf32>
      %c0_39 = arith.constant 0 : index
      %c0_40 = arith.constant 0 : index
      %56 = vector.load %arg12[%c0_39, %c0_40] : memref<1x256xf32, #tpu.memory_space<vmem>>, vector<1x256xf32>
      %57 = arith.addf %55, %56 : vector<1x256xf32>
      %cst_41 = arith.constant 0.000000e+00 : f32
      %58 = vector.broadcast %cst_41 : f32 to vector<1x256xf32>
      %59 = arith.maximumf %57, %58 : vector<1x256xf32>
      %60 = arith.truncf %59 : vector<1x256xf32> to vector<1x256xbf16>
      %c0_42 = arith.constant 0 : index
      %c0_43 = arith.constant 0 : index
      %61 = vector.load %arg13[%c0_42, %c0_43] : memref<256x2xbf16, #tpu.memory_space<vmem>>, vector<256x2xbf16>
      %cst_44 = arith.constant dense<0.000000e+00> : vector<1x2xf32>
      %62 = tpu.matmul %60, %61, %cst_44 {dimension_numbers = #tpu.dot_dimension_numbers<[1], [0], [0], [1], [0, 0, 1, 1], [], []>} : vector<1x256xbf16>, vector<256x2xbf16>, vector<1x2xf32> -> vector<1x2xf32>
      %c0_45 = arith.constant 0 : index
      %c0_46 = arith.constant 0 : index
      %63 = vector.load %arg14[%c0_45, %c0_46] : memref<1x2xf32, #tpu.memory_space<vmem>>, vector<1x2xf32>
      %64 = arith.addf %62, %63 : vector<1x2xf32>
      %c0_47 = arith.constant 0 : index
      %c0_48 = arith.constant 0 : index
      %c0_49 = arith.constant 0 : index
      %65 = vector.load %arg15[%c0_47, %c0_48, %c0_49] : memref<1x1x2xf32, #tpu.memory_space<vmem>>, vector<1x1x2xf32>
      %66 = vector.shape_cast %65 : vector<1x1x2xf32> to vector<1x2xf32>
      %67 = vector.shape_cast %64 : vector<1x2xf32> to vector<1x1x2xf32>
      tpu.vector_store %arg15[%c0_47, %c0_48, %c0_49], %67 {strides = array<i32>} : memref<1x1x2xf32, #tpu.memory_space<vmem>>, vector<1x1x2xf32>,
    } else {
    }
    return
  }
  func.func @transform_0(%arg0: i32, %arg1: i32) -> (i32, i32, i32) {
    %c0_i32 = arith.constant 0 : i32
    %c0_i32_0 = arith.constant 0 : i32
    return %arg0, %arg1, %c0_i32 : i32, i32, i32
  }
  func.func @transform_1(%arg0: i32, %arg1: i32) -> (i32, i32) {
    %c0_i32 = arith.constant 0 : i32
    %c0_i32_0 = arith.constant 0 : i32
    %c0_i32_1 = arith.constant 0 : i32
    return %c0_i32, %c0_i32_0 : i32, i32
  }
  func.func @transform_2(%arg0: i32, %arg1: i32) -> (i32, i32) {
    %c0_i32 = arith.constant 0 : i32
    %c0_i32_0 = arith.constant 0 : i32
    %c0_i32_1 = arith.constant 0 : i32
    return %c0_i32, %c0_i32_0 : i32, i32
  }
  func.func @transform_3(%arg0: i32, %arg1: i32) -> (i32, i32) {
    %c0_i32 = arith.constant 0 : i32
    %c0_i32_0 = arith.constant 0 : i32
    %c0_i32_1 = arith.constant 0 : i32
    return %c0_i32, %c0_i32_0 : i32, i32
  }
  func.func @transform_4(%arg0: i32, %arg1: i32) -> (i32, i32) {
    %c0_i32 = arith.constant 0 : i32
    %c0_i32_0 = arith.constant 0 : i32
    %c0_i32_1 = arith.constant 0 : i32
    return %c0_i32, %c0_i32_0 : i32, i32
  }
  func.func @transform_5(%arg0: i32, %arg1: i32) -> (i32, i32, i32) {
    %c0_i32 = arith.constant 0 : i32
    %c0_i32_0 = arith.constant 0 : i32
    %c0_i32_1 = arith.constant 0 : i32
    return %arg0, %c0_i32, %c0_i32_0 : i32, i32, i32
  }
  func.func @transform_6(%arg0: i32, %arg1: i32) -> (i32, i32) {
    %c0_i32 = arith.constant 0 : i32
    %c0_i32_0 = arith.constant 0 : i32
    %c0_i32_1 = arith.constant 0 : i32
    return %c0_i32, %c0_i32_0 : i32, i32
  }
  func.func @transform_7(%arg0: i32, %arg1: i32) -> (i32, i32) {
    %c0_i32 = arith.constant 0 : i32
    %c0_i32_0 = arith.constant 0 : i32
    %c0_i32_1 = arith.constant 0 : i32
    return %c0_i32, %c0_i32_0 : i32, i32
  }
  func.func @transform_8(%arg0: i32, %arg1: i32) -> (i32, i32) {
    %c0_i32 = arith.constant 0 : i32
    %c0_i32_0 = arith.constant 0 : i32
    %c0_i32_1 = arith.constant 0 : i32
    return %c0_i32, %c0_i32_0 : i32, i32
  }
  func.func @transform_9(%arg0: i32, %arg1: i32) -> (i32, i32) {
    %c0_i32 = arith.constant 0 : i32
    %c0_i32_0 = arith.constant 0 : i32
    %c0_i32_1 = arith.constant 0 : i32
    return %c0_i32, %c0_i32_0 : i32, i32
  }
  func.func @transform_10(%arg0: i32, %arg1: i32) -> (i32, i32) {
    %c0_i32 = arith.constant 0 : i32
    %c0_i32_0 = arith.constant 0 : i32
    %c0_i32_1 = arith.constant 0 : i32
    return %c0_i32, %c0_i32_0 : i32, i32
  }
  func.func @transform_11(%arg0: i32, %arg1: i32) -> (i32, i32) {
    %c0_i32 = arith.constant 0 : i32
    %c0_i32_0 = arith.constant 0 : i32
    %c0_i32_1 = arith.constant 0 : i32
    return %c0_i32, %c0_i32_0 : i32, i32
  }
  func.func @transform_12(%arg0: i32, %arg1: i32) -> (i32, i32) {
    %c0_i32 = arith.constant 0 : i32
    %c0_i32_0 = arith.constant 0 : i32
    %c0_i32_1 = arith.constant 0 : i32
    return %c0_i32, %c0_i32_0 : i32, i32
  }
  func.func @transform_13(%arg0: i32, %arg1: i32) -> (i32, i32, i32) {
    %c0_i32 = arith.constant 0 : i32
    %c0_i32_0 = arith.constant 0 : i32
    %c0_i32_1 = arith.constant 0 : i32
    return %arg0, %c0_i32, %c0_i32_0 : i32, i32, i32
  }
}

</mosaic_0001>

<llo_original>
// kernel: forward.1
$region0: #{forward.1}
  #allocation0 [shape = 'u32[]', space=smem, size = 0x4, offset = 0x4, fixed_abs, tag = 'smem constant byte address 0x4 - core index']
  #allocation1 [shape = 'u32[144,128]{1,0:T(1,128)}', space=vmem, size = 0x12000, scoped, tag = 'internal scratch']
  #allocation2 [shape = 'f32[1,1280]{1,0:T(1,128)}', space=vmem, size = 0x1400, scoped, tag = 'scratch operand']
  %s0 = inlined_call_operand.hbm [shape: bf16[2,256,27], index: 0, kind: input, shape index: {}]
  %s1 = inlined_call_operand.hbm [shape: bf16[27,32], index: 1, kind: input, shape index: {}]
  %s2 = inlined_call_operand.hbm [shape: f32[1,32], index: 2, kind: input, shape index: {}]
  %s3 = inlined_call_operand.hbm [shape: bf16[32,1280], index: 3, kind: input, shape index: {}]
  %s4 = inlined_call_operand.hbm [shape: f32[1,1280], index: 4, kind: input, shape index: {}]
  %s5 = inlined_call_operand.hbm [shape: bf16[2,1,128], index: 5, kind: input, shape index: {}]
  %s6 = inlined_call_operand.hbm [shape: bf16[1280,512], index: 6, kind: input, shape index: {}]
  %s7 = inlined_call_operand.hbm [shape: bf16[128,512], index: 7, kind: input, shape index: {}]
  %s8 = inlined_call_operand.hbm [shape: f32[1,512], index: 8, kind: input, shape index: {}]
  %s9 = inlined_call_operand.hbm [shape: bf16[512,256], index: 9, kind: input, shape index: {}]
  %s10 = inlined_call_operand.hbm [shape: f32[1,256], index: 10, kind: input, shape index: {}]
  %s11 = inlined_call_operand.hbm [shape: bf16[256,2], index: 11, kind: input, shape index: {}]
  %s12 = inlined_call_operand.hbm [shape: f32[1,2], index: 12, kind: input, shape index: {}]
  %s13 = inlined_call_operand.hbm [shape: f32[2,1,2], index: 13, kind: output, shape index: {}]
  %s14 = sld [smem:[#allocation0]]
  $region145: #{forward.1} parent=0
    _
  %s16 = ssub.s32 1, %s14
  %s17 = scalar_select 0, %s16, %s14
  $region1: #{forward.1} parent=0
    #allocation3 [shape = 'u8[65536]{0}', space=vmem, size = 0x10000, scoped, tag = 'input window, operand 0']
    #allocation4 [shape = 's32[2]{0}', space=sflag, size = 0x8, scoped, tag = 'scoped memory for forward.1']
    #allocation5 [shape = 's32[2]{0}', space=sflag, size = 0x8, scoped, tag = 'scoped memory for forward.1']
    #allocation6 [shape = 'u8[8192]{0}', space=vmem, size = 0x2000, scoped, tag = 'input window, operand 1, single buffered']
    #allocation7 [shape = 's32[1]{0}', space=sflag, size = 0x4, scoped, tag = 'scoped memory for forward.1']
    #allocation8 [shape = 'u8[512]{0}', space=vmem, size = 0x400, scoped, tag = 'input window, operand 2, single buffered']
    #allocation9 [shape = 'u8[81920]{0}', space=vmem, size = 0x14000, scoped, tag = 'input window, operand 3, single buffered']
    #allocation10 [shape = 's32[1]{0}', space=sflag, size = 0x4, scoped, tag = 'scoped memory for forward.1']
    #allocation11 [shape = 'u8[5120]{0}', space=vmem, size = 0x1400, scoped, tag = 'input window, operand 4, single buffered']
    #allocation12 [shape = 'u8[1024]{0}', space=vmem, size = 0x400, scoped, tag = 'input window, operand 5']
    #allocation13 [shape = 's32[2]{0}', space=sflag, size = 0x8, scoped, tag = 'scoped memory for forward.1']
    #allocation14 [shape = 'u8[1310720]{0}', space=vmem, size = 0x140000, scoped, tag = 'input window, operand 6, single buffered']
    #allocation15 [shape = 'u8[131072]{0}', space=vmem, size = 0x20000, scoped, tag = 'input window, operand 7, single buffered']
    #allocation16 [shape = 's32[1]{0}', space=sflag, size = 0x4, scoped, tag = 'scoped memory for forward.1']
    #allocation17 [shape = 'u8[2048]{0}', space=vmem, size = 0x800, scoped, tag = 'input window, operand 8, single buffered']
    #allocation18 [shape = 'u8[262144]{0}', space=vmem, size = 0x40000, scoped, tag = 'input window, operand 9, single buffered']
    #allocation19 [shape = 's32[1]{0}', space=sflag, size = 0x4, scoped, tag = 'scoped memory for forward.1']
    #allocation20 [shape = 'u8[1024]{0}', space=vmem, size = 0x400, scoped, tag = 'input window, operand 10, single buffered']
    #allocation21 [shape = 'u8[65536]{0}', space=vmem, size = 0x10000, scoped, tag = 'input window, operand 11, single buffered']
    #allocation22 [shape = 's32[1]{0}', space=sflag, size = 0x4, scoped, tag = 'scoped memory for forward.1']
    #allocation23 [shape = 'u8[512]{0}', space=vmem, size = 0x400, scoped, tag = 'input window, operand 12, single buffered']
    #allocation24 [shape = 'u8[1024]{0}', space=vmem, size = 0x400, scoped, tag = 'output window, operand 0']
    %18 = vsyncpa [#allocation4], 0
    %s19 = scalar_lea.sflag [#allocation4], 1
    %20 = vsyncpa %s19, 0
    %21 = vsyncpa [#allocation7], 0
    %22 = vsyncpa [#allocation10], 0
    %23 = vsyncpa [#allocation13], 0
    %s24 = scalar_lea.sflag [#allocation13], 1
    %25 = vsyncpa %s24, 0
    %26 = vsyncpa [#allocation16], 0
    %27 = vsyncpa [#allocation19], 0
    %28 = vsyncpa [#allocation22], 0
    %29 = vsyncpa [#allocation5], 0
    %s30 = scalar_lea.sflag [#allocation5], 1
    %31 = vsyncpa %s30, 0
    loop: start=0, step=1, limit=6
    $region2: #{forward.1} parent=1 // loop_pre_header
      _
    $region3: #{forward.1} parent=1 // loop_header
      %s33 = sphi 0, %s37
      %p34 = scmp.ge.s32.totalorder %s33, 6
      %s40 = sphi 0, %s52
      %s41 = sphi 0, %s48
      %s42 = sphi 0, %s40
      %s43 = sphi 0, %s41
      %s44 = sphi 0, %s42
      %s45 = sphi 0, %s43
      %s57 = sphi 0, %s59
      %s60 = sphi 0, %s57
      %s61 = sphi 0, %s60
      %s77 = sphi 0, %s61
      %s81 = sphi 0, %s81
      %s83 = sphi 0, %s81
      %s84 = sphi 0, %s83
      %s98 = sphi 0, %s84
      %s102 = sphi 0, %s102
      %s104 = sphi 0, %s102
      %s105 = sphi 0, %s104
      %s119 = sphi 0, %s105
      %s123 = sphi 0, %s123
      %s125 = sphi 0, %s123
      %s126 = sphi 0, %s125
      %s140 = sphi 0, %s126
      %s144 = sphi 0, %s144
      %s146 = sphi 0, %s144
      %s147 = sphi 0, %s146
      %s161 = sphi 0, %s147
      %s167 = sphi 0, %s169
      %s170 = sphi 0, %s167
      %s171 = sphi 0, %s170
      %s187 = sphi 0, %s171
      %s191 = sphi 0, %s191
      %s193 = sphi 0, %s191
      %s194 = sphi 0, %s193
      %s208 = sphi 0, %s194
      %s212 = sphi 0, %s212
      %s214 = sphi 0, %s212
      %s215 = sphi 0, %s214
      %s229 = sphi 0, %s215
      %s233 = sphi 0, %s233
      %s235 = sphi 0, %s233
      %s236 = sphi 0, %s235
      %s250 = sphi 0, %s236
      %s254 = sphi 0, %s254
      %s256 = sphi 0, %s254
      %s257 = sphi 0, %s256
      %s271 = sphi 0, %s257
      %s275 = sphi 0, %s275
      %s277 = sphi 0, %s275
      %s278 = sphi 0, %s277
      %s292 = sphi 0, %s278
      %s296 = sphi 0, %s296
      %s298 = sphi 0, %s296
      %s299 = sphi 0, %s298
      %s313 = sphi 0, %s299
      %s317 = sphi 0, %s317
      %s319 = sphi 0, %s317
      %s320 = sphi 0, %s319
      %s334 = sphi 0, %s320
      %s340 = sphi 0, %s342
      %s343 = sphi 0, %s340
      %s344 = sphi 0, %s343
      %s360 = sphi 0, %s344
    $region4: #{forward.1} parent=1 // loop_header_branch
      %36 = sbr.rel (%p34) target = $region8
    $region5: #{forward.1} parent=1 // loop_body
      %s38 = ssub.s32 %s33, 1
      %s39 = ssub.s32 %s33, 2
      %s46 = sadd.s32 1, %s41
      %p47 = scmp.ge.s32.totalorder %s46, 2
      %s48 = scalar_select %p47, 0, %s46
      %s49 = sadd.s32 1, %s40
      %s50 = scalar_select %p47, %s49, %s40
      %p51 = scmp.ge.s32.totalorder %s50, 2
      %s52 = scalar_select %p51, 0, %s50
      %s53 = ssub.s32 %s40, %s52
      %s54 = ssub.s32 %s41, %s48
      %s55 = sor.u32 %s53, %s54
      %p56 = scmp.eq.s32.totalorder %s55, 0
      %s58 = sadd.s32 %s57, 1
      %s59 = scalar_select %p56, %s57, %s58
      %p62 = pneg %p56
      %p63 = scmp.eq.s32.totalorder %s33, 3
      %p64 = por %p62, %p63
      %p65 = scmp.ne.s32.totalorder %s57, %s60
      %p66 = scmp.eq.s32.totalorder %s33, 0
      %p67 = por %p65, %p66
      %p68 = scmp.ne.s32.totalorder %s57, %s60
      %p69 = scmp.eq.s32.totalorder %s38, 3
      %p70 = por %p68, %p69
      %p71 = scmp.ne.s32.totalorder %s60, %s61
      %p72 = scmp.eq.s32.totalorder %s38, 0
      %p73 = por %p71, %p72
      %p74 = scmp.ne.s32.totalorder %s60, %s61
      %p75 = scmp.eq.s32.totalorder %s39, 3
      %p76 = por %p74, %p75
      %p78 = scmp.ne.s32.totalorder %s61, %s77
      %p79 = scmp.eq.s32.totalorder %s39, 0
      %p80 = por %p78, %p79
      %s82 = sadd.s32 %s81, 1
      %p85 = scmp.eq.s32.totalorder %s33, 3
      %p86 = scmp.ne.s32.totalorder %s81, %s83
      %p87 = scmp.eq.s32.totalorder %s33, 0
      %p88 = por %p86, %p87
      %p89 = scmp.ne.s32.totalorder %s81, %s83
      %p90 = scmp.eq.s32.totalorder %s38, 3
      %p91 = por %p89, %p90
      %p92 = scmp.ne.s32.totalorder %s83, %s84
      %p93 = scmp.eq.s32.totalorder %s38, 0
      %p94 = por %p92, %p93
      %p95 = scmp.ne.s32.totalorder %s83, %s84
      %p96 = scmp.eq.s32.totalorder %s39, 3
      %p97 = por %p95, %p96
      %p99 = scmp.ne.s32.totalorder %s84, %s98
      %p100 = scmp.eq.s32.totalorder %s39, 0
      %p101 = por %p99, %p100
      %s103 = sadd.s32 %s102, 1
      %p106 = scmp.eq.s32.totalorder %s33, 3
      %p107 = scmp.ne.s32.totalorder %s102, %s104
      %p108 = scmp.eq.s32.totalorder %s33, 0
      %p109 = por %p107, %p108
      %p110 = scmp.ne.s32.totalorder %s102, %s104
      %p111 = scmp.eq.s32.totalorder %s38, 3
      %p112 = por %p110, %p111
      %p113 = scmp.ne.s32.totalorder %s104, %s105
      %p114 = scmp.eq.s32.totalorder %s38, 0
      %p115 = por %p113, %p114
      %p116 = scmp.ne.s32.totalorder %s104, %s105
      %p117 = scmp.eq.s32.totalorder %s39, 3
      %p118 = por %p116, %p117
      %p120 = scmp.ne.s32.totalorder %s105, %s119
      %p121 = scmp.eq.s32.totalorder %s39, 0
      %p122 = por %p120, %p121
      %s124 = sadd.s32 %s123, 1
      %p127 = scmp.eq.s32.totalorder %s33, 3
      %p128 = scmp.ne.s32.totalorder %s123, %s125
      %p129 = scmp.eq.s32.totalorder %s33, 0
      %p130 = por %p128, %p129
      %p131 = scmp.ne.s32.totalorder %s123, %s125
      %p132 = scmp.eq.s32.totalorder %s38, 3
      %p133 = por %p131, %p132
      %p134 = scmp.ne.s32.totalorder %s125, %s126
      %p135 = scmp.eq.s32.totalorder %s38, 0
      %p136 = por %p134, %p135
      %p137 = scmp.ne.s32.totalorder %s125, %s126
      %p138 = scmp.eq.s32.totalorder %s39, 3
      %p139 = por %p137, %p138
      %p141 = scmp.ne.s32.totalorder %s126, %s140
      %p142 = scmp.eq.s32.totalorder %s39, 0
      %p143 = por %p141, %p142
      %s145 = sadd.s32 %s144, 1
      %p148 = scmp.eq.s32.totalorder %s33, 3
      %p149 = scmp.ne.s32.totalorder %s144, %s146
      %p150 = scmp.eq.s32.totalorder %s33, 0
      %p151 = por %p149, %p150
      %p152 = scmp.ne.s32.totalorder %s144, %s146
      %p153 = scmp.eq.s32.totalorder %s38, 3
      %p154 = por %p152, %p153
      %p155 = scmp.ne.s32.totalorder %s146, %s147
      %p156 = scmp.eq.s32.totalorder %s38, 0
      %p157 = por %p155, %p156
      %p158 = scmp.ne.s32.totalorder %s146, %s147
      %p159 = scmp.eq.s32.totalorder %s39, 3
      %p160 = por %p158, %p159
      %p162 = scmp.ne.s32.totalorder %s147, %s161
      %p163 = scmp.eq.s32.totalorder %s39, 0
      %p164 = por %p162, %p163
      %s165 = ssub.s32 %s40, %s52
      %p166 = scmp.eq.s32.totalorder %s165, 0
      %s168 = sadd.s32 %s167, 1
      %s169 = scalar_select %p166, %s167, %s168
      %p172 = pneg %p166
      %p173 = scmp.eq.s32.totalorder %s33, 3
      %p174 = por %p172, %p173
      %p175 = scmp.ne.s32.totalorder %s167, %s170
      %p176 = scmp.eq.s32.totalorder %s33, 0
      %p177 = por %p175, %p176
      %p178 = scmp.ne.s32.totalorder %s167, %s170
      %p179 = scmp.eq.s32.totalorder %s38, 3
      %p180 = por %p178, %p179
      %p181 = scmp.ne.s32.totalorder %s170, %s171
      %p182 = scmp.eq.s32.totalorder %s38, 0
      %p183 = por %p181, %p182
      %p184 = scmp.ne.s32.totalorder %s170, %s171
      %p185 = scmp.eq.s32.totalorder %s39, 3
      %p186 = por %p184, %p185
      %p188 = scmp.ne.s32.totalorder %s171, %s187
      %p189 = scmp.eq.s32.totalorder %s39, 0
      %p190 = por %p188, %p189
      %s192 = sadd.s32 %s191, 1
      %p195 = scmp.eq.s32.totalorder %s33, 3
      %p196 = scmp.ne.s32.totalorder %s191, %s193
      %p197 = scmp.eq.s32.totalorder %s33, 0
      %p198 = por %p196, %p197
      %p199 = scmp.ne.s32.totalorder %s191, %s193
      %p200 = scmp.eq.s32.totalorder %s38, 3
      %p201 = por %p199, %p200
      %p202 = scmp.ne.s32.totalorder %s193, %s194
      %p203 = scmp.eq.s32.totalorder %s38, 0
      %p204 = por %p202, %p203
      %p205 = scmp.ne.s32.totalorder %s193, %s194
      %p206 = scmp.eq.s32.totalorder %s39, 3
      %p207 = por %p205, %p206
      %p209 = scmp.ne.s32.totalorder %s194, %s208
      %p210 = scmp.eq.s32.totalorder %s39, 0
      %p211 = por %p209, %p210
      %s213 = sadd.s32 %s212, 1
      %p216 = scmp.eq.s32.totalorder %s33, 3
      %p217 = scmp.ne.s32.totalorder %s212, %s214
      %p218 = scmp.eq.s32.totalorder %s33, 0
      %p219 = por %p217, %p218
      %p220 = scmp.ne.s32.totalorder %s212, %s214
      %p221 = scmp.eq.s32.totalorder %s38, 3
      %p222 = por %p220, %p221
      %p223 = scmp.ne.s32.totalorder %s214, %s215
      %p224 = scmp.eq.s32.totalorder %s38, 0
      %p225 = por %p223, %p224
      %p226 = scmp.ne.s32.totalorder %s214, %s215
      %p227 = scmp.eq.s32.totalorder %s39, 3
      %p228 = por %p226, %p227
      %p230 = scmp.ne.s32.totalorder %s215, %s229
      %p231 = scmp.eq.s32.totalorder %s39, 0
      %p232 = por %p230, %p231
      %s234 = sadd.s32 %s233, 1
      %p237 = scmp.eq.s32.totalorder %s33, 3
      %p238 = scmp.ne.s32.totalorder %s233, %s235
      %p239 = scmp.eq.s32.totalorder %s33, 0
      %p240 = por %p238, %p239
      %p241 = scmp.ne.s32.totalorder %s233, %s235
      %p242 = scmp.eq.s32.totalorder %s38, 3
      %p243 = por %p241, %p242
      %p244 = scmp.ne.s32.totalorder %s235, %s236
      %p245 = scmp.eq.s32.totalorder %s38, 0
      %p246 = por %p244, %p245
      %p247 = scmp.ne.s32.totalorder %s235, %s236
      %p248 = scmp.eq.s32.totalorder %s39, 3
      %p249 = por %p247, %p248
      %p251 = scmp.ne.s32.totalorder %s236, %s250
      %p252 = scmp.eq.s32.totalorder %s39, 0
      %p253 = por %p251, %p252
      %s255 = sadd.s32 %s254, 1
      %p258 = scmp.eq.s32.totalorder %s33, 3
      %p259 = scmp.ne.s32.totalorder %s254, %s256
      %p260 = scmp.eq.s32.totalorder %s33, 0
      %p261 = por %p259, %p260
      %p262 = scmp.ne.s32.totalorder %s254, %s256
      %p263 = scmp.eq.s32.totalorder %s38, 3
      %p264 = por %p262, %p263
      %p265 = scmp.ne.s32.totalorder %s256, %s257
      %p266 = scmp.eq.s32.totalorder %s38, 0
      %p267 = por %p265, %p266
      %p268 = scmp.ne.s32.totalorder %s256, %s257
      %p269 = scmp.eq.s32.totalorder %s39, 3
      %p270 = por %p268, %p269
      %p272 = scmp.ne.s32.totalorder %s257, %s271
      %p273 = scmp.eq.s32.totalorder %s39, 0
      %p274 = por %p272, %p273
      %s276 = sadd.s32 %s275, 1
      %p279 = scmp.eq.s32.totalorder %s33, 3
      %p280 = scmp.ne.s32.totalorder %s275, %s277
      %p281 = scmp.eq.s32.totalorder %s33, 0
      %p282 = por %p280, %p281
      %p283 = scmp.ne.s32.totalorder %s275, %s277
      %p284 = scmp.eq.s32.totalorder %s38, 3
      %p285 = por %p283, %p284
      %p286 = scmp.ne.s32.totalorder %s277, %s278
      %p287 = scmp.eq.s32.totalorder %s38, 0
      %p288 = por %p286, %p287
      %p289 = scmp.ne.s32.totalorder %s277, %s278
      %p290 = scmp.eq.s32.totalorder %s39, 3
      %p291 = por %p289, %p290
      %p293 = scmp.ne.s32.totalorder %s278, %s292
      %p294 = scmp.eq.s32.totalorder %s39, 0
      %p295 = por %p293, %p294
      %s297 = sadd.s32 %s296, 1
      %p300 = scmp.eq.s32.totalorder %s33, 3
      %p301 = scmp.ne.s32.totalorder %s296, %s298
      %p302 = scmp.eq.s32.totalorder %s33, 0
      %p303 = por %p301, %p302
      %p304 = scmp.ne.s32.totalorder %s296, %s298
      %p305 = scmp.eq.s32.totalorder %s38, 3
      %p306 = por %p304, %p305
      %p307 = scmp.ne.s32.totalorder %s298, %s299
      %p308 = scmp.eq.s32.totalorder %s38, 0
      %p309 = por %p307, %p308
      %p310 = scmp.ne.s32.totalorder %s298, %s299
      %p311 = scmp.eq.s32.totalorder %s39, 3
      %p312 = por %p310, %p311
      %p314 = scmp.ne.s32.totalorder %s299, %s313
      %p315 = scmp.eq.s32.totalorder %s39, 0
      %p316 = por %p314, %p315
      %s318 = sadd.s32 %s317, 1
      %p321 = scmp.eq.s32.totalorder %s33, 3
      %p322 = scmp.ne.s32.totalorder %s317, %s319
      %p323 = scmp.eq.s32.totalorder %s33, 0
      %p324 = por %p322, %p323
      %p325 = scmp.ne.s32.totalorder %s317, %s319
      %p326 = scmp.eq.s32.totalorder %s38, 3
      %p327 = por %p325, %p326
      %p328 = scmp.ne.s32.totalorder %s319, %s320
      %p329 = scmp.eq.s32.totalorder %s38, 0
      %p330 = por %p328, %p329
      %p331 = scmp.ne.s32.totalorder %s319, %s320
      %p332 = scmp.eq.s32.totalorder %s39, 3
      %p333 = por %p331, %p332
      %p335 = scmp.ne.s32.totalorder %s320, %s334
      %p336 = scmp.eq.s32.totalorder %s39, 0
      %p337 = por %p335, %p336
      %s338 = ssub.s32 %s40, %s52
      %p339 = scmp.eq.s32.totalorder %s338, 0
      %s341 = sadd.s32 %s340, 1
      %s342 = scalar_select %p339, %s340, %s341
      %p345 = pneg %p339
      %p346 = scmp.eq.s32.totalorder %s33, 3
      %p347 = por %p345, %p346
      %p348 = scmp.ne.s32.totalorder %s340, %s343
      %p349 = scmp.eq.s32.totalorder %s33, 0
      %p350 = por %p348, %p349
      %p351 = scmp.ne.s32.totalorder %s340, %s343
      %p352 = scmp.eq.s32.totalorder %s38, 3
      %p353 = por %p351, %p352
      %p354 = scmp.ne.s32.totalorder %s343, %s344
      %p355 = scmp.eq.s32.totalorder %s38, 0
      %p356 = por %p354, %p355
      %p357 = scmp.ne.s32.totalorder %s343, %s344
      %p358 = scmp.eq.s32.totalorder %s39, 3
      %p359 = por %p357, %p358
      %p361 = scmp.ne.s32.totalorder %s344, %s360
      %p362 = scmp.eq.s32.totalorder %s39, 0
      %p363 = por %p361, %p362
      %p364 = scmp.le.s32.totalorder 1, %s33
      %p365 = scmp.lt.s32.totalorder %s33, 5
      %p366 = pnand %p364, %p365
      %p367 = pneg %p366
      // Predicated region
      $region9: #{forward.1} parent=5 // pred_check
        _
      $region10: #{forward.1} parent=5 // pred_check_branch
        %369 = sbr.rel (%p366) target = $region12
      $region11: #{forward.1} parent=5 // pred_region
        %s370 = ssub.s32 %s33, 1
        // Predicated region
        $region13: #{forward.1} parent=11 // pred_check
          %p371 = pneg %p94
        $region14: #{forward.1} parent=11 // pred_check_branch
          %373 = sbr.rel (%p371) target = $region16
        $region15: #{forward.1} parent=11 // pred_region
          %s375 = ssub.s32 256, 256
          %376 = vsyncadd [#allocation7], %s375
          %s377 = sshll.u32 [#allocation6], 4
          %s378 = int_to_ptr.vmem [resolvable:$true] %s377
          %383 = dma.hbm_to_vmem [thread:$0]  %s1, 256, %s378, [#allocation7], 64, 64, 4
        $region16: #{forward.1} parent=11 // pred_fallthru
          _
        // Predicated region
        $region17: #{forward.1} parent=11 // pred_check
          %p384 = pneg %p115
        $region18: #{forward.1} parent=11 // pred_check_branch
          %386 = sbr.rel (%p384) target = $region20
        $region19: #{forward.1} parent=11 // pred_region
          %s388 = ssub.s32 16, 16
          %389 = vsyncadd [#allocation7], %s388
          %s391 = sshll.u32 [#allocation8], 4
          %s392 = int_to_ptr.vmem [resolvable:$true] %s391
          %394 = dma.hbm_to_vmem [thread:$0]  %s2, 16, %s392, [#allocation7]
        $region20: #{forward.1} parent=11 // pred_fallthru
          _
        // Predicated region
        $region21: #{forward.1} parent=11 // pred_check
          %p395 = pneg %p136
        $region22: #{forward.1} parent=11 // pred_check_branch
          %397 = sbr.rel (%p395) target = $region24
        $region23: #{forward.1} parent=11 // pred_region
          %s399 = ssub.s32 2560, 2560
          %400 = vsyncadd [#allocation10], %s399
          %s401 = sshll.u32 [#allocation9], 4
          %s402 = int_to_ptr.vmem [resolvable:$true] %s401
          %407 = dma.hbm_to_vmem [thread:$0]  %s3, 2560, %s402, [#allocation10], 640, 640, 40
        $region24: #{forward.1} parent=11 // pred_fallthru
          _
        // Predicated region
        $region25: #{forward.1} parent=11 // pred_check
          %p408 = pneg %p157
        $region26: #{forward.1} parent=11 // pred_check_branch
          %410 = sbr.rel (%p408) target = $region28
        $region27: #{forward.1} parent=11 // pred_region
          %s412 = ssub.s32 160, 160
          %413 = vsyncadd [#allocation10], %s412
          %s415 = sshll.u32 [#allocation11], 4
          %s416 = int_to_ptr.vmem [resolvable:$true] %s415
          %418 = dma.hbm_to_vmem [thread:$0]  %s4, 160, %s416, [#allocation10]
        $region28: #{forward.1} parent=11 // pred_fallthru
          _
        // Predicated region
        $region29: #{forward.1} parent=11 // pred_check
          %p419 = pneg %p204
        $region30: #{forward.1} parent=11 // pred_check_branch
          %421 = sbr.rel (%p419) target = $region32
        $region31: #{forward.1} parent=11 // pred_region
          %s423 = ssub.s32 40960, 40960
          %424 = vsyncadd [#allocation13], %s423
          %s425 = sshll.u32 [#allocation14], 4
          %s426 = int_to_ptr.vmem [resolvable:$true] %s425
          %431 = dma.hbm_to_vmem [thread:$0]  %s6, 40960, %s426, [#allocation13], 256, 256, 16
        $region32: #{forward.1} parent=11 // pred_fallthru
          _
        // Predicated region
        $region33: #{forward.1} parent=11 // pred_check
          %p432 = pneg %p225
        $region34: #{forward.1} parent=11 // pred_check_branch
          %434 = sbr.rel (%p432) target = $region36
        $region35: #{forward.1} parent=11 // pred_region
          %s436 = ssub.s32 4096, 4096
          %437 = vsyncadd [#allocation16], %s436
          %s438 = sshll.u32 [#allocation15], 4
          %s439 = int_to_ptr.vmem [resolvable:$true] %s438
          %444 = dma.hbm_to_vmem [thread:$0]  %s7, 4096, %s439, [#allocation16], 256, 256, 16
        $region36: #{forward.1} parent=11 // pred_fallthru
          _
        // Predicated region
        $region37: #{forward.1} parent=11 // pred_check
          %p445 = pneg %p246
        $region38: #{forward.1} parent=11 // pred_check_branch
          %447 = sbr.rel (%p445) target = $region40
        $region39: #{forward.1} parent=11 // pred_region
          %s449 = ssub.s32 64, 64
          %450 = vsyncadd [#allocation16], %s449
          %s452 = sshll.u32 [#allocation17], 4
          %s453 = int_to_ptr.vmem [resolvable:$true] %s452
          %455 = dma.hbm_to_vmem [thread:$0]  %s8, 64, %s453, [#allocation16]
        $region40: #{forward.1} parent=11 // pred_fallthru
          _
        // Predicated region
        $region41: #{forward.1} parent=11 // pred_check
          %p456 = pneg %p267
        $region42: #{forward.1} parent=11 // pred_check_branch
          %458 = sbr.rel (%p456) target = $region44
        $region43: #{forward.1} parent=11 // pred_region
          %s460 = ssub.s32 8192, 8192
          %461 = vsyncadd [#allocation19], %s460
          %s462 = sshll.u32 [#allocation18], 4
          %s463 = int_to_ptr.vmem [resolvable:$true] %s462
          %468 = dma.hbm_to_vmem [thread:$0]  %s9, 8192, %s463, [#allocation19], 128, 128, 8
        $region44: #{forward.1} parent=11 // pred_fallthru
          _
        // Predicated region
        $region45: #{forward.1} parent=11 // pred_check
          %p469 = pneg %p288
        $region46: #{forward.1} parent=11 // pred_check_branch
          %471 = sbr.rel (%p469) target = $region48
        $region47: #{forward.1} parent=11 // pred_region
          %s473 = ssub.s32 32, 32
          %474 = vsyncadd [#allocation19], %s473
          %s476 = sshll.u32 [#allocation20], 4
          %s477 = int_to_ptr.vmem [resolvable:$true] %s476
          %479 = dma.hbm_to_vmem [thread:$0]  %s10, 32, %s477, [#allocation19]
        $region48: #{forward.1} parent=11 // pred_fallthru
          _
        // Predicated region
        $region49: #{forward.1} parent=11 // pred_check
          %p480 = pneg %p309
        $region50: #{forward.1} parent=11 // pred_check_branch
          %482 = sbr.rel (%p480) target = $region52
        $region51: #{forward.1} parent=11 // pred_region
          %s484 = ssub.s32 2048, 2048
          %485 = vsyncadd [#allocation22], %s484
          %s486 = sshll.u32 [#allocation21], 4
          %s487 = int_to_ptr.vmem [resolvable:$true] %s486
          %492 = dma.hbm_to_vmem [thread:$0]  %s11, 2048, %s487, [#allocation22], 64, 64, 4
        $region52: #{forward.1} parent=11 // pred_fallthru
          _
        // Predicated region
        $region53: #{forward.1} parent=11 // pred_check
          %p493 = pneg %p330
        $region54: #{forward.1} parent=11 // pred_check_branch
          %495 = sbr.rel (%p493) target = $region56
        $region55: #{forward.1} parent=11 // pred_region
          %s497 = ssub.s32 16, 16
          %498 = vsyncadd [#allocation22], %s497
          %s500 = sshll.u32 [#allocation23], 4
          %s501 = int_to_ptr.vmem [resolvable:$true] %s500
          %503 = dma.hbm_to_vmem [thread:$0]  %s12, 16, %s501, [#allocation22]
        $region56: #{forward.1} parent=11 // pred_fallthru
          _
      $region12: #{forward.1} parent=5 // pred_fallthru
        _
      %p504 = scmp.lt.s32.totalorder %s33, 4
      // Predicated region
      $region57: #{forward.1} parent=5 // pred_check
        %p505 = pneg %p504
      $region58: #{forward.1} parent=5 // pred_check_branch
        %507 = sbr.rel (%p505) target = $region60
      $region59: #{forward.1} parent=5 // pred_region
        // Predicated region
        $region61: #{forward.1} parent=59 // pred_check
          %p508 = pneg %p67
        $region62: #{forward.1} parent=59 // pred_check_branch
          %510 = sbr.rel (%p508) target = $region64
        $region63: #{forward.1} parent=59 // pred_region
          %s511 = sand.u32 %s57, 1
          %s512 = scalar_lea.sflag [#allocation4], %s511
          %s513 = sand.u32 %s57, 1
          %s514 = smul.addr %s513, 64
          %s515 = scalar_lea.vmem [#allocation3], %s514
          %s516 = smul.u32 16, %s41
          %s518 = ssub.s32 1024, 1024
          %519 = vsyncadd %s512, %s518
          %s520 = smul.addr %s40, 32
          %s521 = sadd.s32 %s516, %s520
          %s522 = smul.addr %s521, 64
          %s523 = scalar_lea.hbm %s0, %s522
          %s524 = sshll.u32 %s515, 4
          %s525 = int_to_ptr.vmem [resolvable:$true] %s524
          %530 = dma.hbm_to_vmem [thread:$0]  %s523, 1024, %s525, %s512, 64, 64, 4
        $region64: #{forward.1} parent=59 // pred_fallthru
          _
        // Predicated region
        $region65: #{forward.1} parent=59 // pred_check
          %p531 = pneg %p177
        $region66: #{forward.1} parent=59 // pred_check_branch
          %533 = sbr.rel (%p531) target = $region68
        $region67: #{forward.1} parent=59 // pred_region
          %s534 = sand.u32 %s33, 1
          %s535 = scalar_lea.sflag [#allocation13], %s534
          %s536 = sand.u32 %s167, 1
          %s537 = scalar_lea.vmem [#allocation12], %s536
          %s539 = ssub.s32 16, 16
          %540 = vsyncadd %s535, %s539
          %s541 = smul.addr %s40, 16
          %s542 = scalar_lea.hbm %s5, %s541
          %s544 = sshll.u32 %s537, 4
          %s545 = int_to_ptr.vmem [resolvable:$true] %s544
          %547 = dma.hbm_to_vmem [thread:$0]  %s542, 16, %s545, %s535
        $region68: #{forward.1} parent=59 // pred_fallthru
          _
      $region60: #{forward.1} parent=5 // pred_fallthru
        _
      %p548 = scmp.le.s32.totalorder 1, %s33
      %p549 = scmp.lt.s32.totalorder %s33, 5
      %p550 = pnand %p548, %p549
      %p551 = pneg %p550
      // Predicated region
      $region69: #{forward.1} parent=5 // pred_check
        _
      $region70: #{forward.1} parent=5 // pred_check_branch
        %553 = sbr.rel (%p550) target = $region72
      $region71: #{forward.1} parent=5 // pred_region
        %s554 = ssub.s32 %s33, 1
        %s555 = sand.u32 %s60, 1
        %s556 = scalar_lea.sflag [#allocation4], %s555
        %s557 = sand.u32 %s60, 1
        %s558 = smul.addr %s557, 64
        %s559 = scalar_lea.vmem [#allocation3], %s558
        // Predicated region
        $region73: #{forward.1} parent=71 // pred_check
          %p560 = pneg %p73
        $region74: #{forward.1} parent=71 // pred_check_branch
          %562 = sbr.rel (%p560) target = $region76
        $region75: #{forward.1} parent=71 // pred_region
          %563 = dma.done %s556, 1024
        $region76: #{forward.1} parent=71 // pred_fallthru
          _
        // Predicated region
        $region77: #{forward.1} parent=71 // pred_check
          %p564 = pneg %p94
        $region78: #{forward.1} parent=71 // pred_check_branch
          %566 = sbr.rel (%p564) target = $region80
        $region79: #{forward.1} parent=71 // pred_region
          %567 = dma.done [#allocation7], 256
        $region80: #{forward.1} parent=71 // pred_fallthru
          _
        // Predicated region
        $region81: #{forward.1} parent=71 // pred_check
          %p568 = pneg %p115
        $region82: #{forward.1} parent=71 // pred_check_branch
          %570 = sbr.rel (%p568) target = $region84
        $region83: #{forward.1} parent=71 // pred_region
          %571 = dma.done [#allocation7], 16
        $region84: #{forward.1} parent=71 // pred_fallthru
          _
        // Predicated region
        $region85: #{forward.1} parent=71 // pred_check
          %p572 = pneg %p136
        $region86: #{forward.1} parent=71 // pred_check_branch
          %574 = sbr.rel (%p572) target = $region88
        $region87: #{forward.1} parent=71 // pred_region
          %575 = dma.done [#allocation10], 2560
        $region88: #{forward.1} parent=71 // pred_fallthru
          _
        // Predicated region
        $region89: #{forward.1} parent=71 // pred_check
          %p576 = pneg %p157
        $region90: #{forward.1} parent=71 // pred_check_branch
          %578 = sbr.rel (%p576) target = $region92
        $region91: #{forward.1} parent=71 // pred_region
          %579 = dma.done [#allocation10], 160
        $region92: #{forward.1} parent=71 // pred_fallthru
          _
        %s580 = sand.u32 %s38, 1
        %s581 = scalar_lea.sflag [#allocation13], %s580
        %s582 = sand.u32 %s170, 1
        %s583 = scalar_lea.vmem [#allocation12], %s582
        // Predicated region
        $region93: #{forward.1} parent=71 // pred_check
          %p584 = pneg %p183
        $region94: #{forward.1} parent=71 // pred_check_branch
          %586 = sbr.rel (%p584) target = $region96
        $region95: #{forward.1} parent=71 // pred_region
          %587 = dma.done %s581, 16
        $region96: #{forward.1} parent=71 // pred_fallthru
          _
        // Predicated region
        $region97: #{forward.1} parent=71 // pred_check
          %p588 = pneg %p204
        $region98: #{forward.1} parent=71 // pred_check_branch
          %590 = sbr.rel (%p588) target = $region100
        $region99: #{forward.1} parent=71 // pred_region
          %591 = dma.done [#allocation13], 40960
        $region100: #{forward.1} parent=71 // pred_fallthru
          _
        // Predicated region
        $region101: #{forward.1} parent=71 // pred_check
          %p592 = pneg %p225
        $region102: #{forward.1} parent=71 // pred_check_branch
          %594 = sbr.rel (%p592) target = $region104
        $region103: #{forward.1} parent=71 // pred_region
          %595 = dma.done [#allocation16], 4096
        $region104: #{forward.1} parent=71 // pred_fallthru
          _
        // Predicated region
        $region105: #{forward.1} parent=71 // pred_check
          %p596 = pneg %p246
        $region106: #{forward.1} parent=71 // pred_check_branch
          %598 = sbr.rel (%p596) target = $region108
        $region107: #{forward.1} parent=71 // pred_region
          %599 = dma.done [#allocation16], 64
        $region108: #{forward.1} parent=71 // pred_fallthru
          _
        // Predicated region
        $region109: #{forward.1} parent=71 // pred_check
          %p600 = pneg %p267
        $region110: #{forward.1} parent=71 // pred_check_branch
          %602 = sbr.rel (%p600) target = $region112
        $region111: #{forward.1} parent=71 // pred_region
          %603 = dma.done [#allocation19], 8192
        $region112: #{forward.1} parent=71 // pred_fallthru
          _
        // Predicated region
        $region113: #{forward.1} parent=71 // pred_check
          %p604 = pneg %p288
        $region114: #{forward.1} parent=71 // pred_check_branch
          %606 = sbr.rel (%p604) target = $region116
        $region115: #{forward.1} parent=71 // pred_region
          %607 = dma.done [#allocation19], 32
        $region116: #{forward.1} parent=71 // pred_fallthru
          _
        // Predicated region
        $region117: #{forward.1} parent=71 // pred_check
          %p608 = pneg %p309
        $region118: #{forward.1} parent=71 // pred_check_branch
          %610 = sbr.rel (%p608) target = $region120
        $region119: #{forward.1} parent=71 // pred_region
          %611 = dma.done [#allocation22], 2048
        $region120: #{forward.1} parent=71 // pred_fallthru
          _
        // Predicated region
        $region121: #{forward.1} parent=71 // pred_check
          %p612 = pneg %p330
        $region122: #{forward.1} parent=71 // pred_check_branch
          %614 = sbr.rel (%p612) target = $region124
        $region123: #{forward.1} parent=71 // pred_region
          %615 = dma.done [#allocation22], 16
        $region124: #{forward.1} parent=71 // pred_fallthru
          _
        %s616 = sand.u32 %s60, 1
        %s617 = scalar_lea.sflag [#allocation4], %s616
        %s618 = sand.u32 %s60, 1
        %s619 = smul.addr %s618, 64
        %s620 = scalar_lea.vmem [#allocation3], %s619
        %p621 = pneg %p73
        %p622 = pneg %p70
        %p623 = pneg %p94
        %p624 = pneg %p91
        %p625 = pneg %p115
        %p626 = pneg %p112
        %p627 = pneg %p136
        %p628 = pneg %p133
        %p629 = pneg %p157
        %p630 = pneg %p154
        %s631 = sand.u32 %s38, 1
        %s632 = scalar_lea.sflag [#allocation13], %s631
        %s633 = sand.u32 %s170, 1
        %s634 = scalar_lea.vmem [#allocation12], %s633
        %p635 = pneg %p183
        %p636 = pneg %p180
        %p637 = pneg %p204
        %p638 = pneg %p201
        %p639 = pneg %p225
        %p640 = pneg %p222
        %p641 = pneg %p246
        %p642 = pneg %p243
        %p643 = pneg %p267
        %p644 = pneg %p264
        %p645 = pneg %p288
        %p646 = pneg %p285
        %p647 = pneg %p309
        %p648 = pneg %p306
        %p649 = pneg %p330
        %p650 = pneg %p327
        %p651 = pneg %p356
        %p652 = pneg %p353
        %s653 = sand.u32 %s343, 1
        %s654 = scalar_lea.sflag [#allocation5], %s653
        %s655 = sand.u32 %s343, 1
        %s656 = scalar_lea.vmem [#allocation24], %s655
        %s657 = smul.u32 16, %s43
        %p660 = scmp.eq.s32.totalorder %s43, 0
        // Predicated region
        $region125: #{forward.1} parent=71 // pred_check
          %p661 = pneg %p660
        $region126: #{forward.1} parent=71 // pred_check_branch
          %663 = sbr.rel (%p661) target = $region128
        $region127: #{forward.1} parent=71 // pred_region
          %664 = vst [vmem:[#allocation2] sm:$0xff] 0.0
          %v665 = vlaneseq
          %vm666 = vcmp.ge.s32.totalorder %v665, 0
          %vm667 = vcmp.lt.s32.totalorder %v665, 256
          %vm668 = vmand %vm666, %vm667
          %669 = vst.msk [vmem:[#allocation2 + $0x8] sm:$0x3] %vm668, 0.0
        $region128: #{forward.1} parent=71 // pred_fallthru
          _
        %v670 = vld [vmem:[%s559] sm:$0xf]
        %v671 = vld [vmem:[%s559 + $0x4] sm:$0xf]
        %v672 = vld [vmem:[%s559 + $0x8] sm:$0xf]
        %v673 = vld [vmem:[%s559 + $0xc] sm:$0xf]
        %v674 = vld [vmem:[%s559 + $0x10] sm:$0xf]
        %v675 = vld [vmem:[%s559 + $0x14] sm:$0xf]
        %v676 = vld [vmem:[%s559 + $0x18] sm:$0xf]
        %v677 = vld [vmem:[%s559 + $0x1c] sm:$0xf]
        %v678 = vld [vmem:[%s559 + $0x20] sm:$0xf]
        %v679 = vld [vmem:[%s559 + $0x24] sm:$0xf]
        %v680 = vld [vmem:[%s559 + $0x28] sm:$0xf]
        %v681 = vld [vmem:[%s559 + $0x2c] sm:$0xf]
        %v682 = vld [vmem:[%s559 + $0x30] sm:$0xf]
        %v683 = vld [vmem:[%s559 + $0x34] sm:$0xf]
        %v684 = vld [vmem:[%s559 + $0x38] sm:$0xf]
        %v685 = vld [vmem:[%s559 + $0x3c] sm:$0xf]
        %v686 = vld [vmem:[#allocation6] sm:$0xf]
        %v687 = vld [vmem:[#allocation6 + $0x4] sm:$0xf]
        %v688 = vld [vmem:[#allocation6 + $0x8] sm:$0xf]
        %v689 = vld [vmem:[#allocation6 + $0xc] sm:$0x3]
        %v690 = vld [vmem:[#allocation8] sm:$0x1]
        %v692 = vlaneseq
        %v693 = vshrl.u32 %v692, 7
        %v694 = vsub.s32 0, %v693
        %v695 = vrot.slane %v690, %v694
        %v713 = vunpack.c.l.b16 %v670
        %v714 = vunpack.c.l.b16 %v671
        %v715 = vunpack.c.l.b16 %v672
        %v716 = vunpack.c.l.b16 %v673
        %v717 = vunpack.c.l.b16 %v674
        %v718 = vunpack.c.l.b16 %v675
        %v719 = vunpack.c.l.b16 %v676
        %v720 = vunpack.c.l.b16 %v677
        %v721 = vunpack.c.l.b16 %v678
        %v722 = vunpack.c.l.b16 %v679
        %v723 = vunpack.c.l.b16 %v680
        %v724 = vunpack.c.l.b16 %v681
        %v725 = vunpack.c.l.b16 %v682
        %v726 = vunpack.c.l.b16 %v683
        %v727 = vunpack.c.l.b16 %v684
        %v728 = vunpack.c.l.b16 %v685
        %v729 = vpack.c.b16 %v714, %v713
        %v730 = vpack.c.b16 %v716, %v715
        %v731 = vpack.c.b16 %v718, %v717
        %v732 = vpack.c.b16 %v720, %v719
        %v733 = vpack.c.b16 %v722, %v721
        %v734 = vpack.c.b16 %v724, %v723
        %v735 = vpack.c.b16 %v726, %v725
        %v736 = vpack.c.b16 %v728, %v727
        %v741 = vunpack.c.l.b16 %v686
        %v742 = vunpack.c.l.b16 %v687
        %v743 = vunpack.c.l.b16 %v688
        %v744 = vunpack.c.l.b16 %v689
        %v745 = vpack.c.b16 %v742, %v741
        %v746 = vpack.c.b16 %v744, %v743
        %vm748 = vcmask 220160
        %v750 = vsel %vm748, %v729, 0
        %v753 = vsel %vm748, %v730, 0
        %v756 = vsel %vm748, %v731, 0
        %v759 = vsel %vm748, %v732, 0
        %v762 = vsel %vm748, %v733, 0
        %v765 = vsel %vm748, %v734, 0
        %v768 = vsel %vm748, %v735, 0
        %v771 = vsel %vm748, %v736, 0
        %vm773 = vcmask 1044480
        %vm774 = vcmask 1045504
        %v775 = vsel %vm773, 4294967295, 65535
        %v776 = vsel %vm774, %v775, 0
        %v778 = vand.u32 %v746, %v776
        %780 = vmatprep.subr.bf16.mxu0 0
        %781 = vmatpush1.bf16.msra.mxu0 %v745
        %782 = vmatprep.subr.bf16.mxu0 0
        %783 = vmatpush1.bf16.msra.mxu0 %v778
        %784 = vmatprep.subr.bf16.mxu0 0
        %785 = vmatpush1.bf16.msra.mxu0 0
        %786 = vmatprep.subr.bf16.mxu0 0
        %787 = vmatpush1.bf16.msra.mxu0 0
        %788 = vmatprep.subr.bf16.mxu0 0
        %789 = vmatpush1.bf16.msra.mxu0 0
        %790 = vmatprep.subr.bf16.mxu0 0
        %791 = vmatpush1.bf16.msra.mxu0 0
        %792 = vmatprep.subr.bf16.mxu0 0
        %793 = vmatpush1.bf16.msra.mxu0 0
        %794 = vmatprep.subr.bf16.mxu0 0
        %795 = vmatpush1.bf16.msra.mxu0 0
        %796 = vmatprep.subr.bf16.mxu0 0
        %797 = vmatpush1.bf16.msra.mxu0 0
        %798 = vmatprep.subr.bf16.mxu0 0
        %799 = vmatpush1.bf16.msra.mxu0 0
        %800 = vmatprep.subr.bf16.mxu0 0
        %801 = vmatpush1.bf16.msra.mxu0 0
        %802 = vmatprep.subr.bf16.mxu0 0
        %803 = vmatpush1.bf16.msra.mxu0 0
        %804 = vmatprep.subr.bf16.mxu0 0
        %805 = vmatpush1.bf16.msra.mxu0 0
        %806 = vmatprep.subr.bf16.mxu0 0
        %807 = vmatpush1.bf16.msra.mxu0 0
        %808 = vmatprep.subr.bf16.mxu0 0
        %809 = vmatpush1.bf16.msra.mxu0 0
        %810 = vmatprep.subr.bf16.mxu0 0
        %811 = vmatpush1.bf16.msra.mxu0 0
        %812 = vmatprep.mubr.bf16.mxu0 0
        %813 = vmatmul.mubr.bf16.gmra.mrb[0].mxu0 %v750
        %v814 = vpop.f32.mrb[0].mxu0
        %v815 = vadd.f32 %v695, %v814
        %v816 = vpop.f32.mrb[0].mxu0
        %v817 = vpop.f32.mrb[0].mxu0
        %v818 = vadd.f32 %v695, %v817
        %v819 = vpop.f32.mrb[0].mxu0
        %820 = vmatprep.mubr.bf16.mxu0 0
        %821 = vmatmul.mubr.bf16.gmra.mrb[0].mxu0 %v753
        %v822 = vpop.f32.mrb[0].mxu0
        %v823 = vadd.f32 %v695, %v822
        %v824 = vpop.f32.mrb[0].mxu0
        %v825 = vpop.f32.mrb[0].mxu0
        %v826 = vadd.f32 %v695, %v825
        %v827 = vpop.f32.mrb[0].mxu0
        %828 = vmatprep.mubr.bf16.mxu0 0
        %829 = vmatmul.mubr.bf16.gmra.mrb[0].mxu0 %v756
        %v830 = vpop.f32.mrb[0].mxu0
        %v831 = vadd.f32 %v695, %v830
        %v832 = vpop.f32.mrb[0].mxu0
        %v833 = vpop.f32.mrb[0].mxu0
        %v834 = vadd.f32 %v695, %v833
        %v835 = vpop.f32.mrb[0].mxu0
        %836 = vmatprep.mubr.bf16.mxu0 0
        %837 = vmatmul.mubr.bf16.gmra.mrb[0].mxu0 %v759
        %v838 = vpop.f32.mrb[0].mxu0
        %v839 = vadd.f32 %v695, %v838
        %v840 = vpop.f32.mrb[0].mxu0
        %v841 = vpop.f32.mrb[0].mxu0
        %v842 = vadd.f32 %v695, %v841
        %v843 = vpop.f32.mrb[0].mxu0
        %844 = vmatprep.mubr.bf16.mxu0 0
        %845 = vmatmul.mubr.bf16.gmra.mrb[0].mxu0 %v762
        %v846 = vpop.f32.mrb[0].mxu0
        %v847 = vadd.f32 %v695, %v846
        %v848 = vpop.f32.mrb[0].mxu0
        %v849 = vpop.f32.mrb[0].mxu0
        %v850 = vadd.f32 %v695, %v849
        %v851 = vpop.f32.mrb[0].mxu0
        %852 = vmatprep.mubr.bf16.mxu0 0
        %853 = vmatmul.mubr.bf16.gmra.mrb[0].mxu0 %v765
        %v854 = vpop.f32.mrb[0].mxu0
        %v855 = vadd.f32 %v695, %v854
        %v856 = vpop.f32.mrb[0].mxu0
        %v857 = vpop.f32.mrb[0].mxu0
        %v858 = vadd.f32 %v695, %v857
        %v859 = vpop.f32.mrb[0].mxu0
        %860 = vmatprep.mubr.bf16.mxu0 0
        %861 = vmatmul.mubr.bf16.gmra.mrb[0].mxu0 %v768
        %v862 = vpop.f32.mrb[0].mxu0
        %v863 = vadd.f32 %v695, %v862
        %v864 = vpop.f32.mrb[0].mxu0
        %v865 = vpop.f32.mrb[0].mxu0
        %v866 = vadd.f32 %v695, %v865
        %v867 = vpop.f32.mrb[0].mxu0
        %868 = vmatprep.mubr.bf16.mxu0 0
        %869 = vmatmul.mubr.bf16.gmra.mrb[0].mxu0 %v771
        %v870 = vpop.f32.mrb[0].mxu0
        %v871 = vadd.f32 %v695, %v870
        %v872 = vpop.f32.mrb[0].mxu0
        %v873 = vpop.f32.mrb[0].mxu0
        %v874 = vadd.f32 %v695, %v873
        %v875 = vpop.f32.mrb[0].mxu0
        %876 = vdwg.mxu0
        %v877 = vxor.u32 %v815, 2147483648
        %v878 = vxor.u32 %v818, 2147483648
        %v879 = vxor.u32 %v823, 2147483648
        %v880 = vxor.u32 %v826, 2147483648
        %v881 = vxor.u32 %v831, 2147483648
        %v882 = vxor.u32 %v834, 2147483648
        %v883 = vxor.u32 %v839, 2147483648
        %v884 = vxor.u32 %v842, 2147483648
        %v885 = vxor.u32 %v847, 2147483648
        %v886 = vxor.u32 %v850, 2147483648
        %v887 = vxor.u32 %v855, 2147483648
        %v888 = vxor.u32 %v858, 2147483648
        %v889 = vxor.u32 %v863, 2147483648
        %v890 = vxor.u32 %v866, 2147483648
        %v891 = vxor.u32 %v871, 2147483648
        %v892 = vxor.u32 %v874, 2147483648
        %v893 = vmul.f32 %v877, 1.442695
        %v894 = vpow.pop %v893
        %v895 = vmul.f32 %v878, 1.442695
        %v896 = vpow.pop %v895
        %v897 = vmul.f32 %v879, 1.442695
        %v898 = vpow.pop %v897
        %v899 = vmul.f32 %v880, 1.442695
        %v900 = vpow.pop %v899
        %v901 = vmul.f32 %v881, 1.442695
        %v902 = vpow.pop %v901
        %v903 = vmul.f32 %v882, 1.442695
        %v904 = vpow.pop %v903
        %v905 = vmul.f32 %v883, 1.442695
        %v906 = vpow.pop %v905
        %v907 = vmul.f32 %v884, 1.442695
        %v908 = vpow.pop %v907
        %v909 = vmul.f32 %v885, 1.442695
        %v910 = vpow.pop %v909
        %v911 = vmul.f32 %v886, 1.442695
        %v912 = vpow.pop %v911
        %v913 = vmul.f32 %v887, 1.442695
        %v914 = vpow.pop %v913
        %v915 = vmul.f32 %v888, 1.442695
        %v916 = vpow.pop %v915
        %v917 = vmul.f32 %v889, 1.442695
        %v918 = vpow.pop %v917
        %v919 = vmul.f32 %v890, 1.442695
        %v920 = vpow.pop %v919
        %v921 = vmul.f32 %v891, 1.442695
        %v922 = vpow.pop %v921
        %v923 = vmul.f32 %v892, 1.442695
        %v924 = vpow.pop %v923
        %v925 = vadd.f32 %v894, 1.0
        %v926 = vadd.f32 %v896, 1.0
        %v927 = vadd.f32 %v898, 1.0
        %v928 = vadd.f32 %v900, 1.0
        %v929 = vadd.f32 %v902, 1.0
        %v930 = vadd.f32 %v904, 1.0
        %v931 = vadd.f32 %v906, 1.0
        %v932 = vadd.f32 %v908, 1.0
        %v933 = vadd.f32 %v910, 1.0
        %v934 = vadd.f32 %v912, 1.0
        %v935 = vadd.f32 %v914, 1.0
        %v936 = vadd.f32 %v916, 1.0
        %v937 = vadd.f32 %v918, 1.0
        %v938 = vadd.f32 %v920, 1.0
        %v939 = vadd.f32 %v922, 1.0
        %v940 = vadd.f32 %v924, 1.0
        %v941 = vrcp.pop %v925
        %v942 = vmul.f32 1.0, %v941
        %v943 = vrcp.pop %v926
        %v944 = vmul.f32 1.0, %v943
        %v945 = vrcp.pop %v927
        %v946 = vmul.f32 1.0, %v945
        %v947 = vrcp.pop %v928
        %v948 = vmul.f32 1.0, %v947
        %v949 = vrcp.pop %v929
        %v950 = vmul.f32 1.0, %v949
        %v951 = vrcp.pop %v930
        %v952 = vmul.f32 1.0, %v951
        %v953 = vrcp.pop %v931
        %v954 = vmul.f32 1.0, %v953
        %v955 = vrcp.pop %v932
        %v956 = vmul.f32 1.0, %v955
        %v957 = vrcp.pop %v933
        %v958 = vmul.f32 1.0, %v957
        %v959 = vrcp.pop %v934
        %v960 = vmul.f32 1.0, %v959
        %v961 = vrcp.pop %v935
        %v962 = vmul.f32 1.0, %v961
        %v963 = vrcp.pop %v936
        %v964 = vmul.f32 1.0, %v963
        %v965 = vrcp.pop %v937
        %v966 = vmul.f32 1.0, %v965
        %v967 = vrcp.pop %v938
        %v968 = vmul.f32 1.0, %v967
        %v969 = vrcp.pop %v939
        %v970 = vmul.f32 1.0, %v969
        %v971 = vrcp.pop %v940
        %v972 = vmul.f32 1.0, %v971
        %v973 = vmul.f32 %v815, %v942
        %v974 = vmul.f32 %v818, %v944
        %v975 = vmul.f32 %v823, %v946
        %v976 = vmul.f32 %v826, %v948
        %v977 = vmul.f32 %v831, %v950
        %v978 = vmul.f32 %v834, %v952
        %v979 = vmul.f32 %v839, %v954
        %v980 = vmul.f32 %v842, %v956
        %v981 = vmul.f32 %v847, %v958
        %v982 = vmul.f32 %v850, %v960
        %v983 = vmul.f32 %v855, %v962
        %v984 = vmul.f32 %v858, %v964
        %v985 = vmul.f32 %v863, %v966
        %v986 = vmul.f32 %v866, %v968
        %v987 = vmul.f32 %v871, %v970
        %v988 = vmul.f32 %v874, %v972
        %v989 = vpack.c.bf16 %v974, %v973
        %v990 = vpack.c.bf16 %v976, %v975
        %v991 = vpack.c.bf16 %v978, %v977
        %v992 = vpack.c.bf16 %v980, %v979
        %v993 = vpack.c.bf16 %v982, %v981
        %v994 = vpack.c.bf16 %v984, %v983
        %v995 = vpack.c.bf16 %v986, %v985
        %v996 = vpack.c.bf16 %v988, %v987
        %v997 = vld [vmem:[#allocation9] sm:$0xff]
        %v998 = vld [vmem:[#allocation9 + $0x8] sm:$0xff]
        %v999 = vld [vmem:[#allocation9 + $0x10] sm:$0xff]
        %v1000 = vld [vmem:[#allocation9 + $0x18] sm:$0xff]
        %v1001 = vld [vmem:[#allocation9 + $0x20] sm:$0xff]
        %v1002 = vld [vmem:[#allocation9 + $0x28] sm:$0xff]
        %v1003 = vld [vmem:[#allocation9 + $0x30] sm:$0xff]
        %v1004 = vld [vmem:[#allocation9 + $0x38] sm:$0xff]
        %v1005 = vld [vmem:[#allocation9 + $0x40] sm:$0xff]
        %v1006 = vld [vmem:[#allocation9 + $0x48] sm:$0xff]
        %v1007 = vld [vmem:[#allocation9 + $0x50] sm:$0xff]
        %v1008 = vld [vmem:[#allocation9 + $0x58] sm:$0xff]
        %v1009 = vld [vmem:[#allocation9 + $0x60] sm:$0xff]
        %v1010 = vld [vmem:[#allocation9 + $0x68] sm:$0xff]
        %v1011 = vld [vmem:[#allocation9 + $0x70] sm:$0xff]
        %v1012 = vld [vmem:[#allocation9 + $0x78] sm:$0xff]
        %v1013 = vld [vmem:[#allocation9 + $0x80] sm:$0xff]
        %v1014 = vld [vmem:[#allocation9 + $0x88] sm:$0xff]
        %v1015 = vld [vmem:[#allocation9 + $0x90] sm:$0xff]
        %v1016 = vld [vmem:[#allocation9 + $0x98] sm:$0xff]
        %v1037 = vunpack.c.l.b16 %v997
        %v1038 = vunpack.c.h.b16 %v997
        %v1039 = vunpack.c.l.b16 %v998
        %v1040 = vunpack.c.h.b16 %v998
        %v1041 = vunpack.c.l.b16 %v999
        %v1042 = vunpack.c.h.b16 %v999
        %v1043 = vunpack.c.l.b16 %v1000
        %v1044 = vunpack.c.h.b16 %v1000
        %v1045 = vunpack.c.l.b16 %v1001
        %v1046 = vunpack.c.h.b16 %v1001
        %v1047 = vunpack.c.l.b16 %v1002
        %v1048 = vunpack.c.h.b16 %v1002
        %v1049 = vunpack.c.l.b16 %v1003
        %v1050 = vunpack.c.h.b16 %v1003
        %v1051 = vunpack.c.l.b16 %v1004
        %v1052 = vunpack.c.h.b16 %v1004
        %v1053 = vunpack.c.l.b16 %v1005
        %v1054 = vunpack.c.h.b16 %v1005
        %v1055 = vunpack.c.l.b16 %v1006
        %v1056 = vunpack.c.h.b16 %v1006
        %v1057 = vunpack.c.l.b16 %v1007
        %v1058 = vunpack.c.h.b16 %v1007
        %v1059 = vunpack.c.l.b16 %v1008
        %v1060 = vunpack.c.h.b16 %v1008
        %v1061 = vunpack.c.l.b16 %v1009
        %v1062 = vunpack.c.h.b16 %v1009
        %v1063 = vunpack.c.l.b16 %v1010
        %v1064 = vunpack.c.h.b16 %v1010
        %v1065 = vunpack.c.l.b16 %v1011
        %v1066 = vunpack.c.h.b16 %v1011
        %v1067 = vunpack.c.l.b16 %v1012
        %v1068 = vunpack.c.h.b16 %v1012
        %v1069 = vunpack.c.l.b16 %v1013
        %v1070 = vunpack.c.h.b16 %v1013
        %v1071 = vunpack.c.l.b16 %v1014
        %v1072 = vunpack.c.h.b16 %v1014
        %v1073 = vunpack.c.l.b16 %v1015
        %v1074 = vunpack.c.h.b16 %v1015
        %v1075 = vunpack.c.l.b16 %v1016
        %v1076 = vunpack.c.h.b16 %v1016
        %v1077 = vpack.c.b16 %v1047, %v1037
        %v1078 = vpack.c.b16 %v1048, %v1038
        %v1079 = vpack.c.b16 %v1049, %v1039
        %v1080 = vpack.c.b16 %v1050, %v1040
        %v1081 = vpack.c.b16 %v1051, %v1041
        %v1082 = vpack.c.b16 %v1052, %v1042
        %v1083 = vpack.c.b16 %v1053, %v1043
        %v1084 = vpack.c.b16 %v1054, %v1044
        %v1085 = vpack.c.b16 %v1055, %v1045
        %v1086 = vpack.c.b16 %v1056, %v1046
        %v1087 = vpack.c.b16 %v1067, %v1057
        %v1088 = vpack.c.b16 %v1068, %v1058
        %v1089 = vpack.c.b16 %v1069, %v1059
        %v1090 = vpack.c.b16 %v1070, %v1060
        %v1091 = vpack.c.b16 %v1071, %v1061
        %v1092 = vpack.c.b16 %v1072, %v1062
        %v1093 = vpack.c.b16 %v1073, %v1063
        %v1094 = vpack.c.b16 %v1074, %v1064
        %v1095 = vpack.c.b16 %v1075, %v1065
        %v1096 = vpack.c.b16 %v1076, %v1066
        %vm1117 = vcmask 261120
        %v1119 = vsel %vm1117, %v989, 0
        %v1122 = vsel %vm1117, %v990, 0
        %v1125 = vsel %vm1117, %v991, 0
        %v1128 = vsel %vm1117, %v992, 0
        %v1131 = vsel %vm1117, %v993, 0
        %v1134 = vsel %vm1117, %v994, 0
        %v1137 = vsel %vm1117, %v995, 0
        %v1140 = vsel %vm1117, %v996, 0
        %1142 = vmatprep.subr.bf16.mxu0 %v1078
        %1143 = vmatpush1.bf16.msra.mxu0 %v1077
        %1144 = vmatprep.subr.bf16.mxu0 %v1088
        %1145 = vmatpush1.bf16.msra.mxu0 %v1087
        %1146 = vmatprep.subr.bf16.mxu0 0
        %1147 = vmatpush1.bf16.msra.mxu0 0
        %1148 = vmatprep.subr.bf16.mxu0 0
        %1149 = vmatpush1.bf16.msra.mxu0 0
        %1150 = vmatprep.subr.bf16.mxu0 0
        %1151 = vmatpush1.bf16.msra.mxu0 0
        %1152 = vmatprep.subr.bf16.mxu0 0
        %1153 = vmatpush1.bf16.msra.mxu0 0
        %1154 = vmatprep.subr.bf16.mxu0 0
        %1155 = vmatpush1.bf16.msra.mxu0 0
        %1156 = vmatprep.subr.bf16.mxu0 0
        %1157 = vmatpush1.bf16.msra.mxu0 0
        %1158 = vmatprep.subr.bf16.mxu0 0
        %1159 = vmatpush1.bf16.msra.mxu0 0
        %1160 = vmatprep.subr.bf16.mxu0 0
        %1161 = vmatpush1.bf16.msra.mxu0 0
        %1162 = vmatprep.subr.bf16.mxu0 0
        %1163 = vmatpush1.bf16.msra.mxu0 0
        %1164 = vmatprep.subr.bf16.mxu0 0
        %1165 = vmatpush1.bf16.msra.mxu0 0
        %1166 = vmatprep.subr.bf16.mxu0 0
        %1167 = vmatpush1.bf16.msra.mxu0 0
        %1168 = vmatprep.subr.bf16.mxu0 0
        %1169 = vmatpush1.bf16.msra.mxu0 0
        %1170 = vmatprep.subr.bf16.mxu0 0
        %1171 = vmatpush1.bf16.msra.mxu0 0
        %1172 = vmatprep.subr.bf16.mxu0 0
        %1173 = vmatpush1.bf16.msra.mxu0 0
        %1174 = vmatprep.mubr.bf16.mxu0 0
        %1175 = vmatmul.mubr.bf16.gmra.mrb[0].mxu0 %v1119
        %v1176 = vpop.f32.mrb[0].mxu0
        %v1177 = vadd.f32 0.0, %v1176
        %v1178 = vpop.f32.mrb[0].mxu0
        %v1179 = vadd.f32 0.0, %v1178
        %v1180 = vpop.f32.mrb[0].mxu0
        %v1181 = vadd.f32 0.0, %v1180
        %v1182 = vpop.f32.mrb[0].mxu0
        %v1183 = vadd.f32 0.0, %v1182
        %1184 = vmatprep.mubr.bf16.mxu0 0
        %1185 = vmatmul.mubr.bf16.gmra.mrb[0].mxu0 %v1122
        %v1186 = vpop.f32.mrb[0].mxu0
        %v1187 = vadd.f32 0.0, %v1186
        %v1188 = vpop.f32.mrb[0].mxu0
        %v1189 = vadd.f32 0.0, %v1188
        %v1190 = vpop.f32.mrb[0].mxu0
        %v1191 = vadd.f32 0.0, %v1190
        %v1192 = vpop.f32.mrb[0].mxu0
        %v1193 = vadd.f32 0.0, %v1192
        %1194 = vmatprep.mubr.bf16.mxu0 0
        %1195 = vmatmul.mubr.bf16.gmra.mrb[0].mxu0 %v1125
        %v1196 = vpop.f32.mrb[0].mxu0
        %v1197 = vadd.f32 0.0, %v1196
        %v1198 = vpop.f32.mrb[0].mxu0
        %v1199 = vadd.f32 0.0, %v1198
        %v1200 = vpop.f32.mrb[0].mxu0
        %v1201 = vadd.f32 0.0, %v1200
        %v1202 = vpop.f32.mrb[0].mxu0
        %v1203 = vadd.f32 0.0, %v1202
        %1204 = vmatprep.mubr.bf16.mxu0 0
        %1205 = vmatmul.mubr.bf16.gmra.mrb[0].mxu0 %v1128
        %v1206 = vpop.f32.mrb[0].mxu0
        %v1207 = vadd.f32 0.0, %v1206
        %v1208 = vpop.f32.mrb[0].mxu0
        %v1209 = vadd.f32 0.0, %v1208
        %v1210 = vpop.f32.mrb[0].mxu0
        %v1211 = vadd.f32 0.0, %v1210
        %v1212 = vpop.f32.mrb[0].mxu0
        %v1213 = vadd.f32 0.0, %v1212
        %1214 = vmatprep.mubr.bf16.mxu0 0
        %1215 = vmatmul.mubr.bf16.gmra.mrb[0].mxu0 %v1131
        %v1216 = vpop.f32.mrb[0].mxu0
        %v1217 = vadd.f32 0.0, %v1216
        %v1218 = vpop.f32.mrb[0].mxu0
        %v1219 = vadd.f32 0.0, %v1218
        %v1220 = vpop.f32.mrb[0].mxu0
        %v1221 = vadd.f32 0.0, %v1220
        %v1222 = vpop.f32.mrb[0].mxu0
        %v1223 = vadd.f32 0.0, %v1222
        %1224 = vmatprep.mubr.bf16.mxu0 0
        %1225 = vmatmul.mubr.bf16.gmra.mrb[0].mxu0 %v1134
        %v1226 = vpop.f32.mrb[0].mxu0
        %v1227 = vadd.f32 0.0, %v1226
        %v1228 = vpop.f32.mrb[0].mxu0
        %v1229 = vadd.f32 0.0, %v1228
        %v1230 = vpop.f32.mrb[0].mxu0
        %v1231 = vadd.f32 0.0, %v1230
        %v1232 = vpop.f32.mrb[0].mxu0
        %v1233 = vadd.f32 0.0, %v1232
        %1234 = vmatprep.mubr.bf16.mxu0 0
        %1235 = vmatmul.mubr.bf16.gmra.mrb[0].mxu0 %v1137
        %v1236 = vpop.f32.mrb[0].mxu0
        %v1237 = vadd.f32 0.0, %v1236
        %v1238 = vpop.f32.mrb[0].mxu0
        %v1239 = vadd.f32 0.0, %v1238
        %v1240 = vpop.f32.mrb[0].mxu0
        %v1241 = vadd.f32 0.0, %v1240
        %v1242 = vpop.f32.mrb[0].mxu0
        %v1243 = vadd.f32 0.0, %v1242
        %1244 = vmatprep.mubr.bf16.mxu0 0
        %1245 = vmatmul.mubr.bf16.gmra.mrb[0].mxu0 %v1140
        %v1246 = vpop.f32.mrb[0].mxu0
        %v1247 = vadd.f32 0.0, %v1246
        %v1248 = vpop.f32.mrb[0].mxu0
        %v1249 = vadd.f32 0.0, %v1248
        %v1250 = vpop.f32.mrb[0].mxu0
        %v1251 = vadd.f32 0.0, %v1250
        %v1252 = vpop.f32.mrb[0].mxu0
        %v1253 = vadd.f32 0.0, %v1252
        %1254 = vdwg.mxu0
        %1255 = vmatprep.subr.bf16.mxu0 %v1080
        %1256 = vmatpush1.bf16.msra.mxu0 %v1079
        %1257 = vmatprep.subr.bf16.mxu0 %v1090
        %1258 = vmatpush1.bf16.msra.mxu0 %v1089
        %1259 = vmatprep.subr.bf16.mxu0 0
        %1260 = vmatpush1.bf16.msra.mxu0 0
        %1261 = vmatprep.subr.bf16.mxu0 0
        %1262 = vmatpush1.bf16.msra.mxu0 0
        %1263 = vmatprep.subr.bf16.mxu0 0
        %1264 = vmatpush1.bf16.msra.mxu0 0
        %1265 = vmatprep.subr.bf16.mxu0 0
        %1266 = vmatpush1.bf16.msra.mxu0 0
        %1267 = vmatprep.subr.bf16.mxu0 0
        %1268 = vmatpush1.bf16.msra.mxu0 0
        %1269 = vmatprep.subr.bf16.mxu0 0
        %1270 = vmatpush1.bf16.msra.mxu0 0
        %1271 = vmatprep.subr.bf16.mxu0 0
        %1272 = vmatpush1.bf16.msra.mxu0 0
        %1273 = vmatprep.subr.bf16.mxu0 0
        %1274 = vmatpush1.bf16.msra.mxu0 0
        %1275 = vmatprep.subr.bf16.mxu0 0
        %1276 = vmatpush1.bf16.msra.mxu0 0
        %1277 = vmatprep.subr.bf16.mxu0 0
        %1278 = vmatpush1.bf16.msra.mxu0 0
        %1279 = vmatprep.subr.bf16.mxu0 0
        %1280 = vmatpush1.bf16.msra.mxu0 0
        %1281 = vmatprep.subr.bf16.mxu0 0
        %1282 = vmatpush1.bf16.msra.mxu0 0
        %1283 = vmatprep.subr.bf16.mxu0 0
        %1284 = vmatpush1.bf16.msra.mxu0 0
        %1285 = vmatprep.subr.bf16.mxu0 0
        %1286 = vmatpush1.bf16.msra.mxu0 0
        %1287 = vmatprep.mubr.bf16.mxu0 0
        %1288 = vmatmul.mubr.bf16.gmra.mrb[0].mxu0 %v1119
        %v1289 = vpop.f32.mrb[0].mxu0
        %v1290 = vadd.f32 0.0, %v1289
        %v1291 = vpop.f32.mrb[0].mxu0
        %v1292 = vadd.f32 0.0, %v1291
        %v1293 = vpop.f32.mrb[0].mxu0
        %v1294 = vadd.f32 0.0, %v1293
        %v1295 = vpop.f32.mrb[0].mxu0
        %v1296 = vadd.f32 0.0, %v1295
        %1297 = vmatprep.mubr.bf16.mxu0 0
        %1298 = vmatmul.mubr.bf16.gmra.mrb[0].mxu0 %v1122
        %v1299 = vpop.f32.mrb[0].mxu0
        %v1300 = vadd.f32 0.0, %v1299
        %v1301 = vpop.f32.mrb[0].mxu0
        %v1302 = vadd.f32 0.0, %v1301
        %v1303 = vpop.f32.mrb[0].mxu0
        %v1304 = vadd.f32 0.0, %v1303
        %v1305 = vpop.f32.mrb[0].mxu0
        %v1306 = vadd.f32 0.0, %v1305
        %1307 = vmatprep.mubr.bf16.mxu0 0
        %1308 = vmatmul.mubr.bf16.gmra.mrb[0].mxu0 %v1125
        %v1309 = vpop.f32.mrb[0].mxu0
        %v1310 = vadd.f32 0.0, %v1309
        %v1311 = vpop.f32.mrb[0].mxu0
        %v1312 = vadd.f32 0.0, %v1311
        %v1313 = vpop.f32.mrb[0].mxu0
        %v1314 = vadd.f32 0.0, %v1313
        %v1315 = vpop.f32.mrb[0].mxu0
        %v1316 = vadd.f32 0.0, %v1315
        %1317 = vmatprep.mubr.bf16.mxu0 0
        %1318 = vmatmul.mubr.bf16.gmra.mrb[0].mxu0 %v1128
        %v1319 = vpop.f32.mrb[0].mxu0
        %v1320 = vadd.f32 0.0, %v1319
        %v1321 = vpop.f32.mrb[0].mxu0
        %v1322 = vadd.f32 0.0, %v1321
        %v1323 = vpop.f32.mrb[0].mxu0
        %v1324 = vadd.f32 0.0, %v1323
        %v1325 = vpop.f32.mrb[0].mxu0
        %v1326 = vadd.f32 0.0, %v1325
        %1327 = vmatprep.mubr.bf16.mxu0 0
        %1328 = vmatmul.mubr.bf16.gmra.mrb[0].mxu0 %v1131
        %v1329 = vpop.f32.mrb[0].mxu0
        %v1330 = vadd.f32 0.0, %v1329
        %v1331 = vpop.f32.mrb[0].mxu0
        %v1332 = vadd.f32 0.0, %v1331
        %v1333 = vpop.f32.mrb[0].mxu0
        %v1334 = vadd.f32 0.0, %v1333
        %v1335 = vpop.f32.mrb[0].mxu0
        %v1336 = vadd.f32 0.0, %v1335
        %1337 = vmatprep.mubr.bf16.mxu0 0
        %1338 = vmatmul.mubr.bf16.gmra.mrb[0].mxu0 %v1134
        %v1339 = vpop.f32.mrb[0].mxu0
        %v1340 = vadd.f32 0.0, %v1339
        %v1341 = vpop.f32.mrb[0].mxu0
        %v1342 = vadd.f32 0.0, %v1341
        %v1343 = vpop.f32.mrb[0].mxu0
        %v1344 = vadd.f32 0.0, %v1343
        %v1345 = vpop.f32.mrb[0].mxu0
        %v1346 = vadd.f32 0.0, %v1345
        %1347 = vmatprep.mubr.bf16.mxu0 0
        %1348 = vmatmul.mubr.bf16.gmra.mrb[0].mxu0 %v1137
        %v1349 = vpop.f32.mrb[0].mxu0
        %v1350 = vadd.f32 0.0, %v1349
        %v1351 = vpop.f32.mrb[0].mxu0
        %v1352 = vadd.f32 0.0, %v1351
        %v1353 = vpop.f32.mrb[0].mxu0
        %v1354 = vadd.f32 0.0, %v1353
        %v1355 = vpop.f32.mrb[0].mxu0
        %v1356 = vadd.f32 0.0, %v1355
        %1357 = vmatprep.mubr.bf16.mxu0 0
        %1358 = vmatmul.mubr.bf16.gmra.mrb[0].mxu0 %v1140
        %v1359 = vpop.f32.mrb[0].mxu0
        %v1360 = vadd.f32 0.0, %v1359
        %v1361 = vpop.f32.mrb[0].mxu0
        %v1362 = vadd.f32 0.0, %v1361
        %v1363 = vpop.f32.mrb[0].mxu0
        %v1364 = vadd.f32 0.0, %v1363
        %v1365 = vpop.f32.mrb[0].mxu0
        %v1366 = vadd.f32 0.0, %v1365
        %1367 = vdwg.mxu0
        %1368 = vmatprep.subr.bf16.mxu0 %v1082
        %1369 = vmatpush1.bf16.msra.mxu0 %v1081
        %1370 = vmatprep.subr.bf16.mxu0 %v1092
        %1371 = vmatpush1.bf16.msra.mxu0 %v1091
        %1372 = vmatprep.subr.bf16.mxu0 0
        %1373 = vmatpush1.bf16.msra.mxu0 0
        %1374 = vmatprep.subr.bf16.mxu0 0
        %1375 = vmatpush1.bf16.msra.mxu0 0
        %1376 = vmatprep.subr.bf16.mxu0 0
        %1377 = vmatpush1.bf16.msra.mxu0 0
        %1378 = vmatprep.subr.bf16.mxu0 0
        %1379 = vmatpush1.bf16.msra.mxu0 0
        %1380 = vmatprep.subr.bf16.mxu0 0
        %1381 = vmatpush1.bf16.msra.mxu0 0
        %1382 = vmatprep.subr.bf16.mxu0 0
        %1383 = vmatpush1.bf16.msra.mxu0 0
        %1384 = vmatprep.subr.bf16.mxu0 0
        %1385 = vmatpush1.bf16.msra.mxu0 0
        %1386 = vmatprep.subr.bf16.mxu0 0
        %1387 = vmatpush1.bf16.msra.mxu0 0
        %1388 = vmatprep.subr.bf16.mxu0 0
        %1389 = vmatpush1.bf16.msra.mxu0 0
        %1390 = vmatprep.subr.bf16.mxu0 0
        %1391 = vmatpush1.bf16.msra.mxu0 0
        %1392 = vmatprep.subr.bf16.mxu0 0
        %1393 = vmatpush1.bf16.msra.mxu0 0
        %1394 = vmatprep.subr.bf16.mxu0 0
        %1395 = vmatpush1.bf16.msra.mxu0 0
        %1396 = vmatprep.subr.bf16.mxu0 0
        %1397 = vmatpush1.bf16.msra.mxu0 0
        %1398 = vmatprep.subr.bf16.mxu0 0
        %1399 = vmatpush1.bf16.msra.mxu0 0
        %1400 = vmatprep.mubr.bf16.mxu0 0
        %1401 = vmatmul.mubr.bf16.gmra.mrb[0].mxu0 %v1119
        %v1402 = vpop.f32.mrb[0].mxu0
        %v1403 = vadd.f32 0.0, %v1402
        %v1404 = vpop.f32.mrb[0].mxu0
        %v1405 = vadd.f32 0.0, %v1404
        %v1406 = vpop.f32.mrb[0].mxu0
        %v1407 = vadd.f32 0.0, %v1406
        %v1408 = vpop.f32.mrb[0].mxu0
        %v1409 = vadd.f32 0.0, %v1408
        %1410 = vmatprep.mubr.bf16.mxu0 0
        %1411 = vmatmul.mubr.bf16.gmra.mrb[0].mxu0 %v1122
        %v1412 = vpop.f32.mrb[0].mxu0
        %v1413 = vadd.f32 0.0, %v1412
        %v1414 = vpop.f32.mrb[0].mxu0
        %v1415 = vadd.f32 0.0, %v1414
        %v1416 = vpop.f32.mrb[0].mxu0
        %v1417 = vadd.f32 0.0, %v1416
        %v1418 = vpop.f32.mrb[0].mxu0
        %v1419 = vadd.f32 0.0, %v1418
        %1420 = vmatprep.mubr.bf16.mxu0 0
        %1421 = vmatmul.mubr.bf16.gmra.mrb[0].mxu0 %v1125
        %v1422 = vpop.f32.mrb[0].mxu0
        %v1423 = vadd.f32 0.0, %v1422
        %v1424 = vpop.f32.mrb[0].mxu0
        %v1425 = vadd.f32 0.0, %v1424
        %v1426 = vpop.f32.mrb[0].mxu0
        %v1427 = vadd.f32 0.0, %v1426
        %v1428 = vpop.f32.mrb[0].mxu0
        %v1429 = vadd.f32 0.0, %v1428
        %1430 = vmatprep.mubr.bf16.mxu0 0
        %1431 = vmatmul.mubr.bf16.gmra.mrb[0].mxu0 %v1128
        %v1432 = vpop.f32.mrb[0].mxu0
        %v1433 = vadd.f32 0.0, %v1432
        %v1434 = vpop.f32.mrb[0].mxu0
        %v1435 = vadd.f32 0.0, %v1434
        %v1436 = vpop.f32.mrb[0].mxu0
        %v1437 = vadd.f32 0.0, %v1436
        %v1438 = vpop.f32.mrb[0].mxu0
        %v1439 = vadd.f32 0.0, %v1438
        %1440 = vmatprep.mubr.bf16.mxu0 0
        %1441 = vmatmul.mubr.bf16.gmra.mrb[0].mxu0 %v1131
        %v1442 = vpop.f32.mrb[0].mxu0
        %v1443 = vadd.f32 0.0, %v1442
        %v1444 = vpop.f32.mrb[0].mxu0
        %v1445 = vadd.f32 0.0, %v1444
        %v1446 = vpop.f32.mrb[0].mxu0
        %v1447 = vadd.f32 0.0, %v1446
        %v1448 = vpop.f32.mrb[0].mxu0
        %v1449 = vadd.f32 0.0, %v1448
        %1450 = vmatprep.mubr.bf16.mxu0 0
        %1451 = vmatmul.mubr.bf16.gmra.mrb[0].mxu0 %v1134
        %v1452 = vpop.f32.mrb[0].mxu0
        %v1453 = vadd.f32 0.0, %v1452
        %v1454 = vpop.f32.mrb[0].mxu0
        %v1455 = vadd.f32 0.0, %v1454
        %v1456 = vpop.f32.mrb[0].mxu0
        %v1457 = vadd.f32 0.0, %v1456
        %v1458 = vpop.f32.mrb[0].mxu0
        %v1459 = vadd.f32 0.0, %v1458
        %1460 = vmatprep.mubr.bf16.mxu0 0
        %1461 = vmatmul.mubr.bf16.gmra.mrb[0].mxu0 %v1137
        %v1462 = vpop.f32.mrb[0].mxu0
        %v1463 = vadd.f32 0.0, %v1462
        %v1464 = vpop.f32.mrb[0].mxu0
        %v1465 = vadd.f32 0.0, %v1464
        %v1466 = vpop.f32.mrb[0].mxu0
        %v1467 = vadd.f32 0.0, %v1466
        %v1468 = vpop.f32.mrb[0].mxu0
        %v1469 = vadd.f32 0.0, %v1468
        %1470 = vmatprep.mubr.bf16.mxu0 0
        %1471 = vmatmul.mubr.bf16.gmra.mrb[0].mxu0 %v1140
        %v1472 = vpop.f32.mrb[0].mxu0
        %v1473 = vadd.f32 0.0, %v1472
        %v1474 = vpop.f32.mrb[0].mxu0
        %v1475 = vadd.f32 0.0, %v1474
        %v1476 = vpop.f32.mrb[0].mxu0
        %v1477 = vadd.f32 0.0, %v1476
        %v1478 = vpop.f32.mrb[0].mxu0
        %v1479 = vadd.f32 0.0, %v1478
        %1480 = vdwg.mxu0
        %1481 = vmatprep.subr.bf16.mxu0 %v1084
        %1482 = vmatpush1.bf16.msra.mxu0 %v1083
        %1483 = vmatprep.subr.bf16.mxu0 %v1094
        %1484 = vmatpush1.bf16.msra.mxu0 %v1093
        %1485 = vmatprep.subr.bf16.mxu0 0
        %1486 = vmatpush1.bf16.msra.mxu0 0
        %1487 = vmatprep.subr.bf16.mxu0 0
        %1488 = vmatpush1.bf16.msra.mxu0 0
        %1489 = vmatprep.subr.bf16.mxu0 0
        %1490 = vmatpush1.bf16.msra.mxu0 0
        %1491 = vmatprep.subr.bf16.mxu0 0
        %1492 = vmatpush1.bf16.msra.mxu0 0
        %1493 = vmatprep.subr.bf16.mxu0 0
        %1494 = vmatpush1.bf16.msra.mxu0 0
        %1495 = vmatprep.subr.bf16.mxu0 0
        %1496 = vmatpush1.bf16.msra.mxu0 0
        %1497 = vmatprep.subr.bf16.mxu0 0
        %1498 = vmatpush1.bf16.msra.mxu0 0
        %1499 = vmatprep.subr.bf16.mxu0 0
        %1500 = vmatpush1.bf16.msra.mxu0 0
        %1501 = vmatprep.subr.bf16.mxu0 0
        %1502 = vmatpush1.bf16.msra.mxu0 0
        %1503 = vmatprep.subr.bf16.mxu0 0
        %1504 = vmatpush1.bf16.msra.mxu0 0
        %1505 = vmatprep.subr.bf16.mxu0 0
        %1506 = vmatpush1.bf16.msra.mxu0 0
        %1507 = vmatprep.subr.bf16.mxu0 0
        %1508 = vmatpush1.bf16.msra.mxu0 0
        %1509 = vmatprep.subr.bf16.mxu0 0
        %1510 = vmatpush1.bf16.msra.mxu0 0
        %1511 = vmatprep.subr.bf16.mxu0 0
        %1512 = vmatpush1.bf16.msra.mxu0 0
        %1513 = vmatprep.mubr.bf16.mxu0 0
        %1514 = vmatmul.mubr.bf16.gmra.mrb[0].mxu0 %v1119
        %v1515 = vpop.f32.mrb[0].mxu0
        %v1516 = vadd.f32 0.0, %v1515
        %v1517 = vpop.f32.mrb[0].mxu0
        %v1518 = vadd.f32 0.0, %v1517
        %v1519 = vpop.f32.mrb[0].mxu0
        %v1520 = vadd.f32 0.0, %v1519
        %v1521 = vpop.f32.mrb[0].mxu0
        %v1522 = vadd.f32 0.0, %v1521
        %1523 = vmatprep.mubr.bf16.mxu0 0
        %1524 = vmatmul.mubr.bf16.gmra.mrb[0].mxu0 %v1122
        %v1525 = vpop.f32.mrb[0].mxu0
        %v1526 = vadd.f32 0.0, %v1525
        %v1527 = vpop.f32.mrb[0].mxu0
        %v1528 = vadd.f32 0.0, %v1527
        %v1529 = vpop.f32.mrb[0].mxu0
        %v1530 = vadd.f32 0.0, %v1529
        %v1531 = vpop.f32.mrb[0].mxu0
        %v1532 = vadd.f32 0.0, %v1531
        %1533 = vmatprep.mubr.bf16.mxu0 0
        %1534 = vmatmul.mubr.bf16.gmra.mrb[0].mxu0 %v1125
        %v1535 = vpop.f32.mrb[0].mxu0
        %v1536 = vadd.f32 0.0, %v1535
        %v1537 = vpop.f32.mrb[0].mxu0
        %v1538 = vadd.f32 0.0, %v1537
        %v1539 = vpop.f32.mrb[0].mxu0
        %v1540 = vadd.f32 0.0, %v1539
        %v1541 = vpop.f32.mrb[0].mxu0
        %v1542 = vadd.f32 0.0, %v1541
        %1543 = vmatprep.mubr.bf16.mxu0 0
        %1544 = vmatmul.mubr.bf16.gmra.mrb[0].mxu0 %v1128
        %v1545 = vpop.f32.mrb[0].mxu0
        %v1546 = vadd.f32 0.0, %v1545
        %v1547 = vpop.f32.mrb[0].mxu0
        %v1548 = vadd.f32 0.0, %v1547
        %v1549 = vpop.f32.mrb[0].mxu0
        %v1550 = vadd.f32 0.0, %v1549
        %v1551 = vpop.f32.mrb[0].mxu0
        %v1552 = vadd.f32 0.0, %v1551
        %1553 = vmatprep.mubr.bf16.mxu0 0
        %1554 = vmatmul.mubr.bf16.gmra.mrb[0].mxu0 %v1131
        %v1555 = vpop.f32.mrb[0].mxu0
        %v1556 = vadd.f32 0.0, %v1555
        %v1557 = vpop.f32.mrb[0].mxu0
        %v1558 = vadd.f32 0.0, %v1557
        %v1559 = vpop.f32.mrb[0].mxu0
        %v1560 = vadd.f32 0.0, %v1559
        %v1561 = vpop.f32.mrb[0].mxu0
        %v1562 = vadd.f32 0.0, %v1561
        %1563 = vmatprep.mubr.bf16.mxu0 0
        %1564 = vmatmul.mubr.bf16.gmra.mrb[0].mxu0 %v1134
        %v1565 = vpop.f32.mrb[0].mxu0
        %v1566 = vadd.f32 0.0, %v1565
        %v1567 = vpop.f32.mrb[0].mxu0
        %v1568 = vadd.f32 0.0, %v1567
        %v1569 = vpop.f32.mrb[0].mxu0
        %v1570 = vadd.f32 0.0, %v1569
        %v1571 = vpop.f32.mrb[0].mxu0
        %v1572 = vadd.f32 0.0, %v1571
        %1573 = vmatprep.mubr.bf16.mxu0 0
        %1574 = vmatmul.mubr.bf16.gmra.mrb[0].mxu0 %v1137
        %v1575 = vpop.f32.mrb[0].mxu0
        %v1576 = vadd.f32 0.0, %v1575
        %v1577 = vpop.f32.mrb[0].mxu0
        %v1578 = vadd.f32 0.0, %v1577
        %v1579 = vpop.f32.mrb[0].mxu0
        %v1580 = vadd.f32 0.0, %v1579
        %v1581 = vpop.f32.mrb[0].mxu0
        %v1582 = vadd.f32 0.0, %v1581
        %1583 = vmatprep.mubr.bf16.mxu0 0
        %1584 = vmatmul.mubr.bf16.gmra.mrb[0].mxu0 %v1140
        %v1585 = vpop.f32.mrb[0].mxu0
        %v1586 = vadd.f32 0.0, %v1585
        %v1587 = vpop.f32.mrb[0].mxu0
        %v1588 = vadd.f32 0.0, %v1587
        %v1589 = vpop.f32.mrb[0].mxu0
        %v1590 = vadd.f32 0.0, %v1589
        %v1591 = vpop.f32.mrb[0].mxu0
        %v1592 = vadd.f32 0.0, %v1591
        %1593 = vdwg.mxu0
        %1594 = vmatprep.subr.bf16.mxu0 %v1086
        %1595 = vmatpush1.bf16.msra.mxu0 %v1085
        %1596 = vmatprep.subr.bf16.mxu0 %v1096
        %1597 = vmatpush1.bf16.msra.mxu0 %v1095
        %1598 = vmatprep.subr.bf16.mxu0 0
        %1599 = vmatpush1.bf16.msra.mxu0 0
        %1600 = vmatprep.subr.bf16.mxu0 0
        %1601 = vmatpush1.bf16.msra.mxu0 0
        %1602 = vmatprep.subr.bf16.mxu0 0
        %1603 = vmatpush1.bf16.msra.mxu0 0
        %1604 = vmatprep.subr.bf16.mxu0 0
        %1605 = vmatpush1.bf16.msra.mxu0 0
        %1606 = vmatprep.subr.bf16.mxu0 0
        %1607 = vmatpush1.bf16.msra.mxu0 0
        %1608 = vmatprep.subr.bf16.mxu0 0
        %1609 = vmatpush1.bf16.msra.mxu0 0
        %1610 = vmatprep.subr.bf16.mxu0 0
        %1611 = vmatpush1.bf16.msra.mxu0 0
        %1612 = vmatprep.subr.bf16.mxu0 0
        %1613 = vmatpush1.bf16.msra.mxu0 0
        %1614 = vmatprep.subr.bf16.mxu0 0
        %1615 = vmatpush1.bf16.msra.mxu0 0
        %1616 = vmatprep.subr.bf16.mxu0 0
        %1617 = vmatpush1.bf16.msra.mxu0 0
        %1618 = vmatprep.subr.bf16.mxu0 0
        %1619 = vmatpush1.bf16.msra.mxu0 0
        %1620 = vmatprep.subr.bf16.mxu0 0
        %1621 = vmatpush1.bf16.msra.mxu0 0
        %1622 = vmatprep.subr.bf16.mxu0 0
        %1623 = vmatpush1.bf16.msra.mxu0 0
        %1624 = vmatprep.subr.bf16.mxu0 0
        %1625 = vmatpush1.bf16.msra.mxu0 0
        %1626 = vmatprep.mubr.bf16.mxu0 0
        %1627 = vmatmul.mubr.bf16.gmra.mrb[0].mxu0 %v1119
        %v1628 = vpop.f32.mrb[0].mxu0
        %v1629 = vadd.f32 0.0, %v1628
        %v1630 = vpop.f32.mrb[0].mxu0
        %v1631 = vadd.f32 0.0, %v1630
        %v1632 = vpop.f32.mrb[0].mxu0
        %v1633 = vadd.f32 0.0, %v1632
        %v1634 = vpop.f32.mrb[0].mxu0
        %v1635 = vadd.f32 0.0, %v1634
        %1636 = vmatprep.mubr.bf16.mxu0 0
        %1637 = vmatmul.mubr.bf16.gmra.mrb[0].mxu0 %v1122
        %v1638 = vpop.f32.mrb[0].mxu0
        %v1639 = vadd.f32 0.0, %v1638
        %v1640 = vpop.f32.mrb[0].mxu0
        %v1641 = vadd.f32 0.0, %v1640
        %v1642 = vpop.f32.mrb[0].mxu0
        %v1643 = vadd.f32 0.0, %v1642
        %v1644 = vpop.f32.mrb[0].mxu0
        %v1645 = vadd.f32 0.0, %v1644
        %1646 = vmatprep.mubr.bf16.mxu0 0
        %1647 = vmatmul.mubr.bf16.gmra.mrb[0].mxu0 %v1125
        %v1648 = vpop.f32.mrb[0].mxu0
        %v1649 = vadd.f32 0.0, %v1648
        %v1650 = vpop.f32.mrb[0].mxu0
        %v1651 = vadd.f32 0.0, %v1650
        %v1652 = vpop.f32.mrb[0].mxu0
        %v1653 = vadd.f32 0.0, %v1652
        %v1654 = vpop.f32.mrb[0].mxu0
        %v1655 = vadd.f32 0.0, %v1654
        %1656 = vmatprep.mubr.bf16.mxu0 0
        %1657 = vmatmul.mubr.bf16.gmra.mrb[0].mxu0 %v1128
        %v1658 = vpop.f32.mrb[0].mxu0
        %v1659 = vadd.f32 0.0, %v1658
        %v1660 = vpop.f32.mrb[0].mxu0
        %v1661 = vadd.f32 0.0, %v1660
        %v1662 = vpop.f32.mrb[0].mxu0
        %v1663 = vadd.f32 0.0, %v1662
        %v1664 = vpop.f32.mrb[0].mxu0
        %v1665 = vadd.f32 0.0, %v1664
        %1666 = vmatprep.mubr.bf16.mxu0 0
        %1667 = vmatmul.mubr.bf16.gmra.mrb[0].mxu0 %v1131
        %v1668 = vpop.f32.mrb[0].mxu0
        %v1669 = vadd.f32 0.0, %v1668
        %v1670 = vpop.f32.mrb[0].mxu0
        %v1671 = vadd.f32 0.0, %v1670
        %v1672 = vpop.f32.mrb[0].mxu0
        %v1673 = vadd.f32 0.0, %v1672
        %v1674 = vpop.f32.mrb[0].mxu0
        %v1675 = vadd.f32 0.0, %v1674
        %1676 = vmatprep.mubr.bf16.mxu0 0
        %1677 = vmatmul.mubr.bf16.gmra.mrb[0].mxu0 %v1134
        %v1678 = vpop.f32.mrb[0].mxu0
        %v1679 = vadd.f32 0.0, %v1678
        %v1680 = vpop.f32.mrb[0].mxu0
        %v1681 = vadd.f32 0.0, %v1680
        %v1682 = vpop.f32.mrb[0].mxu0
        %v1683 = vadd.f32 0.0, %v1682
        %v1684 = vpop.f32.mrb[0].mxu0
        %v1685 = vadd.f32 0.0, %v1684
        %1686 = vmatprep.mubr.bf16.mxu0 0
        %1687 = vmatmul.mubr.bf16.gmra.mrb[0].mxu0 %v1137
        %v1688 = vpop.f32.mrb[0].mxu0
        %v1689 = vadd.f32 0.0, %v1688
        %v1690 = vpop.f32.mrb[0].mxu0
        %v1691 = vadd.f32 0.0, %v1690
        %v1692 = vpop.f32.mrb[0].mxu0
        %v1693 = vadd.f32 0.0, %v1692
        %v1694 = vpop.f32.mrb[0].mxu0
        %v1695 = vadd.f32 0.0, %v1694
        %1696 = vmatprep.mubr.bf16.mxu0 0
        %1697 = vmatmul.mubr.bf16.gmra.mrb[0].mxu0 %v1140
        %v1698 = vpop.f32.mrb[0].mxu0
        %v1699 = vadd.f32 0.0, %v1698
        %v1700 = vpop.f32.mrb[0].mxu0
        %v1701 = vadd.f32 0.0, %v1700
        %v1702 = vpop.f32.mrb[0].mxu0
        %v1703 = vadd.f32 0.0, %v1702
        %v1704 = vpop.f32.mrb[0].mxu0
        %v1705 = vadd.f32 0.0, %v1704
        %1706 = vdwg.mxu0
        %v1707 = vpack.c.bf16 %v1181, %v1177
        %v1708 = vpack.c.bf16 %v1183, %v1179
        %v1709 = vpack.c.bf16 %v1294, %v1290
        %v1710 = vpack.c.bf16 %v1296, %v1292
        %v1711 = vpack.c.bf16 %v1407, %v1403
        %v1712 = vpack.c.bf16 %v1409, %v1405
        %v1713 = vpack.c.bf16 %v1520, %v1516
        %v1714 = vpack.c.bf16 %v1522, %v1518
        %v1715 = vpack.c.bf16 %v1633, %v1629
        %v1716 = vpack.c.bf16 %v1635, %v1631
        %v1717 = vpack.c.bf16 %v1191, %v1187
        %v1718 = vpack.c.bf16 %v1193, %v1189
        %v1719 = vpack.c.bf16 %v1304, %v1300
        %v1720 = vpack.c.bf16 %v1306, %v1302
        %v1721 = vpack.c.bf16 %v1417, %v1413
        %v1722 = vpack.c.bf16 %v1419, %v1415
        %v1723 = vpack.c.bf16 %v1530, %v1526
        %v1724 = vpack.c.bf16 %v1532, %v1528
        %v1725 = vpack.c.bf16 %v1643, %v1639
        %v1726 = vpack.c.bf16 %v1645, %v1641
        %v1727 = vpack.c.bf16 %v1201, %v1197
        %v1728 = vpack.c.bf16 %v1203, %v1199
        %v1729 = vpack.c.bf16 %v1314, %v1310
        %v1730 = vpack.c.bf16 %v1316, %v1312
        %v1731 = vpack.c.bf16 %v1427, %v1423
        %v1732 = vpack.c.bf16 %v1429, %v1425
        %v1733 = vpack.c.bf16 %v1540, %v1536
        %v1734 = vpack.c.bf16 %v1542, %v1538
        %v1735 = vpack.c.bf16 %v1653, %v1649
        %v1736 = vpack.c.bf16 %v1655, %v1651
        %v1737 = vpack.c.bf16 %v1211, %v1207
        %v1738 = vpack.c.bf16 %v1213, %v1209
        %v1739 = vpack.c.bf16 %v1324, %v1320
        %v1740 = vpack.c.bf16 %v1326, %v1322
        %v1741 = vpack.c.bf16 %v1437, %v1433
        %v1742 = vpack.c.bf16 %v1439, %v1435
        %v1743 = vpack.c.bf16 %v1550, %v1546
        %v1744 = vpack.c.bf16 %v1552, %v1548
        %v1745 = vpack.c.bf16 %v1663, %v1659
        %v1746 = vpack.c.bf16 %v1665, %v1661
        %v1747 = vpack.c.bf16 %v1221, %v1217
        %v1748 = vpack.c.bf16 %v1223, %v1219
        %v1749 = vpack.c.bf16 %v1334, %v1330
        %v1750 = vpack.c.bf16 %v1336, %v1332
        %v1751 = vpack.c.bf16 %v1447, %v1443
        %v1752 = vpack.c.bf16 %v1449, %v1445
        %v1753 = vpack.c.bf16 %v1560, %v1556
        %v1754 = vpack.c.bf16 %v1562, %v1558
        %v1755 = vpack.c.bf16 %v1673, %v1669
        %v1756 = vpack.c.bf16 %v1675, %v1671
        %v1757 = vpack.c.bf16 %v1231, %v1227
        %v1758 = vpack.c.bf16 %v1233, %v1229
        %v1759 = vpack.c.bf16 %v1344, %v1340
        %v1760 = vpack.c.bf16 %v1346, %v1342
        %v1761 = vpack.c.bf16 %v1457, %v1453
        %v1762 = vpack.c.bf16 %v1459, %v1455
        %v1763 = vpack.c.bf16 %v1570, %v1566
        %v1764 = vpack.c.bf16 %v1572, %v1568
        %v1765 = vpack.c.bf16 %v1683, %v1679
        %v1766 = vpack.c.bf16 %v1685, %v1681
        %v1767 = vpack.c.bf16 %v1241, %v1237
        %v1768 = vpack.c.bf16 %v1243, %v1239
        %v1769 = vpack.c.bf16 %v1354, %v1350
        %v1770 = vpack.c.bf16 %v1356, %v1352
        %v1771 = vpack.c.bf16 %v1467, %v1463
        %v1772 = vpack.c.bf16 %v1469, %v1465
        %v1773 = vpack.c.bf16 %v1580, %v1576
        %v1774 = vpack.c.bf16 %v1582, %v1578
        %v1775 = vpack.c.bf16 %v1693, %v1689
        %v1776 = vpack.c.bf16 %v1695, %v1691
        %v1777 = vpack.c.bf16 %v1251, %v1247
        %v1778 = vpack.c.bf16 %v1253, %v1249
        %v1779 = vpack.c.bf16 %v1364, %v1360
        %v1780 = vpack.c.bf16 %v1366, %v1362
        %v1781 = vpack.c.bf16 %v1477, %v1473
        %v1782 = vpack.c.bf16 %v1479, %v1475
        %v1783 = vpack.c.bf16 %v1590, %v1586
        %v1784 = vpack.c.bf16 %v1592, %v1588
        %v1785 = vpack.c.bf16 %v1703, %v1699
        %v1786 = vpack.c.bf16 %v1705, %v1701
        %v1787 = vld [vmem:[#allocation11] sm:$0xff]
        %v1788 = vld [vmem:[#allocation11 + $0x8] sm:$0x3]
        %v1791 = vlaneseq
        %v1792 = vshrl.u32 %v1791, 7
        %v1793 = vsub.s32 0, %v1792
        %v1794 = vrot.slane %v1787, %v1793
        %v1795 = vlaneseq
        %v1796 = vshrl.u32 %v1795, 7
        %v1797 = vsub.s32 1, %v1796
        %v1798 = vrot.slane %v1787, %v1797
        %v1799 = vlaneseq
        %v1800 = vshrl.u32 %v1799, 7
        %v1801 = vsub.s32 2, %v1800
        %v1802 = vrot.slane %v1787, %v1801
        %v1803 = vlaneseq
        %v1804 = vshrl.u32 %v1803, 7
        %v1805 = vsub.s32 3, %v1804
        %v1806 = vrot.slane %v1787, %v1805
        %v1807 = vlaneseq
        %v1808 = vshrl.u32 %v1807, 7
        %v1809 = vsub.s32 4, %v1808
        %v1810 = vrot.slane %v1787, %v1809
        %v1811 = vlaneseq
        %v1812 = vshrl.u32 %v1811, 7
        %v1813 = vsub.s32 5, %v1812
        %v1814 = vrot.slane %v1787, %v1813
        %v1815 = vlaneseq
        %v1816 = vshrl.u32 %v1815, 7
        %v1817 = vsub.s32 6, %v1816
        %v1818 = vrot.slane %v1787, %v1817
        %v1819 = vlaneseq
        %v1820 = vshrl.u32 %v1819, 7
        %v1821 = vsub.s32 7, %v1820
        %v1822 = vrot.slane %v1787, %v1821
        %v1823 = vlaneseq
        %v1824 = vshrl.u32 %v1823, 7
        %v1825 = vsub.s32 0, %v1824
        %v1826 = vrot.slane %v1788, %v1825
        %v1827 = vlaneseq
        %v1828 = vshrl.u32 %v1827, 7
        %v1829 = vsub.s32 1, %v1828
        %v1830 = vrot.slane %v1788, %v1829
        %v1841 = vpack.c.bf16 %v1794, %v1794
        %v1842 = vpack.c.bf16 %v1798, %v1798
        %v1843 = vpack.c.bf16 %v1802, %v1802
        %v1844 = vpack.c.bf16 %v1806, %v1806
        %v1845 = vpack.c.bf16 %v1810, %v1810
        %v1846 = vpack.c.bf16 %v1814, %v1814
        %v1847 = vpack.c.bf16 %v1818, %v1818
        %v1848 = vpack.c.bf16 %v1822, %v1822
        %v1849 = vpack.c.bf16 %v1826, %v1826
        %v1850 = vpack.c.bf16 %v1830, %v1830
        %v1852 = vpack.i.b16 %v1841, %v1841
        %v1854 = vlaneseq
        %v1855 = vshrl.u32 %v1854, 7
        %v1856 = vsub.s32 0, %v1855
        %v1857 = vrot.slane %v1852, %v1856
        %v1859 = vpack.i.b16 %v1842, %v1842
        %v1861 = vlaneseq
        %v1862 = vshrl.u32 %v1861, 7
        %v1863 = vsub.s32 0, %v1862
        %v1864 = vrot.slane %v1859, %v1863
        %v1866 = vpack.i.b16 %v1843, %v1843
        %v1868 = vlaneseq
        %v1869 = vshrl.u32 %v1868, 7
        %v1870 = vsub.s32 0, %v1869
        %v1871 = vrot.slane %v1866, %v1870
        %v1873 = vpack.i.b16 %v1844, %v1844
        %v1875 = vlaneseq
        %v1876 = vshrl.u32 %v1875, 7
        %v1877 = vsub.s32 0, %v1876
        %v1878 = vrot.slane %v1873, %v1877
        %v1880 = vpack.i.b16 %v1845, %v1845
        %v1882 = vlaneseq
        %v1883 = vshrl.u32 %v1882, 7
        %v1884 = vsub.s32 0, %v1883
        %v1885 = vrot.slane %v1880, %v1884
        %v1887 = vpack.i.b16 %v1846, %v1846
        %v1889 = vlaneseq
        %v1890 = vshrl.u32 %v1889, 7
        %v1891 = vsub.s32 0, %v1890
        %v1892 = vrot.slane %v1887, %v1891
        %v1894 = vpack.i.b16 %v1847, %v1847
        %v1896 = vlaneseq
        %v1897 = vshrl.u32 %v1896, 7
        %v1898 = vsub.s32 0, %v1897
        %v1899 = vrot.slane %v1894, %v1898
        %v1901 = vpack.i.b16 %v1848, %v1848
        %v1903 = vlaneseq
        %v1904 = vshrl.u32 %v1903, 7
        %v1905 = vsub.s32 0, %v1904
        %v1906 = vrot.slane %v1901, %v1905
        %v1908 = vpack.i.b16 %v1849, %v1849
        %v1910 = vlaneseq
        %v1911 = vshrl.u32 %v1910, 7
        %v1912 = vsub.s32 0, %v1911
        %v1913 = vrot.slane %v1908, %v1912
        %v1915 = vpack.i.b16 %v1850, %v1850
        %v1917 = vlaneseq
        %v1918 = vshrl.u32 %v1917, 7
        %v1919 = vsub.s32 0, %v1918
        %v1920 = vrot.slane %v1915, %v1919
        %v1921 = vadd.bf16 %v1707, %v1857
        %v1922 = vadd.bf16 %v1708, %v1864
        %v1923 = vadd.bf16 %v1709, %v1871
        %v1924 = vadd.bf16 %v1710, %v1878
        %v1925 = vadd.bf16 %v1711, %v1885
        %v1926 = vadd.bf16 %v1712, %v1892
        %v1927 = vadd.bf16 %v1713, %v1899
        %v1928 = vadd.bf16 %v1714, %v1906
        %v1929 = vadd.bf16 %v1715, %v1913
        %v1930 = vadd.bf16 %v1716, %v1920
        %v1931 = vadd.bf16 %v1717, %v1857
        %v1932 = vadd.bf16 %v1718, %v1864
        %v1933 = vadd.bf16 %v1719, %v1871
        %v1934 = vadd.bf16 %v1720, %v1878
        %v1935 = vadd.bf16 %v1721, %v1885
        %v1936 = vadd.bf16 %v1722, %v1892
        %v1937 = vadd.bf16 %v1723, %v1899
        %v1938 = vadd.bf16 %v1724, %v1906
        %v1939 = vadd.bf16 %v1725, %v1913
        %v1940 = vadd.bf16 %v1726, %v1920
        %v1941 = vadd.bf16 %v1727, %v1857
        %v1942 = vadd.bf16 %v1728, %v1864
        %v1943 = vadd.bf16 %v1729, %v1871
        %v1944 = vadd.bf16 %v1730, %v1878
        %v1945 = vadd.bf16 %v1731, %v1885
        %v1946 = vadd.bf16 %v1732, %v1892
        %v1947 = vadd.bf16 %v1733, %v1899
        %v1948 = vadd.bf16 %v1734, %v1906
        %v1949 = vadd.bf16 %v1735, %v1913
        %v1950 = vadd.bf16 %v1736, %v1920
        %v1951 = vadd.bf16 %v1737, %v1857
        %v1952 = vadd.bf16 %v1738, %v1864
        %v1953 = vadd.bf16 %v1739, %v1871
        %v1954 = vadd.bf16 %v1740, %v1878
        %v1955 = vadd.bf16 %v1741, %v1885
        %v1956 = vadd.bf16 %v1742, %v1892
        %v1957 = vadd.bf16 %v1743, %v1899
        %v1958 = vadd.bf16 %v1744, %v1906
        %v1959 = vadd.bf16 %v1745, %v1913
        %v1960 = vadd.bf16 %v1746, %v1920
        %v1961 = vadd.bf16 %v1747, %v1857
        %v1962 = vadd.bf16 %v1748, %v1864
        %v1963 = vadd.bf16 %v1749, %v1871
        %v1964 = vadd.bf16 %v1750, %v1878
        %v1965 = vadd.bf16 %v1751, %v1885
        %v1966 = vadd.bf16 %v1752, %v1892
        %v1967 = vadd.bf16 %v1753, %v1899
        %v1968 = vadd.bf16 %v1754, %v1906
        %v1969 = vadd.bf16 %v1755, %v1913
        %v1970 = vadd.bf16 %v1756, %v1920
        %v1971 = vadd.bf16 %v1757, %v1857
        %v1972 = vadd.bf16 %v1758, %v1864
        %v1973 = vadd.bf16 %v1759, %v1871
        %v1974 = vadd.bf16 %v1760, %v1878
        %v1975 = vadd.bf16 %v1761, %v1885
        %v1976 = vadd.bf16 %v1762, %v1892
        %v1977 = vadd.bf16 %v1763, %v1899
        %v1978 = vadd.bf16 %v1764, %v1906
        %v1979 = vadd.bf16 %v1765, %v1913
        %v1980 = vadd.bf16 %v1766, %v1920
        %v1981 = vadd.bf16 %v1767, %v1857
        %v1982 = vadd.bf16 %v1768, %v1864
        %v1983 = vadd.bf16 %v1769, %v1871
        %v1984 = vadd.bf16 %v1770, %v1878
        %v1985 = vadd.bf16 %v1771, %v1885
        %v1986 = vadd.bf16 %v1772, %v1892
        %v1987 = vadd.bf16 %v1773, %v1899
        %v1988 = vadd.bf16 %v1774, %v1906
        %v1989 = vadd.bf16 %v1775, %v1913
        %v1990 = vadd.bf16 %v1776, %v1920
        %v1991 = vadd.bf16 %v1777, %v1857
        %v1992 = vadd.bf16 %v1778, %v1864
        %v1993 = vadd.bf16 %v1779, %v1871
        %v1994 = vadd.bf16 %v1780, %v1878
        %v1995 = vadd.bf16 %v1781, %v1885
        %v1996 = vadd.bf16 %v1782, %v1892
        %v1997 = vadd.bf16 %v1783, %v1899
        %v1998 = vadd.bf16 %v1784, %v1906
        %v1999 = vadd.bf16 %v1785, %v1913
        %v2000 = vadd.bf16 %v1786, %v1920
        %v2001 = vxor.u32 %v1921, 2147516416
        %v2002 = vxor.u32 %v1922, 2147516416
        %v2003 = vxor.u32 %v1923, 2147516416
        %v2004 = vxor.u32 %v1924, 2147516416
        %v2005 = vxor.u32 %v1925, 2147516416
        %v2006 = vxor.u32 %v1926, 2147516416
        %v2007 = vxor.u32 %v1927, 2147516416
        %v2008 = vxor.u32 %v1928, 2147516416
        %v2009 = vxor.u32 %v1929, 2147516416
        %v2010 = vxor.u32 %v1930, 2147516416
        %v2011 = vxor.u32 %v1931, 2147516416
        %v2012 = vxor.u32 %v1932, 2147516416
        %v2013 = vxor.u32 %v1933, 2147516416
        %v2014 = vxor.u32 %v1934, 2147516416
        %v2015 = vxor.u32 %v1935, 2147516416
        %v2016 = vxor.u32 %v1936, 2147516416
        %v2017 = vxor.u32 %v1937, 2147516416
        %v2018 = vxor.u32 %v1938, 2147516416
        %v2019 = vxor.u32 %v1939, 2147516416
        %v2020 = vxor.u32 %v1940, 2147516416
        %v2021 = vxor.u32 %v1941, 2147516416
        %v2022 = vxor.u32 %v1942, 2147516416
        %v2023 = vxor.u32 %v1943, 2147516416
        %v2024 = vxor.u32 %v1944, 2147516416
        %v2025 = vxor.u32 %v1945, 2147516416
        %v2026 = vxor.u32 %v1946, 2147516416
        %v2027 = vxor.u32 %v1947, 2147516416
        %v2028 = vxor.u32 %v1948, 2147516416
        %v2029 = vxor.u32 %v1949, 2147516416
        %v2030 = vxor.u32 %v1950, 2147516416
        %v2031 = vxor.u32 %v1951, 2147516416
        %v2032 = vxor.u32 %v1952, 2147516416
        %v2033 = vxor.u32 %v1953, 2147516416
        %v2034 = vxor.u32 %v1954, 2147516416
        %v2035 = vxor.u32 %v1955, 2147516416
        %v2036 = vxor.u32 %v1956, 2147516416
        %v2037 = vxor.u32 %v1957, 2147516416
        %v2038 = vxor.u32 %v1958, 2147516416
        %v2039 = vxor.u32 %v1959, 2147516416
        %v2040 = vxor.u32 %v1960, 2147516416
        %v2041 = vxor.u32 %v1961, 2147516416
        %v2042 = vxor.u32 %v1962, 2147516416
        %v2043 = vxor.u32 %v1963, 2147516416
        %v2044 = vxor.u32 %v1964, 2147516416
        %v2045 = vxor.u32 %v1965, 2147516416
        %v2046 = vxor.u32 %v1966, 2147516416
        %v2047 = vxor.u32 %v1967, 2147516416
        %v2048 = vxor.u32 %v1968, 2147516416
        %v2049 = vxor.u32 %v1969, 2147516416
        %v2050 = vxor.u32 %v1970, 2147516416
        %v2051 = vxor.u32 %v1971, 2147516416
        %v2052 = vxor.u32 %v1972, 2147516416
        %v2053 = vxor.u32 %v1973, 2147516416
        %v2054 = vxor.u32 %v1974, 2147516416
        %v2055 = vxor.u32 %v1975, 2147516416
        %v2056 = vxor.u32 %v1976, 2147516416
        %v2057 = vxor.u32 %v1977, 2147516416
        %v2058 = vxor.u32 %v1978, 2147516416
        %v2059 = vxor.u32 %v1979, 2147516416
        %v2060 = vxor.u32 %v1980, 2147516416
        %v2061 = vxor.u32 %v1981, 2147516416
        %v2062 = vxor.u32 %v1982, 2147516416
        %v2063 = vxor.u32 %v1983, 2147516416
        %v2064 = vxor.u32 %v1984, 2147516416
        %v2065 = vxor.u32 %v1985, 2147516416
        %v2066 = vxor.u32 %v1986, 2147516416
        %v2067 = vxor.u32 %v1987, 2147516416
        %v2068 = vxor.u32 %v1988, 2147516416
        %v2069 = vxor.u32 %v1989, 2147516416
        %v2070 = vxor.u32 %v1990, 2147516416
        %v2071 = vxor.u32 %v1991, 2147516416
        %v2072 = vxor.u32 %v1992, 2147516416
        %v2073 = vxor.u32 %v1993, 2147516416
        %v2074 = vxor.u32 %v1994, 2147516416
        %v2075 = vxor.u32 %v1995, 2147516416
        %v2076 = vxor.u32 %v1996, 2147516416
        %v2077 = vxor.u32 %v1997, 2147516416
        %v2078 = vxor.u32 %v1998, 2147516416
        %v2079 = vxor.u32 %v1999, 2147516416
        %v2080 = vxor.u32 %v2000, 2147516416
        %v2082 = vmul.bf16 %v2001, 1069105081
        %v2083 = vpow.bf16.pop %v2082
        %v2085 = vmul.bf16 %v2002, 1069105081
        %v2086 = vpow.bf16.pop %v2085
        %v2088 = vmul.bf16 %v2003, 1069105081
        %v2089 = vpow.bf16.pop %v2088
        %v2091 = vmul.bf16 %v2004, 1069105081
        %v2092 = vpow.bf16.pop %v2091
        %v2094 = vmul.bf16 %v2005, 1069105081
        %v2095 = vpow.bf16.pop %v2094
        %v2097 = vmul.bf16 %v2006, 1069105081
        %v2098 = vpow.bf16.pop %v2097
        %v2100 = vmul.bf16 %v2007, 1069105081
        %v2101 = vpow.bf16.pop %v2100
        %v2103 = vmul.bf16 %v2008, 1069105081
        %v2104 = vpow.bf16.pop %v2103
        %v2106 = vmul.bf16 %v2009, 1069105081
        %v2107 = vpow.bf16.pop %v2106
        %v2109 = vmul.bf16 %v2010, 1069105081
        %v2110 = vpow.bf16.pop %v2109
        %v2112 = vmul.bf16 %v2011, 1069105081
        %v2113 = vpow.bf16.pop %v2112
        %v2115 = vmul.bf16 %v2012, 1069105081
        %v2116 = vpow.bf16.pop %v2115
        %v2118 = vmul.bf16 %v2013, 1069105081
        %v2119 = vpow.bf16.pop %v2118
        %v2121 = vmul.bf16 %v2014, 1069105081
        %v2122 = vpow.bf16.pop %v2121
        %v2124 = vmul.bf16 %v2015, 1069105081
        %v2125 = vpow.bf16.pop %v2124
        %v2127 = vmul.bf16 %v2016, 1069105081
        %v2128 = vpow.bf16.pop %v2127
        %v2130 = vmul.bf16 %v2017, 1069105081
        %v2131 = vpow.bf16.pop %v2130
        %v2133 = vmul.bf16 %v2018, 1069105081
        %v2134 = vpow.bf16.pop %v2133
        %v2136 = vmul.bf16 %v2019, 1069105081
        %v2137 = vpow.bf16.pop %v2136
        %v2139 = vmul.bf16 %v2020, 1069105081
        %v2140 = vpow.bf16.pop %v2139
        %v2142 = vmul.bf16 %v2021, 1069105081
        %v2143 = vpow.bf16.pop %v2142
        %v2145 = vmul.bf16 %v2022, 1069105081
        %v2146 = vpow.bf16.pop %v2145
        %v2148 = vmul.bf16 %v2023, 1069105081
        %v2149 = vpow.bf16.pop %v2148
        %v2151 = vmul.bf16 %v2024, 1069105081
        %v2152 = vpow.bf16.pop %v2151
        %v2154 = vmul.bf16 %v2025, 1069105081
        %v2155 = vpow.bf16.pop %v2154
        %v2157 = vmul.bf16 %v2026, 1069105081
        %v2158 = vpow.bf16.pop %v2157
        %v2160 = vmul.bf16 %v2027, 1069105081
        %v2161 = vpow.bf16.pop %v2160
        %v2163 = vmul.bf16 %v2028, 1069105081
        %v2164 = vpow.bf16.pop %v2163
        %v2166 = vmul.bf16 %v2029, 1069105081
        %v2167 = vpow.bf16.pop %v2166
        %v2169 = vmul.bf16 %v2030, 1069105081
        %v2170 = vpow.bf16.pop %v2169
        %v2172 = vmul.bf16 %v2031, 1069105081
        %v2173 = vpow.bf16.pop %v2172
        %v2175 = vmul.bf16 %v2032, 1069105081
        %v2176 = vpow.bf16.pop %v2175
        %v2178 = vmul.bf16 %v2033, 1069105081
        %v2179 = vpow.bf16.pop %v2178
        %v2181 = vmul.bf16 %v2034, 1069105081
        %v2182 = vpow.bf16.pop %v2181
        %v2184 = vmul.bf16 %v2035, 1069105081
        %v2185 = vpow.bf16.pop %v2184
        %v2187 = vmul.bf16 %v2036, 1069105081
        %v2188 = vpow.bf16.pop %v2187
        %v2190 = vmul.bf16 %v2037, 1069105081
        %v2191 = vpow.bf16.pop %v2190
        %v2193 = vmul.bf16 %v2038, 1069105081
        %v2194 = vpow.bf16.pop %v2193
        %v2196 = vmul.bf16 %v2039, 1069105081
        %v2197 = vpow.bf16.pop %v2196
        %v2199 = vmul.bf16 %v2040, 1069105081
        %v2200 = vpow.bf16.pop %v2199
        %v2202 = vmul.bf16 %v2041, 1069105081
        %v2203 = vpow.bf16.pop %v2202
        %v2205 = vmul.bf16 %v2042, 1069105081
        %v2206 = vpow.bf16.pop %v2205
        %v2208 = vmul.bf16 %v2043, 1069105081
        %v2209 = vpow.bf16.pop %v2208
        %v2211 = vmul.bf16 %v2044, 1069105081
        %v2212 = vpow.bf16.pop %v2211
        %v2214 = vmul.bf16 %v2045, 1069105081
        %v2215 = vpow.bf16.pop %v2214
        %v2217 = vmul.bf16 %v2046, 1069105081
        %v2218 = vpow.bf16.pop %v2217
        %v2220 = vmul.bf16 %v2047, 1069105081
        %v2221 = vpow.bf16.pop %v2220
        %v2223 = vmul.bf16 %v2048, 1069105081
        %v2224 = vpow.bf16.pop %v2223
        %v2226 = vmul.bf16 %v2049, 1069105081
        %v2227 = vpow.bf16.pop %v2226
        %v2229 = vmul.bf16 %v2050, 1069105081
        %v2230 = vpow.bf16.pop %v2229
        %v2232 = vmul.bf16 %v2051, 1069105081
        %v2233 = vpow.bf16.pop %v2232
        %v2235 = vmul.bf16 %v2052, 1069105081
        %v2236 = vpow.bf16.pop %v2235
        %v2238 = vmul.bf16 %v2053, 1069105081
        %v2239 = vpow.bf16.pop %v2238
        %v2241 = vmul.bf16 %v2054, 1069105081
        %v2242 = vpow.bf16.pop %v2241
        %v2244 = vmul.bf16 %v2055, 1069105081
        %v2245 = vpow.bf16.pop %v2244
        %v2247 = vmul.bf16 %v2056, 1069105081
        %v2248 = vpow.bf16.pop %v2247
        %v2250 = vmul.bf16 %v2057, 1069105081
        %v2251 = vpow.bf16.pop %v2250
        %v2253 = vmul.bf16 %v2058, 1069105081
        %v2254 = vpow.bf16.pop %v2253
        %v2256 = vmul.bf16 %v2059, 1069105081
        %v2257 = vpow.bf16.pop %v2256
        %v2259 = vmul.bf16 %v2060, 1069105081
        %v2260 = vpow.bf16.pop %v2259
        %v2262 = vmul.bf16 %v2061, 1069105081
        %v2263 = vpow.bf16.pop %v2262
        %v2265 = vmul.bf16 %v2062, 1069105081
        %v2266 = vpow.bf16.pop %v2265
        %v2268 = vmul.bf16 %v2063, 1069105081
        %v2269 = vpow.bf16.pop %v2268
        %v2271 = vmul.bf16 %v2064, 1069105081
        %v2272 = vpow.bf16.pop %v2271
        %v2274 = vmul.bf16 %v2065, 1069105081
        %v2275 = vpow.bf16.pop %v2274
        %v2277 = vmul.bf16 %v2066, 1069105081
        %v2278 = vpow.bf16.pop %v2277
        %v2280 = vmul.bf16 %v2067, 1069105081
        %v2281 = vpow.bf16.pop %v2280
        %v2283 = vmul.bf16 %v2068, 1069105081
        %v2284 = vpow.bf16.pop %v2283
        %v2286 = vmul.bf16 %v2069, 1069105081
        %v2287 = vpow.bf16.pop %v2286
        %v2289 = vmul.bf16 %v2070, 1069105081
        %v2290 = vpow.bf16.pop %v2289
        %v2292 = vmul.bf16 %v2071, 1069105081
        %v2293 = vpow.bf16.pop %v2292
        %v2295 = vmul.bf16 %v2072, 1069105081
        %v2296 = vpow.bf16.pop %v2295
        %v2298 = vmul.bf16 %v2073, 1069105081
        %v2299 = vpow.bf16.pop %v2298
        %v2301 = vmul.bf16 %v2074, 1069105081
        %v2302 = vpow.bf16.pop %v2301
        %v2304 = vmul.bf16 %v2075, 1069105081
        %v2305 = vpow.bf16.pop %v2304
        %v2307 = vmul.bf16 %v2076, 1069105081
        %v2308 = vpow.bf16.pop %v2307
        %v2310 = vmul.bf16 %v2077, 1069105081
        %v2311 = vpow.bf16.pop %v2310
        %v2313 = vmul.bf16 %v2078, 1069105081
        %v2314 = vpow.bf16.pop %v2313
        %v2316 = vmul.bf16 %v2079, 1069105081
        %v2317 = vpow.bf16.pop %v2316
        %v2319 = vmul.bf16 %v2080, 1069105081
        %v2320 = vpow.bf16.pop %v2319
        %v2321 = vadd.bf16 %v2083, 1065369472
        %v2322 = vadd.bf16 %v2086, 1065369472
        %v2323 = vadd.bf16 %v2089, 1065369472
        %v2324 = vadd.bf16 %v2092, 1065369472
        %v2325 = vadd.bf16 %v2095, 1065369472
        %v2326 = vadd.bf16 %v2098, 1065369472
        %v2327 = vadd.bf16 %v2101, 1065369472
        %v2328 = vadd.bf16 %v2104, 1065369472
        %v2329 = vadd.bf16 %v2107, 1065369472
        %v2330 = vadd.bf16 %v2110, 1065369472
        %v2331 = vadd.bf16 %v2113, 1065369472
        %v2332 = vadd.bf16 %v2116, 1065369472
        %v2333 = vadd.bf16 %v2119, 1065369472
        %v2334 = vadd.bf16 %v2122, 1065369472
        %v2335 = vadd.bf16 %v2125, 1065369472
        %v2336 = vadd.bf16 %v2128, 1065369472
        %v2337 = vadd.bf16 %v2131, 1065369472
        %v2338 = vadd.bf16 %v2134, 1065369472
        %v2339 = vadd.bf16 %v2137, 1065369472
        %v2340 = vadd.bf16 %v2140, 1065369472
        %v2341 = vadd.bf16 %v2143, 1065369472
        %v2342 = vadd.bf16 %v2146, 1065369472
        %v2343 = vadd.bf16 %v2149, 1065369472
        %v2344 = vadd.bf16 %v2152, 1065369472
        %v2345 = vadd.bf16 %v2155, 1065369472
        %v2346 = vadd.bf16 %v2158, 1065369472
        %v2347 = vadd.bf16 %v2161, 1065369472
        %v2348 = vadd.bf16 %v2164, 1065369472
        %v2349 = vadd.bf16 %v2167, 1065369472
        %v2350 = vadd.bf16 %v2170, 1065369472
        %v2351 = vadd.bf16 %v2173, 1065369472
        %v2352 = vadd.bf16 %v2176, 1065369472
        %v2353 = vadd.bf16 %v2179, 1065369472
        %v2354 = vadd.bf16 %v2182, 1065369472
        %v2355 = vadd.bf16 %v2185, 1065369472
        %v2356 = vadd.bf16 %v2188, 1065369472
        %v2357 = vadd.bf16 %v2191, 1065369472
        %v2358 = vadd.bf16 %v2194, 1065369472
        %v2359 = vadd.bf16 %v2197, 1065369472
        %v2360 = vadd.bf16 %v2200, 1065369472
        %v2361 = vadd.bf16 %v2203, 1065369472
        %v2362 = vadd.bf16 %v2206, 1065369472
        %v2363 = vadd.bf16 %v2209, 1065369472
        %v2364 = vadd.bf16 %v2212, 1065369472
        %v2365 = vadd.bf16 %v2215, 1065369472
        %v2366 = vadd.bf16 %v2218, 1065369472
        %v2367 = vadd.bf16 %v2221, 1065369472
        %v2368 = vadd.bf16 %v2224, 1065369472
        %v2369 = vadd.bf16 %v2227, 1065369472
        %v2370 = vadd.bf16 %v2230, 1065369472
        %v2371 = vadd.bf16 %v2233, 1065369472
        %v2372 = vadd.bf16 %v2236, 1065369472
        %v2373 = vadd.bf16 %v2239, 1065369472
        %v2374 = vadd.bf16 %v2242, 1065369472
        %v2375 = vadd.bf16 %v2245, 1065369472
        %v2376 = vadd.bf16 %v2248, 1065369472
        %v2377 = vadd.bf16 %v2251, 1065369472
        %v2378 = vadd.bf16 %v2254, 1065369472
        %v2379 = vadd.bf16 %v2257, 1065369472
        %v2380 = vadd.bf16 %v2260, 1065369472
        %v2381 = vadd.bf16 %v2263, 1065369472
        %v2382 = vadd.bf16 %v2266, 1065369472
        %v2383 = vadd.bf16 %v2269, 1065369472
        %v2384 = vadd.bf16 %v2272, 1065369472
        %v2385 = vadd.bf16 %v2275, 1065369472
        %v2386 = vadd.bf16 %v2278, 1065369472
        %v2387 = vadd.bf16 %v2281, 1065369472
        %v2388 = vadd.bf16 %v2284, 1065369472
        %v2389 = vadd.bf16 %v2287, 1065369472
        %v2390 = vadd.bf16 %v2290, 1065369472
        %v2391 = vadd.bf16 %v2293, 1065369472
        %v2392 = vadd.bf16 %v2296, 1065369472
        %v2393 = vadd.bf16 %v2299, 1065369472
        %v2394 = vadd.bf16 %v2302, 1065369472
        %v2395 = vadd.bf16 %v2305, 1065369472
        %v2396 = vadd.bf16 %v2308, 1065369472
        %v2397 = vadd.bf16 %v2311, 1065369472
        %v2398 = vadd.bf16 %v2314, 1065369472
        %v2399 = vadd.bf16 %v2317, 1065369472
        %v2400 = vadd.bf16 %v2320, 1065369472
        %v2401 = vrcp.bf16.pop %v2321
        %v2402 = vmul.bf16 1065369472, %v2401
        %v2403 = vrcp.bf16.pop %v2322
        %v2404 = vmul.bf16 1065369472, %v2403
        %v2405 = vrcp.bf16.pop %v2323
        %v2406 = vmul.bf16 1065369472, %v2405
        %v2407 = vrcp.bf16.pop %v2324
        %v2408 = vmul.bf16 1065369472, %v2407
        %v2409 = vrcp.bf16.pop %v2325
        %v2410 = vmul.bf16 1065369472, %v2409
        %v2411 = vrcp.bf16.pop %v2326
        %v2412 = vmul.bf16 1065369472, %v2411
        %v2413 = vrcp.bf16.pop %v2327
        %v2414 = vmul.bf16 1065369472, %v2413
        %v2415 = vrcp.bf16.pop %v2328
        %v2416 = vmul.bf16 1065369472, %v2415
        %v2417 = vrcp.bf16.pop %v2329
        %v2418 = vmul.bf16 1065369472, %v2417
        %v2419 = vrcp.bf16.pop %v2330
        %v2420 = vmul.bf16 1065369472, %v2419
        %v2421 = vrcp.bf16.pop %v2331
        %v2422 = vmul.bf16 1065369472, %v2421
        %v2423 = vrcp.bf16.pop %v2332
        %v2424 = vmul.bf16 1065369472, %v2423
        %v2425 = vrcp.bf16.pop %v2333
        %v2426 = vmul.bf16 1065369472, %v2425
        %v2427 = vrcp.bf16.pop %v2334
        %v2428 = vmul.bf16 1065369472, %v2427
        %v2429 = vrcp.bf16.pop %v2335
        %v2430 = vmul.bf16 1065369472, %v2429
        %v2431 = vrcp.bf16.pop %v2336
        %v2432 = vmul.bf16 1065369472, %v2431
        %v2433 = vrcp.bf16.pop %v2337
        %v2434 = vmul.bf16 1065369472, %v2433
        %v2435 = vrcp.bf16.pop %v2338
        %v2436 = vmul.bf16 1065369472, %v2435
        %v2437 = vrcp.bf16.pop %v2339
        %v2438 = vmul.bf16 1065369472, %v2437
        %v2439 = vrcp.bf16.pop %v2340
        %v2440 = vmul.bf16 1065369472, %v2439
        %v2441 = vrcp.bf16.pop %v2341
        %v2442 = vmul.bf16 1065369472, %v2441
        %v2443 = vrcp.bf16.pop %v2342
        %v2444 = vmul.bf16 1065369472, %v2443
        %v2445 = vrcp.bf16.pop %v2343
        %v2446 = vmul.bf16 1065369472, %v2445
        %v2447 = vrcp.bf16.pop %v2344
        %v2448 = vmul.bf16 1065369472, %v2447
        %v2449 = vrcp.bf16.pop %v2345
        %v2450 = vmul.bf16 1065369472, %v2449
        %v2451 = vrcp.bf16.pop %v2346
        %v2452 = vmul.bf16 1065369472, %v2451
        %v2453 = vrcp.bf16.pop %v2347
        %v2454 = vmul.bf16 1065369472, %v2453
        %v2455 = vrcp.bf16.pop %v2348
        %v2456 = vmul.bf16 1065369472, %v2455
        %v2457 = vrcp.bf16.pop %v2349
        %v2458 = vmul.bf16 1065369472, %v2457
        %v2459 = vrcp.bf16.pop %v2350
        %v2460 = vmul.bf16 1065369472, %v2459
        %v2461 = vrcp.bf16.pop %v2351
        %v2462 = vmul.bf16 1065369472, %v2461
        %v2463 = vrcp.bf16.pop %v2352
        %v2464 = vmul.bf16 1065369472, %v2463
        %v2465 = vrcp.bf16.pop %v2353
        %v2466 = vmul.bf16 1065369472, %v2465
        %v2467 = vrcp.bf16.pop %v2354
        %v2468 = vmul.bf16 1065369472, %v2467
        %v2469 = vrcp.bf16.pop %v2355
        %v2470 = vmul.bf16 1065369472, %v2469
        %v2471 = vrcp.bf16.pop %v2356
        %v2472 = vmul.bf16 1065369472, %v2471
        %v2473 = vrcp.bf16.pop %v2357
        %v2474 = vmul.bf16 1065369472, %v2473
        %v2475 = vrcp.bf16.pop %v2358
        %v2476 = vmul.bf16 1065369472, %v2475
        %v2477 = vrcp.bf16.pop %v2359
        %v2478 = vmul.bf16 1065369472, %v2477
        %v2479 = vrcp.bf16.pop %v2360
        %v2480 = vmul.bf16 1065369472, %v2479
        %v2481 = vrcp.bf16.pop %v2361
        %v2482 = vmul.bf16 1065369472, %v2481
        %v2483 = vrcp.bf16.pop %v2362
        %v2484 = vmul.bf16 1065369472, %v2483
        %v2485 = vrcp.bf16.pop %v2363
        %v2486 = vmul.bf16 1065369472, %v2485
        %v2487 = vrcp.bf16.pop %v2364
        %v2488 = vmul.bf16 1065369472, %v2487
        %v2489 = vrcp.bf16.pop %v2365
        %v2490 = vmul.bf16 1065369472, %v2489
        %v2491 = vrcp.bf16.pop %v2366
        %v2492 = vmul.bf16 1065369472, %v2491
        %v2493 = vrcp.bf16.pop %v2367
        %v2494 = vmul.bf16 1065369472, %v2493
        %v2495 = vrcp.bf16.pop %v2368
        %v2496 = vmul.bf16 1065369472, %v2495
        %v2497 = vrcp.bf16.pop %v2369
        %v2498 = vmul.bf16 1065369472, %v2497
        %v2499 = vrcp.bf16.pop %v2370
        %v2500 = vmul.bf16 1065369472, %v2499
        %v2501 = vrcp.bf16.pop %v2371
        %v2502 = vmul.bf16 1065369472, %v2501
        %v2503 = vrcp.bf16.pop %v2372
        %v2504 = vmul.bf16 1065369472, %v2503
        %v2505 = vrcp.bf16.pop %v2373
        %v2506 = vmul.bf16 1065369472, %v2505
        %v2507 = vrcp.bf16.pop %v2374
        %v2508 = vmul.bf16 1065369472, %v2507
        %v2509 = vrcp.bf16.pop %v2375
        %v2510 = vmul.bf16 1065369472, %v2509
        %v2511 = vrcp.bf16.pop %v2376
        %v2512 = vmul.bf16 1065369472, %v2511
        %v2513 = vrcp.bf16.pop %v2377
        %v2514 = vmul.bf16 1065369472, %v2513
        %v2515 = vrcp.bf16.pop %v2378
        %v2516 = vmul.bf16 1065369472, %v2515
        %v2517 = vrcp.bf16.pop %v2379
        %v2518 = vmul.bf16 1065369472, %v2517
        %v2519 = vrcp.bf16.pop %v2380
        %v2520 = vmul.bf16 1065369472, %v2519
        %v2521 = vrcp.bf16.pop %v2381
        %v2522 = vmul.bf16 1065369472, %v2521
        %v2523 = vrcp.bf16.pop %v2382
        %v2524 = vmul.bf16 1065369472, %v2523
        %v2525 = vrcp.bf16.pop %v2383
        %v2526 = vmul.bf16 1065369472, %v2525
        %v2527 = vrcp.bf16.pop %v2384
        %v2528 = vmul.bf16 1065369472, %v2527
        %v2529 = vrcp.bf16.pop %v2385
        %v2530 = vmul.bf16 1065369472, %v2529
        %v2531 = vrcp.bf16.pop %v2386
        %v2532 = vmul.bf16 1065369472, %v2531
        %v2533 = vrcp.bf16.pop %v2387
        %v2534 = vmul.bf16 1065369472, %v2533
        %v2535 = vrcp.bf16.pop %v2388
        %v2536 = vmul.bf16 1065369472, %v2535
        %v2537 = vrcp.bf16.pop %v2389
        %v2538 = vmul.bf16 1065369472, %v2537
        %v2539 = vrcp.bf16.pop %v2390
        %v2540 = vmul.bf16 1065369472, %v2539
        %v2541 = vrcp.bf16.pop %v2391
        %v2542 = vmul.bf16 1065369472, %v2541
        %v2543 = vrcp.bf16.pop %v2392
        %v2544 = vmul.bf16 1065369472, %v2543
        %v2545 = vrcp.bf16.pop %v2393
        %v2546 = vmul.bf16 1065369472, %v2545
        %v2547 = vrcp.bf16.pop %v2394
        %v2548 = vmul.bf16 1065369472, %v2547
        %v2549 = vrcp.bf16.pop %v2395
        %v2550 = vmul.bf16 1065369472, %v2549
        %v2551 = vrcp.bf16.pop %v2396
        %v2552 = vmul.bf16 1065369472, %v2551
        %v2553 = vrcp.bf16.pop %v2397
        %v2554 = vmul.bf16 1065369472, %v2553
        %v2555 = vrcp.bf16.pop %v2398
        %v2556 = vmul.bf16 1065369472, %v2555
        %v2557 = vrcp.bf16.pop %v2399
        %v2558 = vmul.bf16 1065369472, %v2557
        %v2559 = vrcp.bf16.pop %v2400
        %v2560 = vmul.bf16 1065369472, %v2559
        %v2561 = vmul.bf16 %v1921, %v2402
        %v2562 = vmul.bf16 %v1922, %v2404
        %v2563 = vmul.bf16 %v1923, %v2406
        %v2564 = vmul.bf16 %v1924, %v2408
        %v2565 = vmul.bf16 %v1925, %v2410
        %v2566 = vmul.bf16 %v1926, %v2412
        %v2567 = vmul.bf16 %v1927, %v2414
        %v2568 = vmul.bf16 %v1928, %v2416
        %v2569 = vmul.bf16 %v1929, %v2418
        %v2570 = vmul.bf16 %v1930, %v2420
        %v2571 = vmul.bf16 %v1931, %v2422
        %v2572 = vmul.bf16 %v1932, %v2424
        %v2573 = vmul.bf16 %v1933, %v2426
        %v2574 = vmul.bf16 %v1934, %v2428
        %v2575 = vmul.bf16 %v1935, %v2430
        %v2576 = vmul.bf16 %v1936, %v2432
        %v2577 = vmul.bf16 %v1937, %v2434
        %v2578 = vmul.bf16 %v1938, %v2436
        %v2579 = vmul.bf16 %v1939, %v2438
        %v2580 = vmul.bf16 %v1940, %v2440
        %v2581 = vmul.bf16 %v1941, %v2442
        %v2582 = vmul.bf16 %v1942, %v2444
        %v2583 = vmul.bf16 %v1943, %v2446
        %v2584 = vmul.bf16 %v1944, %v2448
        %v2585 = vmul.bf16 %v1945, %v2450
        %v2586 = vmul.bf16 %v1946, %v2452
        %v2587 = vmul.bf16 %v1947, %v2454
        %v2588 = vmul.bf16 %v1948, %v2456
        %v2589 = vmul.bf16 %v1949, %v2458
        %v2590 = vmul.bf16 %v1950, %v2460
        %v2591 = vmul.bf16 %v1951, %v2462
        %v2592 = vmul.bf16 %v1952, %v2464
        %v2593 = vmul.bf16 %v1953, %v2466
        %v2594 = vmul.bf16 %v1954, %v2468
        %v2595 = vmul.bf16 %v1955, %v2470
        %v2596 = vmul.bf16 %v1956, %v2472
        %v2597 = vmul.bf16 %v1957, %v2474
        %v2598 = vmul.bf16 %v1958, %v2476
        %v2599 = vmul.bf16 %v1959, %v2478
        %v2600 = vmul.bf16 %v1960, %v2480
        %v2601 = vmul.bf16 %v1961, %v2482
        %v2602 = vmul.bf16 %v1962, %v2484
        %v2603 = vmul.bf16 %v1963, %v2486
        %v2604 = vmul.bf16 %v1964, %v2488
        %v2605 = vmul.bf16 %v1965, %v2490
        %v2606 = vmul.bf16 %v1966, %v2492
        %v2607 = vmul.bf16 %v1967, %v2494
        %v2608 = vmul.bf16 %v1968, %v2496
        %v2609 = vmul.bf16 %v1969, %v2498
        %v2610 = vmul.bf16 %v1970, %v2500
        %v2611 = vmul.bf16 %v1971, %v2502
        %v2612 = vmul.bf16 %v1972, %v2504
        %v2613 = vmul.bf16 %v1973, %v2506
        %v2614 = vmul.bf16 %v1974, %v2508
        %v2615 = vmul.bf16 %v1975, %v2510
        %v2616 = vmul.bf16 %v1976, %v2512
        %v2617 = vmul.bf16 %v1977, %v2514
        %v2618 = vmul.bf16 %v1978, %v2516
        %v2619 = vmul.bf16 %v1979, %v2518
        %v2620 = vmul.bf16 %v1980, %v2520
        %v2621 = vmul.bf16 %v1981, %v2522
        %v2622 = vmul.bf16 %v1982, %v2524
        %v2623 = vmul.bf16 %v1983, %v2526
        %v2624 = vmul.bf16 %v1984, %v2528
        %v2625 = vmul.bf16 %v1985, %v2530
        %v2626 = vmul.bf16 %v1986, %v2532
        %v2627 = vmul.bf16 %v1987, %v2534
        %v2628 = vmul.bf16 %v1988, %v2536
        %v2629 = vmul.bf16 %v1989, %v2538
        %v2630 = vmul.bf16 %v1990, %v2540
        %v2631 = vmul.bf16 %v1991, %v2542
        %v2632 = vmul.bf16 %v1992, %v2544
        %v2633 = vmul.bf16 %v1993, %v2546
        %v2634 = vmul.bf16 %v1994, %v2548
        %v2635 = vmul.bf16 %v1995, %v2550
        %v2636 = vmul.bf16 %v1996, %v2552
        %v2637 = vmul.bf16 %v1997, %v2554
        %v2638 = vmul.bf16 %v1998, %v2556
        %v2639 = vmul.bf16 %v1999, %v2558
        %v2640 = vmul.bf16 %v2000, %v2560
        %v2641 = vld [vmem:[#allocation2] sm:$0xff]
        %v2642 = vld [vmem:[#allocation2 + $0x8] sm:$0x3]
        %2643 = vmatprep.subr.bf16.mxu0 %v2562
        %2644 = vmatpush1.bf16.msra.mxu0 %v2561
        %2645 = vmatprep.subr.bf16.mxu0 %v2572
        %2646 = vmatpush1.bf16.msra.mxu0 %v2571
        %2647 = vmatprep.subr.bf16.mxu0 %v2582
        %2648 = vmatpush1.bf16.msra.mxu0 %v2581
        %2649 = vmatprep.subr.bf16.mxu0 %v2592
        %2650 = vmatpush1.bf16.msra.mxu0 %v2591
        %2651 = vmatprep.subr.bf16.mxu0 %v2602
        %2652 = vmatpush1.bf16.msra.mxu0 %v2601
        %2653 = vmatprep.subr.bf16.mxu0 %v2612
        %2654 = vmatpush1.bf16.msra.mxu0 %v2611
        %2655 = vmatprep.subr.bf16.mxu0 %v2622
        %2656 = vmatpush1.bf16.msra.mxu0 %v2621
        %2657 = vmatprep.subr.bf16.mxu0 %v2632
        %2658 = vmatpush1.bf16.msra.mxu0 %v2631
        %2659 = vmatprep.subr.bf16.mxu0 0
        %2660 = vmatpush1.bf16.msra.mxu0 0
        %2661 = vmatprep.subr.bf16.mxu0 0
        %2662 = vmatpush1.bf16.msra.mxu0 0
        %2663 = vmatprep.subr.bf16.mxu0 0
        %2664 = vmatpush1.bf16.msra.mxu0 0
        %2665 = vmatprep.subr.bf16.mxu0 0
        %2666 = vmatpush1.bf16.msra.mxu0 0
        %2667 = vmatprep.subr.bf16.mxu0 0
        %2668 = vmatpush1.bf16.msra.mxu0 0
        %2669 = vmatprep.subr.bf16.mxu0 0
        %2670 = vmatpush1.bf16.msra.mxu0 0
        %2671 = vmatprep.subr.bf16.mxu0 0
        %2672 = vmatpush1.bf16.msra.mxu0 0
        %2673 = vmatprep.subr.bf16.mxu0 0
        %2674 = vmatpush1.bf16.msra.mxu0 0
        %2675 = vmatprep.mubr.bf16.mxu0 0
        %2676 = vmatmul.mubr.bf16.gmra.mrb[0].mxu0 1065369472
        %v2677 = vpop.f32.mrb[0].mxu0
        %v2678 = vadd.f32 0.0, %v2677
        %v2679 = vpop.f32.mrb[0].mxu0
        %v2680 = vadd.f32 0.0, %v2679
        %v2681 = vpop.f32.mrb[0].mxu0
        %v2682 = vpop.f32.mrb[0].mxu0
        %2683 = vdwg.mxu0
        %2684 = vmatprep.subr.bf16.mxu0 %v2564
        %2685 = vmatpush1.bf16.msra.mxu0 %v2563
        %2686 = vmatprep.subr.bf16.mxu0 %v2574
        %2687 = vmatpush1.bf16.msra.mxu0 %v2573
        %2688 = vmatprep.subr.bf16.mxu0 %v2584
        %2689 = vmatpush1.bf16.msra.mxu0 %v2583
        %2690 = vmatprep.subr.bf16.mxu0 %v2594
        %2691 = vmatpush1.bf16.msra.mxu0 %v2593
        %2692 = vmatprep.subr.bf16.mxu0 %v2604
        %2693 = vmatpush1.bf16.msra.mxu0 %v2603
        %2694 = vmatprep.subr.bf16.mxu0 %v2614
        %2695 = vmatpush1.bf16.msra.mxu0 %v2613
        %2696 = vmatprep.subr.bf16.mxu0 %v2624
        %2697 = vmatpush1.bf16.msra.mxu0 %v2623
        %2698 = vmatprep.subr.bf16.mxu0 %v2634
        %2699 = vmatpush1.bf16.msra.mxu0 %v2633
        %2700 = vmatprep.subr.bf16.mxu0 0
        %2701 = vmatpush1.bf16.msra.mxu0 0
        %2702 = vmatprep.subr.bf16.mxu0 0
        %2703 = vmatpush1.bf16.msra.mxu0 0
        %2704 = vmatprep.subr.bf16.mxu0 0
        %2705 = vmatpush1.bf16.msra.mxu0 0
        %2706 = vmatprep.subr.bf16.mxu0 0
        %2707 = vmatpush1.bf16.msra.mxu0 0
        %2708 = vmatprep.subr.bf16.mxu0 0
        %2709 = vmatpush1.bf16.msra.mxu0 0
        %2710 = vmatprep.subr.bf16.mxu0 0
        %2711 = vmatpush1.bf16.msra.mxu0 0
        %2712 = vmatprep.subr.bf16.mxu0 0
        %2713 = vmatpush1.bf16.msra.mxu0 0
        %2714 = vmatprep.subr.bf16.mxu0 0
        %2715 = vmatpush1.bf16.msra.mxu0 0
        %2716 = vmatprep.mubr.bf16.mxu0 0
        %2717 = vmatmul.mubr.bf16.gmra.mrb[0].mxu0 1065369472
        %v2718 = vpop.f32.mrb[0].mxu0
        %v2719 = vadd.f32 0.0, %v2718
        %v2720 = vpop.f32.mrb[0].mxu0
        %v2721 = vadd.f32 0.0, %v2720
        %v2722 = vpop.f32.mrb[0].mxu0
        %v2723 = vpop.f32.mrb[0].mxu0
        %2724 = vdwg.mxu0
        %2725 = vmatprep.subr.bf16.mxu0 %v2566
        %2726 = vmatpush1.bf16.msra.mxu0 %v2565
        %2727 = vmatprep.subr.bf16.mxu0 %v2576
        %2728 = vmatpush1.bf16.msra.mxu0 %v2575
        %2729 = vmatprep.subr.bf16.mxu0 %v2586
        %2730 = vmatpush1.bf16.msra.mxu0 %v2585
        %2731 = vmatprep.subr.bf16.mxu0 %v2596
        %2732 = vmatpush1.bf16.msra.mxu0 %v2595
        %2733 = vmatprep.subr.bf16.mxu0 %v2606
        %2734 = vmatpush1.bf16.msra.mxu0 %v2605
        %2735 = vmatprep.subr.bf16.mxu0 %v2616
        %2736 = vmatpush1.bf16.msra.mxu0 %v2615
        %2737 = vmatprep.subr.bf16.mxu0 %v2626
        %2738 = vmatpush1.bf16.msra.mxu0 %v2625
        %2739 = vmatprep.subr.bf16.mxu0 %v2636
        %2740 = vmatpush1.bf16.msra.mxu0 %v2635
        %2741 = vmatprep.subr.bf16.mxu0 0
        %2742 = vmatpush1.bf16.msra.mxu0 0
        %2743 = vmatprep.subr.bf16.mxu0 0
        %2744 = vmatpush1.bf16.msra.mxu0 0
        %2745 = vmatprep.subr.bf16.mxu0 0
        %2746 = vmatpush1.bf16.msra.mxu0 0
        %2747 = vmatprep.subr.bf16.mxu0 0
        %2748 = vmatpush1.bf16.msra.mxu0 0
        %2749 = vmatprep.subr.bf16.mxu0 0
        %2750 = vmatpush1.bf16.msra.mxu0 0
        %2751 = vmatprep.subr.bf16.mxu0 0
        %2752 = vmatpush1.bf16.msra.mxu0 0
        %2753 = vmatprep.subr.bf16.mxu0 0
        %2754 = vmatpush1.bf16.msra.mxu0 0
        %2755 = vmatprep.subr.bf16.mxu0 0
        %2756 = vmatpush1.bf16.msra.mxu0 0
        %2757 = vmatprep.mubr.bf16.mxu0 0
        %2758 = vmatmul.mubr.bf16.gmra.mrb[0].mxu0 1065369472
        %v2759 = vpop.f32.mrb[0].mxu0
        %v2760 = vadd.f32 0.0, %v2759
        %v2761 = vpop.f32.mrb[0].mxu0
        %v2762 = vadd.f32 0.0, %v2761
        %v2763 = vpop.f32.mrb[0].mxu0
        %v2764 = vpop.f32.mrb[0].mxu0
        %2765 = vdwg.mxu0
        %2766 = vmatprep.subr.bf16.mxu0 %v2568
        %2767 = vmatpush1.bf16.msra.mxu0 %v2567
        %2768 = vmatprep.subr.bf16.mxu0 %v2578
        %2769 = vmatpush1.bf16.msra.mxu0 %v2577
        %2770 = vmatprep.subr.bf16.mxu0 %v2588
        %2771 = vmatpush1.bf16.msra.mxu0 %v2587
        %2772 = vmatprep.subr.bf16.mxu0 %v2598
        %2773 = vmatpush1.bf16.msra.mxu0 %v2597
        %2774 = vmatprep.subr.bf16.mxu0 %v2608
        %2775 = vmatpush1.bf16.msra.mxu0 %v2607
        %2776 = vmatprep.subr.bf16.mxu0 %v2618
        %2777 = vmatpush1.bf16.msra.mxu0 %v2617
        %2778 = vmatprep.subr.bf16.mxu0 %v2628
        %2779 = vmatpush1.bf16.msra.mxu0 %v2627
        %2780 = vmatprep.subr.bf16.mxu0 %v2638
        %2781 = vmatpush1.bf16.msra.mxu0 %v2637
        %2782 = vmatprep.subr.bf16.mxu0 0
        %2783 = vmatpush1.bf16.msra.mxu0 0
        %2784 = vmatprep.subr.bf16.mxu0 0
        %2785 = vmatpush1.bf16.msra.mxu0 0
        %2786 = vmatprep.subr.bf16.mxu0 0
        %2787 = vmatpush1.bf16.msra.mxu0 0
        %2788 = vmatprep.subr.bf16.mxu0 0
        %2789 = vmatpush1.bf16.msra.mxu0 0
        %2790 = vmatprep.subr.bf16.mxu0 0
        %2791 = vmatpush1.bf16.msra.mxu0 0
        %2792 = vmatprep.subr.bf16.mxu0 0
        %2793 = vmatpush1.bf16.msra.mxu0 0
        %2794 = vmatprep.subr.bf16.mxu0 0
        %2795 = vmatpush1.bf16.msra.mxu0 0
        %2796 = vmatprep.subr.bf16.mxu0 0
        %2797 = vmatpush1.bf16.msra.mxu0 0
        %2798 = vmatprep.mubr.bf16.mxu0 0
        %2799 = vmatmul.mubr.bf16.gmra.mrb[0].mxu0 1065369472
        %v2800 = vpop.f32.mrb[0].mxu0
        %v2801 = vadd.f32 0.0, %v2800
        %v2802 = vpop.f32.mrb[0].mxu0
        %v2803 = vadd.f32 0.0, %v2802
        %v2804 = vpop.f32.mrb[0].mxu0
        %v2805 = vpop.f32.mrb[0].mxu0
        %2806 = vdwg.mxu0
        %2807 = vmatprep.subr.bf16.mxu0 %v2570
        %2808 = vmatpush1.bf16.msra.mxu0 %v2569
        %2809 = vmatprep.subr.bf16.mxu0 %v2580
        %2810 = vmatpush1.bf16.msra.mxu0 %v2579
        %2811 = vmatprep.subr.bf16.mxu0 %v2590
        %2812 = vmatpush1.bf16.msra.mxu0 %v2589
        %2813 = vmatprep.subr.bf16.mxu0 %v2600
        %2814 = vmatpush1.bf16.msra.mxu0 %v2599
        %2815 = vmatprep.subr.bf16.mxu0 %v2610
        %2816 = vmatpush1.bf16.msra.mxu0 %v2609
        %2817 = vmatprep.subr.bf16.mxu0 %v2620
        %2818 = vmatpush1.bf16.msra.mxu0 %v2619
        %2819 = vmatprep.subr.bf16.mxu0 %v2630
        %2820 = vmatpush1.bf16.msra.mxu0 %v2629
        %2821 = vmatprep.subr.bf16.mxu0 %v2640
        %2822 = vmatpush1.bf16.msra.mxu0 %v2639
        %2823 = vmatprep.subr.bf16.mxu0 0
        %2824 = vmatpush1.bf16.msra.mxu0 0
        %2825 = vmatprep.subr.bf16.mxu0 0
        %2826 = vmatpush1.bf16.msra.mxu0 0
        %2827 = vmatprep.subr.bf16.mxu0 0
        %2828 = vmatpush1.bf16.msra.mxu0 0
        %2829 = vmatprep.subr.bf16.mxu0 0
        %2830 = vmatpush1.bf16.msra.mxu0 0
        %2831 = vmatprep.subr.bf16.mxu0 0
        %2832 = vmatpush1.bf16.msra.mxu0 0
        %2833 = vmatprep.subr.bf16.mxu0 0
        %2834 = vmatpush1.bf16.msra.mxu0 0
        %2835 = vmatprep.subr.bf16.mxu0 0
        %2836 = vmatpush1.bf16.msra.mxu0 0
        %2837 = vmatprep.subr.bf16.mxu0 0
        %2838 = vmatpush1.bf16.msra.mxu0 0
        %2839 = vmatprep.mubr.bf16.mxu0 0
        %2840 = vmatmul.mubr.bf16.gmra.mrb[0].mxu0 1065369472
        %v2841 = vpop.f32.mrb[0].mxu0
        %v2842 = vadd.f32 0.0, %v2841
        %v2843 = vpop.f32.mrb[0].mxu0
        %v2844 = vadd.f32 0.0, %v2843
        %v2845 = vpop.f32.mrb[0].mxu0
        %v2846 = vpop.f32.mrb[0].mxu0
        %2847 = vdwg.mxu0
        %v2858 = vcombine.low %v2678, %v2680
        %v2859 = vcombine.low %v2719, %v2721
        %v2860 = vcombine.low %v2760, %v2762
        %v2861 = vcombine.low %v2801, %v2803
        %v2863 = vunpack.c.l.s4 1966171168
        %v2864 = vunpack.c.0.s8 %v2863
        %v2865 = vlaneseq
        %v2866 = vshrl.u32 %v2865, 7
        %v2867 = vsub.s32 %v2864, %v2866
        %v2868 = vrot.slane %v2858, %v2867
        %v2870 = vunpack.c.l.s4 1966171168
        %v2871 = vunpack.c.0.s8 %v2870
        %v2872 = vlaneseq
        %v2873 = vshrl.u32 %v2872, 7
        %v2874 = vsub.s32 %v2871, %v2873
        %v2875 = vrot.slane %v2859, %v2874
        %v2877 = vunpack.c.l.s4 1966171168
        %v2878 = vunpack.c.0.s8 %v2877
        %v2879 = vlaneseq
        %v2880 = vshrl.u32 %v2879, 7
        %v2881 = vsub.s32 %v2878, %v2880
        %v2882 = vrot.slane %v2860, %v2881
        %v2884 = vunpack.c.l.s4 1966171168
        %v2885 = vunpack.c.0.s8 %v2884
        %v2886 = vlaneseq
        %v2887 = vshrl.u32 %v2886, 7
        %v2888 = vsub.s32 %v2885, %v2887
        %v2889 = vrot.slane %v2861, %v2888
        %v2890 = vcombine.low %v2868, %v2875
        %v2891 = vcombine.low %v2882, %v2889
        %v2893 = vunpack.c.l.s4 1966171168
        %v2894 = vunpack.c.0.s8 %v2893
        %v2895 = vlaneseq
        %v2896 = vshrl.u32 %v2895, 7
        %v2897 = vsub.s32 %v2894, %v2896
        %v2898 = vrot.slane %v2890, %v2897
        %v2900 = vunpack.c.l.s4 1966171168
        %v2901 = vunpack.c.0.s8 %v2900
        %v2902 = vlaneseq
        %v2903 = vshrl.u32 %v2902, 7
        %v2904 = vsub.s32 %v2901, %v2903
        %v2905 = vrot.slane %v2891, %v2904
        %v2906 = vcombine.low %v2898, %v2905
        %v2907 = vcombine.low %v2842, %v2844
        %v2909 = vunpack.c.l.s4 1966171168
        %v2910 = vunpack.c.0.s8 %v2909
        %v2911 = vlaneseq
        %v2912 = vshrl.u32 %v2911, 7
        %v2913 = vsub.s32 %v2910, %v2912
        %v2914 = vrot.slane %v2907, %v2913
        %v2916 = vunpack.c.l.s4 1966171168
        %v2917 = vunpack.c.0.s8 %v2916
        %v2918 = vlaneseq
        %v2919 = vshrl.u32 %v2918, 7
        %v2920 = vsub.s32 %v2917, %v2919
        %v2921 = vrot.slane %v2914, %v2920
        %v2924 = vadd.f32 %v2641, %v2906
        %v2925 = vadd.f32 %v2642, %v2921
        %2926 = vst [vmem:[#allocation2] sm:$0xff] %v2924
        %v2927 = vlaneseq
        %vm2928 = vcmp.ge.s32.totalorder %v2927, 0
        %vm2929 = vcmp.lt.s32.totalorder %v2927, 256
        %vm2930 = vmand %vm2928, %vm2929
        %2931 = vst.msk [vmem:[#allocation2 + $0x8] sm:$0x3] %vm2930, %v2925
        %p2932 = scmp.eq.s32.totalorder %s43, 1
        // Predicated region
        $region129: #{forward.1} parent=71 // pred_check
          %p2933 = pneg %p2932
        $region130: #{forward.1} parent=71 // pred_check_branch
          %2935 = sbr.rel (%p2933) target = $region132
        $region131: #{forward.1} parent=71 // pred_region
          %v2936 = vld [vmem:[#allocation2] sm:$0xff]
          %v2937 = vld [vmem:[#allocation2 + $0x8] sm:$0x3]
          %v2938 = vmul.f32 %v2936, 0.00390625
          %v2939 = vmul.f32 %v2937, 0.00390625
          %v2942 = vlaneseq
          %v2943 = vshrl.u32 %v2942, 7
          %v2944 = vsub.s32 0, %v2943
          %v2945 = vrot.slane %v2938, %v2944
          %v2946 = vlaneseq
          %v2947 = vshrl.u32 %v2946, 7
          %v2948 = vsub.s32 1, %v2947
          %v2949 = vrot.slane %v2938, %v2948
          %v2950 = vlaneseq
          %v2951 = vshrl.u32 %v2950, 7
          %v2952 = vsub.s32 2, %v2951
          %v2953 = vrot.slane %v2938, %v2952
          %v2954 = vlaneseq
          %v2955 = vshrl.u32 %v2954, 7
          %v2956 = vsub.s32 3, %v2955
          %v2957 = vrot.slane %v2938, %v2956
          %v2958 = vlaneseq
          %v2959 = vshrl.u32 %v2958, 7
          %v2960 = vsub.s32 4, %v2959
          %v2961 = vrot.slane %v2938, %v2960
          %v2962 = vlaneseq
          %v2963 = vshrl.u32 %v2962, 7
          %v2964 = vsub.s32 5, %v2963
          %v2965 = vrot.slane %v2938, %v2964
          %v2966 = vlaneseq
          %v2967 = vshrl.u32 %v2966, 7
          %v2968 = vsub.s32 6, %v2967
          %v2969 = vrot.slane %v2938, %v2968
          %v2970 = vlaneseq
          %v2971 = vshrl.u32 %v2970, 7
          %v2972 = vsub.s32 7, %v2971
          %v2973 = vrot.slane %v2938, %v2972
          %v2974 = vlaneseq
          %v2975 = vshrl.u32 %v2974, 7
          %v2976 = vsub.s32 0, %v2975
          %v2977 = vrot.slane %v2939, %v2976
          %v2978 = vlaneseq
          %v2979 = vshrl.u32 %v2978, 7
          %v2980 = vsub.s32 1, %v2979
          %v2981 = vrot.slane %v2939, %v2980
          %v2992 = vpack.c.bf16 %v2945, %v2945
          %v2993 = vpack.c.bf16 %v2949, %v2949
          %v2994 = vpack.c.bf16 %v2953, %v2953
          %v2995 = vpack.c.bf16 %v2957, %v2957
          %v2996 = vpack.c.bf16 %v2961, %v2961
          %v2997 = vpack.c.bf16 %v2965, %v2965
          %v2998 = vpack.c.bf16 %v2969, %v2969
          %v2999 = vpack.c.bf16 %v2973, %v2973
          %v3000 = vpack.c.bf16 %v2977, %v2977
          %v3001 = vpack.c.bf16 %v2981, %v2981
          %v3002 = vld [vmem:[#allocation14] sm:$0xff]
          %v3003 = vld [vmem:[#allocation14 + $0x8] sm:$0xff]
          %v3004 = vld [vmem:[#allocation14 + $0x10] sm:$0xff]
          %v3005 = vld [vmem:[#allocation14 + $0x18] sm:$0xff]
          %v3006 = vld [vmem:[#allocation14 + $0x20] sm:$0xff]
          %v3007 = vld [vmem:[#allocation14 + $0x28] sm:$0xff]
          %v3008 = vld [vmem:[#allocation14 + $0x30] sm:$0xff]
          %v3009 = vld [vmem:[#allocation14 + $0x38] sm:$0xff]
          %v3010 = vld [vmem:[#allocation14 + $0x40] sm:$0xff]
          %v3011 = vld [vmem:[#allocation14 + $0x48] sm:$0xff]
          %v3012 = vld [vmem:[#allocation14 + $0x50] sm:$0xff]
          %v3013 = vld [vmem:[#allocation14 + $0x58] sm:$0xff]
          %v3014 = vld [vmem:[#allocation14 + $0x60] sm:$0xff]
          %v3015 = vld [vmem:[#allocation14 + $0x68] sm:$0xff]
          %v3016 = vld [vmem:[#allocation14 + $0x70] sm:$0xff]
          %v3017 = vld [vmem:[#allocation14 + $0x78] sm:$0xff]
          %v3018 = vld [vmem:[#allocation14 + $0x80] sm:$0xff]
          %v3019 = vld [vmem:[#allocation14 + $0x88] sm:$0xff]
          %v3020 = vld [vmem:[#allocation14 + $0x90] sm:$0xff]
          %v3021 = vld [vmem:[#allocation14 + $0x98] sm:$0xff]
          %v3022 = vld [vmem:[#allocation14 + $0xa0] sm:$0xff]
          %v3023 = vld [vmem:[#allocation14 + $0xa8] sm:$0xff]
          %v3024 = vld [vmem:[#allocation14 + $0xb0] sm:$0xff]
          %v3025 = vld [vmem:[#allocation14 + $0xb8] sm:$0xff]
          %v3026 = vld [vmem:[#allocation14 + $0xc0] sm:$0xff]
          %v3027 = vld [vmem:[#allocation14 + $0xc8] sm:$0xff]
          %v3028 = vld [vmem:[#allocation14 + $0xd0] sm:$0xff]
          %v3029 = vld [vmem:[#allocation14 + $0xd8] sm:$0xff]
          %v3030 = vld [vmem:[#allocation14 + $0xe0] sm:$0xff]
          %v3031 = vld [vmem:[#allocation14 + $0xe8] sm:$0xff]
          %v3032 = vld [vmem:[#allocation14 + $0xf0] sm:$0xff]
          %v3033 = vld [vmem:[#allocation14 + $0xf8] sm:$0xff]
          %v3034 = vld [vmem:[#allocation14 + $0x100] sm:$0xff]
          %v3035 = vld [vmem:[#allocation14 + $0x108] sm:$0xff]
          %v3036 = vld [vmem:[#allocation14 + $0x110] sm:$0xff]
          %v3037 = vld [vmem:[#allocation14 + $0x118] sm:$0xff]
          %v3038 = vld [vmem:[#allocation14 + $0x120] sm:$0xff]
          %v3039 = vld [vmem:[#allocation14 + $0x128] sm:$0xff]
          %v3040 = vld [vmem:[#allocation14 + $0x130] sm:$0xff]
          %v3041 = vld [vmem:[#allocation14 + $0x138] sm:$0xff]
          %v3042 = vld [vmem:[#allocation14 + $0x140] sm:$0xff]
          %v3043 = vld [vmem:[#allocation14 + $0x148] sm:$0xff]
          %v3044 = vld [vmem:[#allocation14 + $0x150] sm:$0xff]
          %v3045 = vld [vmem:[#allocation14 + $0x158] sm:$0xff]
          %v3046 = vld [vmem:[#allocation14 + $0x160] sm:$0xff]
          %v3047 = vld [vmem:[#allocation14 + $0x168] sm:$0xff]
          %v3048 = vld [vmem:[#allocation14 + $0x170] sm:$0xff]
          %v3049 = vld [vmem:[#allocation14 + $0x178] sm:$0xff]
          %v3050 = vld [vmem:[#allocation14 + $0x180] sm:$0xff]
          %v3051 = vld [vmem:[#allocation14 + $0x188] sm:$0xff]
          %v3052 = vld [vmem:[#allocation14 + $0x190] sm:$0xff]
          %v3053 = vld [vmem:[#allocation14 + $0x198] sm:$0xff]
          %v3054 = vld [vmem:[#allocation14 + $0x1a0] sm:$0xff]
          %v3055 = vld [vmem:[#allocation14 + $0x1a8] sm:$0xff]
          %v3056 = vld [vmem:[#allocation14 + $0x1b0] sm:$0xff]
          %v3057 = vld [vmem:[#allocation14 + $0x1b8] sm:$0xff]
          %v3058 = vld [vmem:[#allocation14 + $0x1c0] sm:$0xff]
          %v3059 = vld [vmem:[#allocation14 + $0x1c8] sm:$0xff]
          %v3060 = vld [vmem:[#allocation14 + $0x1d0] sm:$0xff]
          %v3061 = vld [vmem:[#allocation14 + $0x1d8] sm:$0xff]
          %v3062 = vld [vmem:[#allocation14 + $0x1e0] sm:$0xff]
          %v3063 = vld [vmem:[#allocation14 + $0x1e8] sm:$0xff]
          %v3064 = vld [vmem:[#allocation14 + $0x1f0] sm:$0xff]
          %v3065 = vld [vmem:[#allocation14 + $0x1f8] sm:$0xff]
          %v3066 = vld [vmem:[#allocation14 + $0x200] sm:$0xff]
          %v3067 = vld [vmem:[#allocation14 + $0x208] sm:$0xff]
          %v3068 = vld [vmem:[#allocation14 + $0x210] sm:$0xff]
          %v3069 = vld [vmem:[#allocation14 + $0x218] sm:$0xff]
          %v3070 = vld [vmem:[#allocation14 + $0x220] sm:$0xff]
          %v3071 = vld [vmem:[#allocation14 + $0x228] sm:$0xff]
          %v3072 = vld [vmem:[#allocation14 + $0x230] sm:$0xff]
          %v3073 = vld [vmem:[#allocation14 + $0x238] sm:$0xff]
          %v3074 = vld [vmem:[#allocation14 + $0x240] sm:$0xff]
          %v3075 = vld [vmem:[#allocation14 + $0x248] sm:$0xff]
          %v3076 = vld [vmem:[#allocation14 + $0x250] sm:$0xff]
          %v3077 = vld [vmem:[#allocation14 + $0x258] sm:$0xff]
          %v3078 = vld [vmem:[#allocation14 + $0x260] sm:$0xff]
          %v3079 = vld [vmem:[#allocation14 + $0x268] sm:$0xff]
          %v3080 = vld [vmem:[#allocation14 + $0x270] sm:$0xff]
          %v3081 = vld [vmem:[#allocation14 + $0x278] sm:$0xff]
          %v3082 = vld [vmem:[#allocation14 + $0x280] sm:$0xff]
          %v3083 = vld [vmem:[#allocation14 + $0x288] sm:$0xff]
          %v3084 = vld [vmem:[#allocation14 + $0x290] sm:$0xff]
          %v3085 = vld [vmem:[#allocation14 + $0x298] sm:$0xff]
          %v3086 = vld [vmem:[#allocation14 + $0x2a0] sm:$0xff]
          %v3087 = vld [vmem:[#allocation14 + $0x2a8] sm:$0xff]
          %v3088 = vld [vmem:[#allocation14 + $0x2b0] sm:$0xff]
          %v3089 = vld [vmem:[#allocation14 + $0x2b8] sm:$0xff]
          %v3090 = vld [vmem:[#allocation14 + $0x2c0] sm:$0xff]
          %v3091 = vld [vmem:[#allocation14 + $0x2c8] sm:$0xff]
          %v3092 = vld [vmem:[#allocation14 + $0x2d0] sm:$0xff]
          %v3093 = vld [vmem:[#allocation14 + $0x2d8] sm:$0xff]
          %v3094 = vld [vmem:[#allocation14 + $0x2e0] sm:$0xff]
          %v3095 = vld [vmem:[#allocation14 + $0x2e8] sm:$0xff]
          %v3096 = vld [vmem:[#allocation14 + $0x2f0] sm:$0xff]
          %v3097 = vld [vmem:[#allocation14 + $0x2f8] sm:$0xff]
          %v3098 = vld [vmem:[#allocation14 + $0x300] sm:$0xff]
          %v3099 = vld [vmem:[#allocation14 + $0x308] sm:$0xff]
          %v3100 = vld [vmem:[#allocation14 + $0x310] sm:$0xff]
          %v3101 = vld [vmem:[#allocation14 + $0x318] sm:$0xff]
          %v3102 = vld [vmem:[#allocation14 + $0x320] sm:$0xff]
          %v3103 = vld [vmem:[#allocation14 + $0x328] sm:$0xff]
          %v3104 = vld [vmem:[#allocation14 + $0x330] sm:$0xff]
          %v3105 = vld [vmem:[#allocation14 + $0x338] sm:$0xff]
          %v3106 = vld [vmem:[#allocation14 + $0x340] sm:$0xff]
          %v3107 = vld [vmem:[#allocation14 + $0x348] sm:$0xff]
          %v3108 = vld [vmem:[#allocation14 + $0x350] sm:$0xff]
          %v3109 = vld [vmem:[#allocation14 + $0x358] sm:$0xff]
          %v3110 = vld [vmem:[#allocation14 + $0x360] sm:$0xff]
          %v3111 = vld [vmem:[#allocation14 + $0x368] sm:$0xff]
          %v3112 = vld [vmem:[#allocation14 + $0x370] sm:$0xff]
          %v3113 = vld [vmem:[#allocation14 + $0x378] sm:$0xff]
          %v3114 = vld [vmem:[#allocation14 + $0x380] sm:$0xff]
          %v3115 = vld [vmem:[#allocation14 + $0x388] sm:$0xff]
          %v3116 = vld [vmem:[#allocation14 + $0x390] sm:$0xff]
          %v3117 = vld [vmem:[#allocation14 + $0x398] sm:$0xff]
          %v3118 = vld [vmem:[#allocation14 + $0x3a0] sm:$0xff]
          %v3119 = vld [vmem:[#allocation14 + $0x3a8] sm:$0xff]
          %v3120 = vld [vmem:[#allocation14 + $0x3b0] sm:$0xff]
          %v3121 = vld [vmem:[#allocation14 + $0x3b8] sm:$0xff]
          %v3122 = vld [vmem:[#allocation14 + $0x3c0] sm:$0xff]
          %v3123 = vld [vmem:[#allocation14 + $0x3c8] sm:$0xff]
          %v3124 = vld [vmem:[#allocation14 + $0x3d0] sm:$0xff]
          %v3125 = vld [vmem:[#allocation14 + $0x3d8] sm:$0xff]
          %v3126 = vld [vmem:[#allocation14 + $0x3e0] sm:$0xff]
          %v3127 = vld [vmem:[#allocation14 + $0x3e8] sm:$0xff]
          %v3128 = vld [vmem:[#allocation14 + $0x3f0] sm:$0xff]
          %v3129 = vld [vmem:[#allocation14 + $0x3f8] sm:$0xff]
          %v3130 = vld [vmem:[#allocation14 + $0x400] sm:$0xff]
          %v3131 = vld [vmem:[#allocation14 + $0x408] sm:$0xff]
          %v3132 = vld [vmem:[#allocation14 + $0x410] sm:$0xff]
          %v3133 = vld [vmem:[#allocation14 + $0x418] sm:$0xff]
          %v3134 = vld [vmem:[#allocation14 + $0x420] sm:$0xff]
          %v3135 = vld [vmem:[#allocation14 + $0x428] sm:$0xff]
          %v3136 = vld [vmem:[#allocation14 + $0x430] sm:$0xff]
          %v3137 = vld [vmem:[#allocation14 + $0x438] sm:$0xff]
          %v3138 = vld [vmem:[#allocation14 + $0x440] sm:$0xff]
          %v3139 = vld [vmem:[#allocation14 + $0x448] sm:$0xff]
          %v3140 = vld [vmem:[#allocation14 + $0x450] sm:$0xff]
          %v3141 = vld [vmem:[#allocation14 + $0x458] sm:$0xff]
          %v3142 = vld [vmem:[#allocation14 + $0x460] sm:$0xff]
          %v3143 = vld [vmem:[#allocation14 + $0x468] sm:$0xff]
          %v3144 = vld [vmem:[#allocation14 + $0x470] sm:$0xff]
          %v3145 = vld [vmem:[#allocation14 + $0x478] sm:$0xff]
          %v3146 = vld [vmem:[#allocation14 + $0x480] sm:$0xff]
          %v3147 = vld [vmem:[#allocation14 + $0x488] sm:$0xff]
          %v3148 = vld [vmem:[#allocation14 + $0x490] sm:$0xff]
          %v3149 = vld [vmem:[#allocation14 + $0x498] sm:$0xff]
          %v3150 = vld [vmem:[#allocation14 + $0x4a0] sm:$0xff]
          %v3151 = vld [vmem:[#allocation14 + $0x4a8] sm:$0xff]
          %v3152 = vld [vmem:[#allocation14 + $0x4b0] sm:$0xff]
          %v3153 = vld [vmem:[#allocation14 + $0x4b8] sm:$0xff]
          %v3154 = vld [vmem:[#allocation14 + $0x4c0] sm:$0xff]
          %v3155 = vld [vmem:[#allocation14 + $0x4c8] sm:$0xff]
          %v3156 = vld [vmem:[#allocation14 + $0x4d0] sm:$0xff]
          %v3157 = vld [vmem:[#allocation14 + $0x4d8] sm:$0xff]
          %v3158 = vld [vmem:[#allocation14 + $0x4e0] sm:$0xff]
          %v3159 = vld [vmem:[#allocation14 + $0x4e8] sm:$0xff]
          %v3160 = vld [vmem:[#allocation14 + $0x4f0] sm:$0xff]
          %v3161 = vld [vmem:[#allocation14 + $0x4f8] sm:$0xff]
          %v3162 = vld [vmem:[#allocation14 + $0x500] sm:$0xff]
          %v3163 = vld [vmem:[#allocation14 + $0x508] sm:$0xff]
          %v3164 = vld [vmem:[#allocation14 + $0x510] sm:$0xff]
          %v3165 = vld [vmem:[#allocation14 + $0x518] sm:$0xff]
          %v3166 = vld [vmem:[#allocation14 + $0x520] sm:$0xff]
          %v3167 = vld [vmem:[#allocation14 + $0x528] sm:$0xff]
          %v3168 = vld [vmem:[#allocation14 + $0x530] sm:$0xff]
          %v3169 = vld [vmem:[#allocation14 + $0x538] sm:$0xff]
          %v3170 = vld [vmem:[#allocation14 + $0x540] sm:$0xff]
          %v3171 = vld [vmem:[#allocation14 + $0x548] sm:$0xff]
          %v3172 = vld [vmem:[#allocation14 + $0x550] sm:$0xff]
          %v3173 = vld [vmem:[#allocation14 + $0x558] sm:$0xff]
          %v3174 = vld [vmem:[#allocation14 + $0x560] sm:$0xff]
          %v3175 = vld [vmem:[#allocation14 + $0x568] sm:$0xff]
          %v3176 = vld [vmem:[#allocation14 + $0x570] sm:$0xff]
          %v3177 = vld [vmem:[#allocation14 + $0x578] sm:$0xff]
          %v3178 = vld [vmem:[#allocation14 + $0x580] sm:$0xff]
          %v3179 = vld [vmem:[#allocation14 + $0x588] sm:$0xff]
          %v3180 = vld [vmem:[#allocation14 + $0x590] sm:$0xff]
          %v3181 = vld [vmem:[#allocation14 + $0x598] sm:$0xff]
          %v3182 = vld [vmem:[#allocation14 + $0x5a0] sm:$0xff]
          %v3183 = vld [vmem:[#allocation14 + $0x5a8] sm:$0xff]
          %v3184 = vld [vmem:[#allocation14 + $0x5b0] sm:$0xff]
          %v3185 = vld [vmem:[#allocation14 + $0x5b8] sm:$0xff]
          %v3186 = vld [vmem:[#allocation14 + $0x5c0] sm:$0xff]
          %v3187 = vld [vmem:[#allocation14 + $0x5c8] sm:$0xff]
          %v3188 = vld [vmem:[#allocation14 + $0x5d0] sm:$0xff]
          %v3189 = vld [vmem:[#allocation14 + $0x5d8] sm:$0xff]
          %v3190 = vld [vmem:[#allocation14 + $0x5e0] sm:$0xff]
          %v3191 = vld [vmem:[#allocation14 + $0x5e8] sm:$0xff]
          %v3192 = vld [vmem:[#allocation14 + $0x5f0] sm:$0xff]
          %v3193 = vld [vmem:[#allocation14 + $0x5f8] sm:$0xff]
          %v3194 = vld [vmem:[#allocation14 + $0x600] sm:$0xff]
          %v3195 = vld [vmem:[#allocation14 + $0x608] sm:$0xff]
          %v3196 = vld [vmem:[#allocation14 + $0x610] sm:$0xff]
          %v3197 = vld [vmem:[#allocation14 + $0x618] sm:$0xff]
          %v3198 = vld [vmem:[#allocation14 + $0x620] sm:$0xff]
          %v3199 = vld [vmem:[#allocation14 + $0x628] sm:$0xff]
          %v3200 = vld [vmem:[#allocation14 + $0x630] sm:$0xff]
          %v3201 = vld [vmem:[#allocation14 + $0x638] sm:$0xff]
          %v3202 = vld [vmem:[#allocation14 + $0x640] sm:$0xff]
          %v3203 = vld [vmem:[#allocation14 + $0x648] sm:$0xff]
          %v3204 = vld [vmem:[#allocation14 + $0x650] sm:$0xff]
          %v3205 = vld [vmem:[#allocation14 + $0x658] sm:$0xff]
          %v3206 = vld [vmem:[#allocation14 + $0x660] sm:$0xff]
          %v3207 = vld [vmem:[#allocation14 + $0x668] sm:$0xff]
          %v3208 = vld [vmem:[#allocation14 + $0x670] sm:$0xff]
          %v3209 = vld [vmem:[#allocation14 + $0x678] sm:$0xff]
          %v3210 = vld [vmem:[#allocation14 + $0x680] sm:$0xff]
          %v3211 = vld [vmem:[#allocation14 + $0x688] sm:$0xff]
          %v3212 = vld [vmem:[#allocation14 + $0x690] sm:$0xff]
          %v3213 = vld [vmem:[#allocation14 + $0x698] sm:$0xff]
          %v3214 = vld [vmem:[#allocation14 + $0x6a0] sm:$0xff]
          %v3215 = vld [vmem:[#allocation14 + $0x6a8] sm:$0xff]
          %v3216 = vld [vmem:[#allocation14 + $0x6b0] sm:$0xff]
          %v3217 = vld [vmem:[#allocation14 + $0x6b8] sm:$0xff]
          %v3218 = vld [vmem:[#allocation14 + $0x6c0] sm:$0xff]
          %v3219 = vld [vmem:[#allocation14 + $0x6c8] sm:$0xff]
          %v3220 = vld [vmem:[#allocation14 + $0x6d0] sm:$0xff]
          %v3221 = vld [vmem:[#allocation14 + $0x6d8] sm:$0xff]
          %v3222 = vld [vmem:[#allocation14 + $0x6e0] sm:$0xff]
          %v3223 = vld [vmem:[#allocation14 + $0x6e8] sm:$0xff]
          %v3224 = vld [vmem:[#allocation14 + $0x6f0] sm:$0xff]
          %v3225 = vld [vmem:[#allocation14 + $0x6f8] sm:$0xff]
          %v3226 = vld [vmem:[#allocation14 + $0x700] sm:$0xff]
          %v3227 = vld [vmem:[#allocation14 + $0x708] sm:$0xff]
          %v3228 = vld [vmem:[#allocation14 + $0x710] sm:$0xff]
          %v3229 = vld [vmem:[#allocation14 + $0x718] sm:$0xff]
          %v3230 = vld [vmem:[#allocation14 + $0x720] sm:$0xff]
          %v3231 = vld [vmem:[#allocation14 + $0x728] sm:$0xff]
          %v3232 = vld [vmem:[#allocation14 + $0x730] sm:$0xff]
          %v3233 = vld [vmem:[#allocation14 + $0x738] sm:$0xff]
          %v3234 = vld [vmem:[#allocation14 + $0x740] sm:$0xff]
          %v3235 = vld [vmem:[#allocation14 + $0x748] sm:$0xff]
          %v3236 = vld [vmem:[#allocation14 + $0x750] sm:$0xff]
          %v3237 = vld [vmem:[#allocation14 + $0x758] sm:$0xff]
          %v3238 = vld [vmem:[#allocation14 + $0x760] sm:$0xff]
          %v3239 = vld [vmem:[#allocation14 + $0x768] sm:$0xff]
          %v3240 = vld [vmem:[#allocation14 + $0x770] sm:$0xff]
          %v3241 = vld [vmem:[#allocation14 + $0x778] sm:$0xff]
          %v3242 = vld [vmem:[#allocation14 + $0x780] sm:$0xff]
          %v3243 = vld [vmem:[#allocation14 + $0x788] sm:$0xff]
          %v3244 = vld [vmem:[#allocation14 + $0x790] sm:$0xff]
          %v3245 = vld [vmem:[#allocation14 + $0x798] sm:$0xff]
          %v3246 = vld [vmem:[#allocation14 + $0x7a0] sm:$0xff]
          %v3247 = vld [vmem:[#allocation14 + $0x7a8] sm:$0xff]
          %v3248 = vld [vmem:[#allocation14 + $0x7b0] sm:$0xff]
          %v3249 = vld [vmem:[#allocation14 + $0x7b8] sm:$0xff]
          %v3250 = vld [vmem:[#allocation14 + $0x7c0] sm:$0xff]
          %v3251 = vld [vmem:[#allocation14 + $0x7c8] sm:$0xff]
          %v3252 = vld [vmem:[#allocation14 + $0x7d0] sm:$0xff]
          %v3253 = vld [vmem:[#allocation14 + $0x7d8] sm:$0xff]
          %v3254 = vld [vmem:[#allocation14 + $0x7e0] sm:$0xff]
          %v3255 = vld [vmem:[#allocation14 + $0x7e8] sm:$0xff]
          %v3256 = vld [vmem:[#allocation14 + $0x7f0] sm:$0xff]
          %v3257 = vld [vmem:[#allocation14 + $0x7f8] sm:$0xff]
          %v3258 = vld [vmem:[#allocation14 + $0x800] sm:$0xff]
          %v3259 = vld [vmem:[#allocation14 + $0x808] sm:$0xff]
          %v3260 = vld [vmem:[#allocation14 + $0x810] sm:$0xff]
          %v3261 = vld [vmem:[#allocation14 + $0x818] sm:$0xff]
          %v3262 = vld [vmem:[#allocation14 + $0x820] sm:$0xff]
          %v3263 = vld [vmem:[#allocation14 + $0x828] sm:$0xff]
          %v3264 = vld [vmem:[#allocation14 + $0x830] sm:$0xff]
          %v3265 = vld [vmem:[#allocation14 + $0x838] sm:$0xff]
          %v3266 = vld [vmem:[#allocation14 + $0x840] sm:$0xff]
          %v3267 = vld [vmem:[#allocation14 + $0x848] sm:$0xff]
          %v3268 = vld [vmem:[#allocation14 + $0x850] sm:$0xff]
          %v3269 = vld [vmem:[#allocation14 + $0x858] sm:$0xff]
          %v3270 = vld [vmem:[#allocation14 + $0x860] sm:$0xff]
          %v3271 = vld [vmem:[#allocation14 + $0x868] sm:$0xff]
          %v3272 = vld [vmem:[#allocation14 + $0x870] sm:$0xff]
          %v3273 = vld [vmem:[#allocation14 + $0x878] sm:$0xff]
          %v3274 = vld [vmem:[#allocation14 + $0x880] sm:$0xff]
          %v3275 = vld [vmem:[#allocation14 + $0x888] sm:$0xff]
          %v3276 = vld [vmem:[#allocation14 + $0x890] sm:$0xff]
          %v3277 = vld [vmem:[#allocation14 + $0x898] sm:$0xff]
          %v3278 = vld [vmem:[#allocation14 + $0x8a0] sm:$0xff]
          %v3279 = vld [vmem:[#allocation14 + $0x8a8] sm:$0xff]
          %v3280 = vld [vmem:[#allocation14 + $0x8b0] sm:$0xff]
          %v3281 = vld [vmem:[#allocation14 + $0x8b8] sm:$0xff]
          %v3282 = vld [vmem:[#allocation14 + $0x8c0] sm:$0xff]
          %v3283 = vld [vmem:[#allocation14 + $0x8c8] sm:$0xff]
          %v3284 = vld [vmem:[#allocation14 + $0x8d0] sm:$0xff]
          %v3285 = vld [vmem:[#allocation14 + $0x8d8] sm:$0xff]
          %v3286 = vld [vmem:[#allocation14 + $0x8e0] sm:$0xff]
          %v3287 = vld [vmem:[#allocation14 + $0x8e8] sm:$0xff]
          %v3288 = vld [vmem:[#allocation14 + $0x8f0] sm:$0xff]
          %v3289 = vld [vmem:[#allocation14 + $0x8f8] sm:$0xff]
          %v3290 = vld [vmem:[#allocation14 + $0x900] sm:$0xff]
          %v3291 = vld [vmem:[#allocation14 + $0x908] sm:$0xff]
          %v3292 = vld [vmem:[#allocation14 + $0x910] sm:$0xff]
          %v3293 = vld [vmem:[#allocation14 + $0x918] sm:$0xff]
          %v3294 = vld [vmem:[#allocation14 + $0x920] sm:$0xff]
          %v3295 = vld [vmem:[#allocation14 + $0x928] sm:$0xff]
          %v3296 = vld [vmem:[#allocation14 + $0x930] sm:$0xff]
          %v3297 = vld [vmem:[#allocation14 + $0x938] sm:$0xff]
          %v3298 = vld [vmem:[#allocation14 + $0x940] sm:$0xff]
          %v3299 = vld [vmem:[#allocation14 + $0x948] sm:$0xff]
          %v3300 = vld [vmem:[#allocation14 + $0x950] sm:$0xff]
          %v3301 = vld [vmem:[#allocation14 + $0x958] sm:$0xff]
          %v3302 = vld [vmem:[#allocation14 + $0x960] sm:$0xff]
          %v3303 = vld [vmem:[#allocation14 + $0x968] sm:$0xff]
          %v3304 = vld [vmem:[#allocation14 + $0x970] sm:$0xff]
          %v3305 = vld [vmem:[#allocation14 + $0x978] sm:$0xff]
          %v3306 = vld [vmem:[#allocation14 + $0x980] sm:$0xff]
          %v3307 = vld [vmem:[#allocation14 + $0x988] sm:$0xff]
          %v3308 = vld [vmem:[#allocation14 + $0x990] sm:$0xff]
          %v3309 = vld [vmem:[#allocation14 + $0x998] sm:$0xff]
          %v3310 = vld [vmem:[#allocation14 + $0x9a0] sm:$0xff]
          %v3311 = vld [vmem:[#allocation14 + $0x9a8] sm:$0xff]
          %v3312 = vld [vmem:[#allocation14 + $0x9b0] sm:$0xff]
          %v3313 = vld [vmem:[#allocation14 + $0x9b8] sm:$0xff]
          %v3314 = vld [vmem:[#allocation14 + $0x9c0] sm:$0xff]
          %v3315 = vld [vmem:[#allocation14 + $0x9c8] sm:$0xff]
          %v3316 = vld [vmem:[#allocation14 + $0x9d0] sm:$0xff]
          %v3317 = vld [vmem:[#allocation14 + $0x9d8] sm:$0xff]
          %v3318 = vld [vmem:[#allocation14 + $0x9e0] sm:$0xff]
          %v3319 = vld [vmem:[#allocation14 + $0x9e8] sm:$0xff]
          %v3320 = vld [vmem:[#allocation14 + $0x9f0] sm:$0xff]
          %v3321 = vld [vmem:[#allocation14 + $0x9f8] sm:$0xff]
          %v3322 = vld [vmem:[%s583] sm:$0x1]
          %v3323 = vld [vmem:[#allocation15] sm:$0xff]
          %v3324 = vld [vmem:[#allocation15 + $0x8] sm:$0xff]
          %v3325 = vld [vmem:[#allocation15 + $0x10] sm:$0xff]
          %v3326 = vld [vmem:[#allocation15 + $0x18] sm:$0xff]
          %v3327 = vld [vmem:[#allocation15 + $0x20] sm:$0xff]
          %v3328 = vld [vmem:[#allocation15 + $0x28] sm:$0xff]
          %v3329 = vld [vmem:[#allocation15 + $0x30] sm:$0xff]
          %v3330 = vld [vmem:[#allocation15 + $0x38] sm:$0xff]
          %v3331 = vld [vmem:[#allocation15 + $0x40] sm:$0xff]
          %v3332 = vld [vmem:[#allocation15 + $0x48] sm:$0xff]
          %v3333 = vld [vmem:[#allocation15 + $0x50] sm:$0xff]
          %v3334 = vld [vmem:[#allocation15 + $0x58] sm:$0xff]
          %v3335 = vld [vmem:[#allocation15 + $0x60] sm:$0xff]
          %v3336 = vld [vmem:[#allocation15 + $0x68] sm:$0xff]
          %v3337 = vld [vmem:[#allocation15 + $0x70] sm:$0xff]
          %v3338 = vld [vmem:[#allocation15 + $0x78] sm:$0xff]
          %v3339 = vld [vmem:[#allocation15 + $0x80] sm:$0xff]
          %v3340 = vld [vmem:[#allocation15 + $0x88] sm:$0xff]
          %v3341 = vld [vmem:[#allocation15 + $0x90] sm:$0xff]
          %v3342 = vld [vmem:[#allocation15 + $0x98] sm:$0xff]
          %v3343 = vld [vmem:[#allocation15 + $0xa0] sm:$0xff]
          %v3344 = vld [vmem:[#allocation15 + $0xa8] sm:$0xff]
          %v3345 = vld [vmem:[#allocation15 + $0xb0] sm:$0xff]
          %v3346 = vld [vmem:[#allocation15 + $0xb8] sm:$0xff]
          %v3347 = vld [vmem:[#allocation15 + $0xc0] sm:$0xff]
          %v3348 = vld [vmem:[#allocation15 + $0xc8] sm:$0xff]
          %v3349 = vld [vmem:[#allocation15 + $0xd0] sm:$0xff]
          %v3350 = vld [vmem:[#allocation15 + $0xd8] sm:$0xff]
          %v3351 = vld [vmem:[#allocation15 + $0xe0] sm:$0xff]
          %v3352 = vld [vmem:[#allocation15 + $0xe8] sm:$0xff]
          %v3353 = vld [vmem:[#allocation15 + $0xf0] sm:$0xff]
          %v3354 = vld [vmem:[#allocation15 + $0xf8] sm:$0xff]
          %v3387 = vunpack.c.l.b16 %v3323
          %v3388 = vunpack.c.h.b16 %v3323
          %v3389 = vunpack.c.l.b16 %v3324
          %v3390 = vunpack.c.h.b16 %v3324
          %v3391 = vunpack.c.l.b16 %v3325
          %v3392 = vunpack.c.h.b16 %v3325
          %v3393 = vunpack.c.l.b16 %v3326
          %v3394 = vunpack.c.h.b16 %v3326
          %v3395 = vunpack.c.l.b16 %v3327
          %v3396 = vunpack.c.h.b16 %v3327
          %v3397 = vunpack.c.l.b16 %v3328
          %v3398 = vunpack.c.h.b16 %v3328
          %v3399 = vunpack.c.l.b16 %v3329
          %v3400 = vunpack.c.h.b16 %v3329
          %v3401 = vunpack.c.l.b16 %v3330
          %v3402 = vunpack.c.h.b16 %v3330
          %v3403 = vunpack.c.l.b16 %v3331
          %v3404 = vunpack.c.h.b16 %v3331
          %v3405 = vunpack.c.l.b16 %v3332
          %v3406 = vunpack.c.h.b16 %v3332
          %v3407 = vunpack.c.l.b16 %v3333
          %v3408 = vunpack.c.h.b16 %v3333
          %v3409 = vunpack.c.l.b16 %v3334
          %v3410 = vunpack.c.h.b16 %v3334
          %v3411 = vunpack.c.l.b16 %v3335
          %v3412 = vunpack.c.h.b16 %v3335
          %v3413 = vunpack.c.l.b16 %v3336
          %v3414 = vunpack.c.h.b16 %v3336
          %v3415 = vunpack.c.l.b16 %v3337
          %v3416 = vunpack.c.h.b16 %v3337
          %v3417 = vunpack.c.l.b16 %v3338
          %v3418 = vunpack.c.h.b16 %v3338
          %v3419 = vunpack.c.l.b16 %v3339
          %v3420 = vunpack.c.h.b16 %v3339
          %v3421 = vunpack.c.l.b16 %v3340
          %v3422 = vunpack.c.h.b16 %v3340
          %v3423 = vunpack.c.l.b16 %v3341
          %v3424 = vunpack.c.h.b16 %v3341
          %v3425 = vunpack.c.l.b16 %v3342
          %v3426 = vunpack.c.h.b16 %v3342
          %v3427 = vunpack.c.l.b16 %v3343
          %v3428 = vunpack.c.h.b16 %v3343
          %v3429 = vunpack.c.l.b16 %v3344
          %v3430 = vunpack.c.h.b16 %v3344
          %v3431 = vunpack.c.l.b16 %v3345
          %v3432 = vunpack.c.h.b16 %v3345
          %v3433 = vunpack.c.l.b16 %v3346
          %v3434 = vunpack.c.h.b16 %v3346
          %v3435 = vunpack.c.l.b16 %v3347
          %v3436 = vunpack.c.h.b16 %v3347
          %v3437 = vunpack.c.l.b16 %v3348
          %v3438 = vunpack.c.h.b16 %v3348
          %v3439 = vunpack.c.l.b16 %v3349
          %v3440 = vunpack.c.h.b16 %v3349
          %v3441 = vunpack.c.l.b16 %v3350
          %v3442 = vunpack.c.h.b16 %v3350
          %v3443 = vunpack.c.l.b16 %v3351
          %v3444 = vunpack.c.h.b16 %v3351
          %v3445 = vunpack.c.l.b16 %v3352
          %v3446 = vunpack.c.h.b16 %v3352
          %v3447 = vunpack.c.l.b16 %v3353
          %v3448 = vunpack.c.h.b16 %v3353
          %v3449 = vunpack.c.l.b16 %v3354
          %v3450 = vunpack.c.h.b16 %v3354
          %v3451 = vpack.c.b16 %v3391, %v3387
          %v3452 = vpack.c.b16 %v3392, %v3388
          %v3453 = vpack.c.b16 %v3393, %v3389
          %v3454 = vpack.c.b16 %v3394, %v3390
          %v3455 = vpack.c.b16 %v3399, %v3395
          %v3456 = vpack.c.b16 %v3400, %v3396
          %v3457 = vpack.c.b16 %v3401, %v3397
          %v3458 = vpack.c.b16 %v3402, %v3398
          %v3459 = vpack.c.b16 %v3407, %v3403
          %v3460 = vpack.c.b16 %v3408, %v3404
          %v3461 = vpack.c.b16 %v3409, %v3405
          %v3462 = vpack.c.b16 %v3410, %v3406
          %v3463 = vpack.c.b16 %v3415, %v3411
          %v3464 = vpack.c.b16 %v3416, %v3412
          %v3465 = vpack.c.b16 %v3417, %v3413
          %v3466 = vpack.c.b16 %v3418, %v3414
          %v3467 = vpack.c.b16 %v3423, %v3419
          %v3468 = vpack.c.b16 %v3424, %v3420
          %v3469 = vpack.c.b16 %v3425, %v3421
          %v3470 = vpack.c.b16 %v3426, %v3422
          %v3471 = vpack.c.b16 %v3431, %v3427
          %v3472 = vpack.c.b16 %v3432, %v3428
          %v3473 = vpack.c.b16 %v3433, %v3429
          %v3474 = vpack.c.b16 %v3434, %v3430
          %v3475 = vpack.c.b16 %v3439, %v3435
          %v3476 = vpack.c.b16 %v3440, %v3436
          %v3477 = vpack.c.b16 %v3441, %v3437
          %v3478 = vpack.c.b16 %v3442, %v3438
          %v3479 = vpack.c.b16 %v3447, %v3443
          %v3480 = vpack.c.b16 %v3448, %v3444
          %v3481 = vpack.c.b16 %v3449, %v3445
          %v3482 = vpack.c.b16 %v3450, %v3446
          %3515 = vmatprep.subr.bf16.mxu0 %v3452
          %3516 = vmatpush1.bf16.msra.mxu0 %v3451
          %3517 = vmatprep.subr.bf16.mxu0 %v3456
          %3518 = vmatpush1.bf16.msra.mxu0 %v3455
          %3519 = vmatprep.subr.bf16.mxu0 %v3460
          %3520 = vmatpush1.bf16.msra.mxu0 %v3459
          %3521 = vmatprep.subr.bf16.mxu0 %v3464
          %3522 = vmatpush1.bf16.msra.mxu0 %v3463
          %3523 = vmatprep.subr.bf16.mxu0 %v3468
          %3524 = vmatpush1.bf16.msra.mxu0 %v3467
          %3525 = vmatprep.subr.bf16.mxu0 %v3472
          %3526 = vmatpush1.bf16.msra.mxu0 %v3471
          %3527 = vmatprep.subr.bf16.mxu0 %v3476
          %3528 = vmatpush1.bf16.msra.mxu0 %v3475
          %3529 = vmatprep.subr.bf16.mxu0 %v3480
          %3530 = vmatpush1.bf16.msra.mxu0 %v3479
          %3531 = vmatprep.subr.bf16.mxu0 0
          %3532 = vmatpush1.bf16.msra.mxu0 0
          %3533 = vmatprep.subr.bf16.mxu0 0
          %3534 = vmatpush1.bf16.msra.mxu0 0
          %3535 = vmatprep.subr.bf16.mxu0 0
          %3536 = vmatpush1.bf16.msra.mxu0 0
          %3537 = vmatprep.subr.bf16.mxu0 0
          %3538 = vmatpush1.bf16.msra.mxu0 0
          %3539 = vmatprep.subr.bf16.mxu0 0
          %3540 = vmatpush1.bf16.msra.mxu0 0
          %3541 = vmatprep.subr.bf16.mxu0 0
          %3542 = vmatpush1.bf16.msra.mxu0 0
          %3543 = vmatprep.subr.bf16.mxu0 0
          %3544 = vmatpush1.bf16.msra.mxu0 0
          %3545 = vmatprep.subr.bf16.mxu0 0
          %3546 = vmatpush1.bf16.msra.mxu0 0
          %3547 = vmatprep.mubr.bf16.mxu0 0
          %3548 = vmatmul.mubr.bf16.gmra.mrb[0].mxu0 %v3322
          %v3549 = vpop.f32.mrb[0].mxu0
          %v3550 = vadd.f32 0.0, %v3549
          %v3551 = vpop.f32.mrb[0].mxu0
          %v3552 = vadd.f32 0.0, %v3551
          %v3553 = vpop.f32.mrb[0].mxu0
          %v3554 = vpop.f32.mrb[0].mxu0
          %3555 = vdwg.mxu0
          %3556 = vmatprep.subr.bf16.mxu0 %v3454
          %3557 = vmatpush1.bf16.msra.mxu0 %v3453
          %3558 = vmatprep.subr.bf16.mxu0 %v3458
          %3559 = vmatpush1.bf16.msra.mxu0 %v3457
          %3560 = vmatprep.subr.bf16.mxu0 %v3462
          %3561 = vmatpush1.bf16.msra.mxu0 %v3461
          %3562 = vmatprep.subr.bf16.mxu0 %v3466
          %3563 = vmatpush1.bf16.msra.mxu0 %v3465
          %3564 = vmatprep.subr.bf16.mxu0 %v3470
          %3565 = vmatpush1.bf16.msra.mxu0 %v3469
          %3566 = vmatprep.subr.bf16.mxu0 %v3474
          %3567 = vmatpush1.bf16.msra.mxu0 %v3473
          %3568 = vmatprep.subr.bf16.mxu0 %v3478
          %3569 = vmatpush1.bf16.msra.mxu0 %v3477
          %3570 = vmatprep.subr.bf16.mxu0 %v3482
          %3571 = vmatpush1.bf16.msra.mxu0 %v3481
          %3572 = vmatprep.subr.bf16.mxu0 0
          %3573 = vmatpush1.bf16.msra.mxu0 0
          %3574 = vmatprep.subr.bf16.mxu0 0
          %3575 = vmatpush1.bf16.msra.mxu0 0
          %3576 = vmatprep.subr.bf16.mxu0 0
          %3577 = vmatpush1.bf16.msra.mxu0 0
          %3578 = vmatprep.subr.bf16.mxu0 0
          %3579 = vmatpush1.bf16.msra.mxu0 0
          %3580 = vmatprep.subr.bf16.mxu0 0
          %3581 = vmatpush1.bf16.msra.mxu0 0
          %3582 = vmatprep.subr.bf16.mxu0 0
          %3583 = vmatpush1.bf16.msra.mxu0 0
          %3584 = vmatprep.subr.bf16.mxu0 0
          %3585 = vmatpush1.bf16.msra.mxu0 0
          %3586 = vmatprep.subr.bf16.mxu0 0
          %3587 = vmatpush1.bf16.msra.mxu0 0
          %3588 = vmatprep.mubr.bf16.mxu0 0
          %3589 = vmatmul.mubr.bf16.gmra.mrb[0].mxu0 %v3322
          %v3590 = vpop.f32.mrb[0].mxu0
          %v3591 = vadd.f32 0.0, %v3590
          %v3592 = vpop.f32.mrb[0].mxu0
          %v3593 = vadd.f32 0.0, %v3592
          %v3594 = vpop.f32.mrb[0].mxu0
          %v3595 = vpop.f32.mrb[0].mxu0
          %3596 = vdwg.mxu0
          %v3917 = vunpack.c.l.b16 %v3002
          %v3918 = vunpack.c.h.b16 %v3002
          %v3919 = vunpack.c.l.b16 %v3003
          %v3920 = vunpack.c.h.b16 %v3003
          %v3921 = vunpack.c.l.b16 %v3004
          %v3922 = vunpack.c.h.b16 %v3004
          %v3923 = vunpack.c.l.b16 %v3005
          %v3924 = vunpack.c.h.b16 %v3005
          %v3925 = vunpack.c.l.b16 %v3006
          %v3926 = vunpack.c.h.b16 %v3006
          %v3927 = vunpack.c.l.b16 %v3007
          %v3928 = vunpack.c.h.b16 %v3007
          %v3929 = vunpack.c.l.b16 %v3008
          %v3930 = vunpack.c.h.b16 %v3008
          %v3931 = vunpack.c.l.b16 %v3009
          %v3932 = vunpack.c.h.b16 %v3009
          %v3933 = vunpack.c.l.b16 %v3010
          %v3934 = vunpack.c.h.b16 %v3010
          %v3935 = vunpack.c.l.b16 %v3011
          %v3936 = vunpack.c.h.b16 %v3011
          %v3937 = vunpack.c.l.b16 %v3012
          %v3938 = vunpack.c.h.b16 %v3012
          %v3939 = vunpack.c.l.b16 %v3013
          %v3940 = vunpack.c.h.b16 %v3013
          %v3941 = vunpack.c.l.b16 %v3014
          %v3942 = vunpack.c.h.b16 %v3014
          %v3943 = vunpack.c.l.b16 %v3015
          %v3944 = vunpack.c.h.b16 %v3015
          %v3945 = vunpack.c.l.b16 %v3016
          %v3946 = vunpack.c.h.b16 %v3016
          %v3947 = vunpack.c.l.b16 %v3017
          %v3948 = vunpack.c.h.b16 %v3017
          %v3949 = vunpack.c.l.b16 %v3018
          %v3950 = vunpack.c.h.b16 %v3018
          %v3951 = vunpack.c.l.b16 %v3019
          %v3952 = vunpack.c.h.b16 %v3019
          %v3953 = vunpack.c.l.b16 %v3020
          %v3954 = vunpack.c.h.b16 %v3020
          %v3955 = vunpack.c.l.b16 %v3021
          %v3956 = vunpack.c.h.b16 %v3021
          %v3957 = vunpack.c.l.b16 %v3022
          %v3958 = vunpack.c.h.b16 %v3022
          %v3959 = vunpack.c.l.b16 %v3023
          %v3960 = vunpack.c.h.b16 %v3023
          %v3961 = vunpack.c.l.b16 %v3024
          %v3962 = vunpack.c.h.b16 %v3024
          %v3963 = vunpack.c.l.b16 %v3025
          %v3964 = vunpack.c.h.b16 %v3025
          %v3965 = vunpack.c.l.b16 %v3026
          %v3966 = vunpack.c.h.b16 %v3026
          %v3967 = vunpack.c.l.b16 %v3027
          %v3968 = vunpack.c.h.b16 %v3027
          %v3969 = vunpack.c.l.b16 %v3028
          %v3970 = vunpack.c.h.b16 %v3028
          %v3971 = vunpack.c.l.b16 %v3029
          %v3972 = vunpack.c.h.b16 %v3029
          %v3973 = vunpack.c.l.b16 %v3030
          %v3974 = vunpack.c.h.b16 %v3030
          %v3975 = vunpack.c.l.b16 %v3031
          %v3976 = vunpack.c.h.b16 %v3031
          %v3977 = vunpack.c.l.b16 %v3032
          %v3978 = vunpack.c.h.b16 %v3032
          %v3979 = vunpack.c.l.b16 %v3033
          %v3980 = vunpack.c.h.b16 %v3033
          %v3981 = vunpack.c.l.b16 %v3034
          %v3982 = vunpack.c.h.b16 %v3034
          %v3983 = vunpack.c.l.b16 %v3035
          %v3984 = vunpack.c.h.b16 %v3035
          %v3985 = vunpack.c.l.b16 %v3036
          %v3986 = vunpack.c.h.b16 %v3036
          %v3987 = vunpack.c.l.b16 %v3037
          %v3988 = vunpack.c.h.b16 %v3037
          %v3989 = vunpack.c.l.b16 %v3038
          %v3990 = vunpack.c.h.b16 %v3038
          %v3991 = vunpack.c.l.b16 %v3039
          %v3992 = vunpack.c.h.b16 %v3039
          %v3993 = vunpack.c.l.b16 %v3040
          %v3994 = vunpack.c.h.b16 %v3040
          %v3995 = vunpack.c.l.b16 %v3041
          %v3996 = vunpack.c.h.b16 %v3041
          %v3997 = vunpack.c.l.b16 %v3042
          %v3998 = vunpack.c.h.b16 %v3042
          %v3999 = vunpack.c.l.b16 %v3043
          %v4000 = vunpack.c.h.b16 %v3043
          %v4001 = vunpack.c.l.b16 %v3044
          %v4002 = vunpack.c.h.b16 %v3044
          %v4003 = vunpack.c.l.b16 %v3045
          %v4004 = vunpack.c.h.b16 %v3045
          %v4005 = vunpack.c.l.b16 %v3046
          %v4006 = vunpack.c.h.b16 %v3046
          %v4007 = vunpack.c.l.b16 %v3047
          %v4008 = vunpack.c.h.b16 %v3047
          %v4009 = vunpack.c.l.b16 %v3048
          %v4010 = vunpack.c.h.b16 %v3048
          %v4011 = vunpack.c.l.b16 %v3049
          %v4012 = vunpack.c.h.b16 %v3049
          %v4013 = vunpack.c.l.b16 %v3050
          %v4014 = vunpack.c.h.b16 %v3050
          %v4015 = vunpack.c.l.b16 %v3051
          %v4016 = vunpack.c.h.b16 %v3051
          %v4017 = vunpack.c.l.b16 %v3052
          %v4018 = vunpack.c.h.b16 %v3052
          %v4019 = vunpack.c.l.b16 %v3053
          %v4020 = vunpack.c.h.b16 %v3053
          %v4021 = vunpack.c.l.b16 %v3054
          %v4022 = vunpack.c.h.b16 %v3054
          %v4023 = vunpack.c.l.b16 %v3055
          %v4024 = vunpack.c.h.b16 %v3055
          %v4025 = vunpack.c.l.b16 %v3056
          %v4026 = vunpack.c.h.b16 %v3056
          %v4027 = vunpack.c.l.b16 %v3057
          %v4028 = vunpack.c.h.b16 %v3057
          %v4029 = vunpack.c.l.b16 %v3058
          %v4030 = vunpack.c.h.b16 %v3058
          %v4031 = vunpack.c.l.b16 %v3059
          %v4032 = vunpack.c.h.b16 %v3059
          %v4033 = vunpack.c.l.b16 %v3060
          %v4034 = vunpack.c.h.b16 %v3060
          %v4035 = vunpack.c.l.b16 %v3061
          %v4036 = vunpack.c.h.b16 %v3061
          %v4037 = vunpack.c.l.b16 %v3062
          %v4038 = vunpack.c.h.b16 %v3062
          %v4039 = vunpack.c.l.b16 %v3063
          %v4040 = vunpack.c.h.b16 %v3063
          %v4041 = vunpack.c.l.b16 %v3064
          %v4042 = vunpack.c.h.b16 %v3064
          %v4043 = vunpack.c.l.b16 %v3065
          %v4044 = vunpack.c.h.b16 %v3065
          %v4045 = vunpack.c.l.b16 %v3066
          %v4046 = vunpack.c.h.b16 %v3066
          %v4047 = vunpack.c.l.b16 %v3067
          %v4048 = vunpack.c.h.b16 %v3067
          %v4049 = vunpack.c.l.b16 %v3068
          %v4050 = vunpack.c.h.b16 %v3068
          %v4051 = vunpack.c.l.b16 %v3069
          %v4052 = vunpack.c.h.b16 %v3069
          %v4053 = vunpack.c.l.b16 %v3070
          %v4054 = vunpack.c.h.b16 %v3070
          %v4055 = vunpack.c.l.b16 %v3071
          %v4056 = vunpack.c.h.b16 %v3071
          %v4057 = vunpack.c.l.b16 %v3072
          %v4058 = vunpack.c.h.b16 %v3072
          %v4059 = vunpack.c.l.b16 %v3073
          %v4060 = vunpack.c.h.b16 %v3073
          %v4061 = vunpack.c.l.b16 %v3074
          %v4062 = vunpack.c.h.b16 %v3074
          %v4063 = vunpack.c.l.b16 %v3075
          %v4064 = vunpack.c.h.b16 %v3075
          %v4065 = vunpack.c.l.b16 %v3076
          %v4066 = vunpack.c.h.b16 %v3076
          %v4067 = vunpack.c.l.b16 %v3077
          %v4068 = vunpack.c.h.b16 %v3077
          %v4069 = vunpack.c.l.b16 %v3078
          %v4070 = vunpack.c.h.b16 %v3078
          %v4071 = vunpack.c.l.b16 %v3079
          %v4072 = vunpack.c.h.b16 %v3079
          %v4073 = vunpack.c.l.b16 %v3080
          %v4074 = vunpack.c.h.b16 %v3080
          %v4075 = vunpack.c.l.b16 %v3081
          %v4076 = vunpack.c.h.b16 %v3081
          %v4077 = vunpack.c.l.b16 %v3082
          %v4078 = vunpack.c.h.b16 %v3082
          %v4079 = vunpack.c.l.b16 %v3083
          %v4080 = vunpack.c.h.b16 %v3083
          %v4081 = vunpack.c.l.b16 %v3084
          %v4082 = vunpack.c.h.b16 %v3084
          %v4083 = vunpack.c.l.b16 %v3085
          %v4084 = vunpack.c.h.b16 %v3085
          %v4085 = vunpack.c.l.b16 %v3086
          %v4086 = vunpack.c.h.b16 %v3086
          %v4087 = vunpack.c.l.b16 %v3087
          %v4088 = vunpack.c.h.b16 %v3087
          %v4089 = vunpack.c.l.b16 %v3088
          %v4090 = vunpack.c.h.b16 %v3088
          %v4091 = vunpack.c.l.b16 %v3089
          %v4092 = vunpack.c.h.b16 %v3089
          %v4093 = vunpack.c.l.b16 %v3090
          %v4094 = vunpack.c.h.b16 %v3090
          %v4095 = vunpack.c.l.b16 %v3091
          %v4096 = vunpack.c.h.b16 %v3091
          %v4097 = vunpack.c.l.b16 %v3092
          %v4098 = vunpack.c.h.b16 %v3092
          %v4099 = vunpack.c.l.b16 %v3093
          %v4100 = vunpack.c.h.b16 %v3093
          %v4101 = vunpack.c.l.b16 %v3094
          %v4102 = vunpack.c.h.b16 %v3094
          %v4103 = vunpack.c.l.b16 %v3095
          %v4104 = vunpack.c.h.b16 %v3095
          %v4105 = vunpack.c.l.b16 %v3096
          %v4106 = vunpack.c.h.b16 %v3096
          %v4107 = vunpack.c.l.b16 %v3097
          %v4108 = vunpack.c.h.b16 %v3097
          %v4109 = vunpack.c.l.b16 %v3098
          %v4110 = vunpack.c.h.b16 %v3098
          %v4111 = vunpack.c.l.b16 %v3099
          %v4112 = vunpack.c.h.b16 %v3099
          %v4113 = vunpack.c.l.b16 %v3100
          %v4114 = vunpack.c.h.b16 %v3100
          %v4115 = vunpack.c.l.b16 %v3101
          %v4116 = vunpack.c.h.b16 %v3101
          %v4117 = vunpack.c.l.b16 %v3102
          %v4118 = vunpack.c.h.b16 %v3102
          %v4119 = vunpack.c.l.b16 %v3103
          %v4120 = vunpack.c.h.b16 %v3103
          %v4121 = vunpack.c.l.b16 %v3104
          %v4122 = vunpack.c.h.b16 %v3104
          %v4123 = vunpack.c.l.b16 %v3105
          %v4124 = vunpack.c.h.b16 %v3105
          %v4125 = vunpack.c.l.b16 %v3106
          %v4126 = vunpack.c.h.b16 %v3106
          %v4127 = vunpack.c.l.b16 %v3107
          %v4128 = vunpack.c.h.b16 %v3107
          %v4129 = vunpack.c.l.b16 %v3108
          %v4130 = vunpack.c.h.b16 %v3108
          %v4131 = vunpack.c.l.b16 %v3109
          %v4132 = vunpack.c.h.b16 %v3109
          %v4133 = vunpack.c.l.b16 %v3110
          %v4134 = vunpack.c.h.b16 %v3110
          %v4135 = vunpack.c.l.b16 %v3111
          %v4136 = vunpack.c.h.b16 %v3111
          %v4137 = vunpack.c.l.b16 %v3112
          %v4138 = vunpack.c.h.b16 %v3112
          %v4139 = vunpack.c.l.b16 %v3113
          %v4140 = vunpack.c.h.b16 %v3113
          %v4141 = vunpack.c.l.b16 %v3114
          %v4142 = vunpack.c.h.b16 %v3114
          %v4143 = vunpack.c.l.b16 %v3115
          %v4144 = vunpack.c.h.b16 %v3115
          %v4145 = vunpack.c.l.b16 %v3116
          %v4146 = vunpack.c.h.b16 %v3116
          %v4147 = vunpack.c.l.b16 %v3117
          %v4148 = vunpack.c.h.b16 %v3117
          %v4149 = vunpack.c.l.b16 %v3118
          %v4150 = vunpack.c.h.b16 %v3118
          %v4151 = vunpack.c.l.b16 %v3119
          %v4152 = vunpack.c.h.b16 %v3119
          %v4153 = vunpack.c.l.b16 %v3120
          %v4154 = vunpack.c.h.b16 %v3120
          %v4155 = vunpack.c.l.b16 %v3121
          %v4156 = vunpack.c.h.b16 %v3121
          %v4157 = vunpack.c.l.b16 %v3122
          %v4158 = vunpack.c.h.b16 %v3122
          %v4159 = vunpack.c.l.b16 %v3123
          %v4160 = vunpack.c.h.b16 %v3123
          %v4161 = vunpack.c.l.b16 %v3124
          %v4162 = vunpack.c.h.b16 %v3124
          %v4163 = vunpack.c.l.b16 %v3125
          %v4164 = vunpack.c.h.b16 %v3125
          %v4165 = vunpack.c.l.b16 %v3126
          %v4166 = vunpack.c.h.b16 %v3126
          %v4167 = vunpack.c.l.b16 %v3127
          %v4168 = vunpack.c.h.b16 %v3127
          %v4169 = vunpack.c.l.b16 %v3128
          %v4170 = vunpack.c.h.b16 %v3128
          %v4171 = vunpack.c.l.b16 %v3129
          %v4172 = vunpack.c.h.b16 %v3129
          %v4173 = vunpack.c.l.b16 %v3130
          %v4174 = vunpack.c.h.b16 %v3130
          %v4175 = vunpack.c.l.b16 %v3131
          %v4176 = vunpack.c.h.b16 %v3131
          %v4177 = vunpack.c.l.b16 %v3132
          %v4178 = vunpack.c.h.b16 %v3132
          %v4179 = vunpack.c.l.b16 %v3133
          %v4180 = vunpack.c.h.b16 %v3133
          %v4181 = vunpack.c.l.b16 %v3134
          %v4182 = vunpack.c.h.b16 %v3134
          %v4183 = vunpack.c.l.b16 %v3135
          %v4184 = vunpack.c.h.b16 %v3135
          %v4185 = vunpack.c.l.b16 %v3136
          %v4186 = vunpack.c.h.b16 %v3136
          %v4187 = vunpack.c.l.b16 %v3137
          %v4188 = vunpack.c.h.b16 %v3137
          %v4189 = vunpack.c.l.b16 %v3138
          %v4190 = vunpack.c.h.b16 %v3138
          %v4191 = vunpack.c.l.b16 %v3139
          %v4192 = vunpack.c.h.b16 %v3139
          %v4193 = vunpack.c.l.b16 %v3140
          %v4194 = vunpack.c.h.b16 %v3140
          %v4195 = vunpack.c.l.b16 %v3141
          %v4196 = vunpack.c.h.b16 %v3141
          %v4197 = vunpack.c.l.b16 %v3142
          %v4198 = vunpack.c.h.b16 %v3142
          %v4199 = vunpack.c.l.b16 %v3143
          %v4200 = vunpack.c.h.b16 %v3143
          %v4201 = vunpack.c.l.b16 %v3144
          %v4202 = vunpack.c.h.b16 %v3144
          %v4203 = vunpack.c.l.b16 %v3145
          %v4204 = vunpack.c.h.b16 %v3145
          %v4205 = vunpack.c.l.b16 %v3146
          %v4206 = vunpack.c.h.b16 %v3146
          %v4207 = vunpack.c.l.b16 %v3147
          %v4208 = vunpack.c.h.b16 %v3147
          %v4209 = vunpack.c.l.b16 %v3148
          %v4210 = vunpack.c.h.b16 %v3148
          %v4211 = vunpack.c.l.b16 %v3149
          %v4212 = vunpack.c.h.b16 %v3149
          %v4213 = vunpack.c.l.b16 %v3150
          %v4214 = vunpack.c.h.b16 %v3150
          %v4215 = vunpack.c.l.b16 %v3151
          %v4216 = vunpack.c.h.b16 %v3151
          %v4217 = vunpack.c.l.b16 %v3152
          %v4218 = vunpack.c.h.b16 %v3152
          %v4219 = vunpack.c.l.b16 %v3153
          %v4220 = vunpack.c.h.b16 %v3153
          %v4221 = vunpack.c.l.b16 %v3154
          %v4222 = vunpack.c.h.b16 %v3154
          %v4223 = vunpack.c.l.b16 %v3155
          %v4224 = vunpack.c.h.b16 %v3155
          %v4225 = vunpack.c.l.b16 %v3156
          %v4226 = vunpack.c.h.b16 %v3156
          %v4227 = vunpack.c.l.b16 %v3157
          %v4228 = vunpack.c.h.b16 %v3157
          %v4229 = vunpack.c.l.b16 %v3158
          %v4230 = vunpack.c.h.b16 %v3158
          %v4231 = vunpack.c.l.b16 %v3159
          %v4232 = vunpack.c.h.b16 %v3159
          %v4233 = vunpack.c.l.b16 %v3160
          %v4234 = vunpack.c.h.b16 %v3160
          %v4235 = vunpack.c.l.b16 %v3161
          %v4236 = vunpack.c.h.b16 %v3161
          %v4237 = vunpack.c.l.b16 %v3162
          %v4238 = vunpack.c.h.b16 %v3162
          %v4239 = vunpack.c.l.b16 %v3163
          %v4240 = vunpack.c.h.b16 %v3163
          %v4241 = vunpack.c.l.b16 %v3164
          %v4242 = vunpack.c.h.b16 %v3164
          %v4243 = vunpack.c.l.b16 %v3165
          %v4244 = vunpack.c.h.b16 %v3165
          %v4245 = vunpack.c.l.b16 %v3166
          %v4246 = vunpack.c.h.b16 %v3166
          %v4247 = vunpack.c.l.b16 %v3167
          %v4248 = vunpack.c.h.b16 %v3167
          %v4249 = vunpack.c.l.b16 %v3168
          %v4250 = vunpack.c.h.b16 %v3168
          %v4251 = vunpack.c.l.b16 %v3169
          %v4252 = vunpack.c.h.b16 %v3169
          %v4253 = vunpack.c.l.b16 %v3170
          %v4254 = vunpack.c.h.b16 %v3170
          %v4255 = vunpack.c.l.b16 %v3171
          %v4256 = vunpack.c.h.b16 %v3171
          %v4257 = vunpack.c.l.b16 %v3172
          %v4258 = vunpack.c.h.b16 %v3172
          %v4259 = vunpack.c.l.b16 %v3173
          %v4260 = vunpack.c.h.b16 %v3173
          %v4261 = vunpack.c.l.b16 %v3174
          %v4262 = vunpack.c.h.b16 %v3174
          %v4263 = vunpack.c.l.b16 %v3175
          %v4264 = vunpack.c.h.b16 %v3175
          %v4265 = vunpack.c.l.b16 %v3176
          %v4266 = vunpack.c.h.b16 %v3176
          %v4267 = vunpack.c.l.b16 %v3177
          %v4268 = vunpack.c.h.b16 %v3177
          %v4269 = vunpack.c.l.b16 %v3178
          %v4270 = vunpack.c.h.b16 %v3178
          %v4271 = vunpack.c.l.b16 %v3179
          %v4272 = vunpack.c.h.b16 %v3179
          %v4273 = vunpack.c.l.b16 %v3180
          %v4274 = vunpack.c.h.b16 %v3180
          %v4275 = vunpack.c.l.b16 %v3181
          %v4276 = vunpack.c.h.b16 %v3181
          %v4277 = vunpack.c.l.b16 %v3182
          %v4278 = vunpack.c.h.b16 %v3182
          %v4279 = vunpack.c.l.b16 %v3183
          %v4280 = vunpack.c.h.b16 %v3183
          %v4281 = vunpack.c.l.b16 %v3184
          %v4282 = vunpack.c.h.b16 %v3184
          %v4283 = vunpack.c.l.b16 %v3185
          %v4284 = vunpack.c.h.b16 %v3185
          %v4285 = vunpack.c.l.b16 %v3186
          %v4286 = vunpack.c.h.b16 %v3186
          %v4287 = vunpack.c.l.b16 %v3187
          %v4288 = vunpack.c.h.b16 %v3187
          %v4289 = vunpack.c.l.b16 %v3188
          %v4290 = vunpack.c.h.b16 %v3188
          %v4291 = vunpack.c.l.b16 %v3189
          %v4292 = vunpack.c.h.b16 %v3189
          %v4293 = vunpack.c.l.b16 %v3190
          %v4294 = vunpack.c.h.b16 %v3190
          %v4295 = vunpack.c.l.b16 %v3191
          %v4296 = vunpack.c.h.b16 %v3191
          %v4297 = vunpack.c.l.b16 %v3192
          %v4298 = vunpack.c.h.b16 %v3192
          %v4299 = vunpack.c.l.b16 %v3193
          %v4300 = vunpack.c.h.b16 %v3193
          %v4301 = vunpack.c.l.b16 %v3194
          %v4302 = vunpack.c.h.b16 %v3194
          %v4303 = vunpack.c.l.b16 %v3195
          %v4304 = vunpack.c.h.b16 %v3195
          %v4305 = vunpack.c.l.b16 %v3196
          %v4306 = vunpack.c.h.b16 %v3196
          %v4307 = vunpack.c.l.b16 %v3197
          %v4308 = vunpack.c.h.b16 %v3197
          %v4309 = vunpack.c.l.b16 %v3198
          %v4310 = vunpack.c.h.b16 %v3198
          %v4311 = vunpack.c.l.b16 %v3199
          %v4312 = vunpack.c.h.b16 %v3199
          %v4313 = vunpack.c.l.b16 %v3200
          %v4314 = vunpack.c.h.b16 %v3200
          %v4315 = vunpack.c.l.b16 %v3201
          %v4316 = vunpack.c.h.b16 %v3201
          %v4317 = vunpack.c.l.b16 %v3202
          %v4318 = vunpack.c.h.b16 %v3202
          %v4319 = vunpack.c.l.b16 %v3203
          %v4320 = vunpack.c.h.b16 %v3203
          %v4321 = vunpack.c.l.b16 %v3204
          %v4322 = vunpack.c.h.b16 %v3204
          %v4323 = vunpack.c.l.b16 %v3205
          %v4324 = vunpack.c.h.b16 %v3205
          %v4325 = vunpack.c.l.b16 %v3206
          %v4326 = vunpack.c.h.b16 %v3206
          %v4327 = vunpack.c.l.b16 %v3207
          %v4328 = vunpack.c.h.b16 %v3207
          %v4329 = vunpack.c.l.b16 %v3208
          %v4330 = vunpack.c.h.b16 %v3208
          %v4331 = vunpack.c.l.b16 %v3209
          %v4332 = vunpack.c.h.b16 %v3209
          %v4333 = vunpack.c.l.b16 %v3210
          %v4334 = vunpack.c.h.b16 %v3210
          %v4335 = vunpack.c.l.b16 %v3211
          %v4336 = vunpack.c.h.b16 %v3211
          %v4337 = vunpack.c.l.b16 %v3212
          %v4338 = vunpack.c.h.b16 %v3212
          %v4339 = vunpack.c.l.b16 %v3213
          %v4340 = vunpack.c.h.b16 %v3213
          %v4341 = vunpack.c.l.b16 %v3214
          %v4342 = vunpack.c.h.b16 %v3214
          %v4343 = vunpack.c.l.b16 %v3215
          %v4344 = vunpack.c.h.b16 %v3215
          %v4345 = vunpack.c.l.b16 %v3216
          %v4346 = vunpack.c.h.b16 %v3216
          %v4347 = vunpack.c.l.b16 %v3217
          %v4348 = vunpack.c.h.b16 %v3217
          %v4349 = vunpack.c.l.b16 %v3218
          %v4350 = vunpack.c.h.b16 %v3218
          %v4351 = vunpack.c.l.b16 %v3219
          %v4352 = vunpack.c.h.b16 %v3219
          %v4353 = vunpack.c.l.b16 %v3220
          %v4354 = vunpack.c.h.b16 %v3220
          %v4355 = vunpack.c.l.b16 %v3221
          %v4356 = vunpack.c.h.b16 %v3221
          %v4357 = vunpack.c.l.b16 %v3222
          %v4358 = vunpack.c.h.b16 %v3222
          %v4359 = vunpack.c.l.b16 %v3223
          %v4360 = vunpack.c.h.b16 %v3223
          %v4361 = vunpack.c.l.b16 %v3224
          %v4362 = vunpack.c.h.b16 %v3224
          %v4363 = vunpack.c.l.b16 %v3225
          %v4364 = vunpack.c.h.b16 %v3225
          %v4365 = vunpack.c.l.b16 %v3226
          %v4366 = vunpack.c.h.b16 %v3226
          %v4367 = vunpack.c.l.b16 %v3227
          %v4368 = vunpack.c.h.b16 %v3227
          %v4369 = vunpack.c.l.b16 %v3228
          %v4370 = vunpack.c.h.b16 %v3228
          %v4371 = vunpack.c.l.b16 %v3229
          %v4372 = vunpack.c.h.b16 %v3229
          %v4373 = vunpack.c.l.b16 %v3230
          %v4374 = vunpack.c.h.b16 %v3230
          %v4375 = vunpack.c.l.b16 %v3231
          %v4376 = vunpack.c.h.b16 %v3231
          %v4377 = vunpack.c.l.b16 %v3232
          %v4378 = vunpack.c.h.b16 %v3232
          %v4379 = vunpack.c.l.b16 %v3233
          %v4380 = vunpack.c.h.b16 %v3233
          %v4381 = vunpack.c.l.b16 %v3234
          %v4382 = vunpack.c.h.b16 %v3234
          %v4383 = vunpack.c.l.b16 %v3235
          %v4384 = vunpack.c.h.b16 %v3235
          %v4385 = vunpack.c.l.b16 %v3236
          %v4386 = vunpack.c.h.b16 %v3236
          %v4387 = vunpack.c.l.b16 %v3237
          %v4388 = vunpack.c.h.b16 %v3237
          %v4389 = vunpack.c.l.b16 %v3238
          %v4390 = vunpack.c.h.b16 %v3238
          %v4391 = vunpack.c.l.b16 %v3239
          %v4392 = vunpack.c.h.b16 %v3239
          %v4393 = vunpack.c.l.b16 %v3240
          %v4394 = vunpack.c.h.b16 %v3240
          %v4395 = vunpack.c.l.b16 %v3241
          %v4396 = vunpack.c.h.b16 %v3241
          %v4397 = vunpack.c.l.b16 %v3242
          %v4398 = vunpack.c.h.b16 %v3242
          %v4399 = vunpack.c.l.b16 %v3243
          %v4400 = vunpack.c.h.b16 %v3243
          %v4401 = vunpack.c.l.b16 %v3244
          %v4402 = vunpack.c.h.b16 %v3244
          %v4403 = vunpack.c.l.b16 %v3245
          %v4404 = vunpack.c.h.b16 %v3245
          %v4405 = vunpack.c.l.b16 %v3246
          %v4406 = vunpack.c.h.b16 %v3246
          %v4407 = vunpack.c.l.b16 %v3247
          %v4408 = vunpack.c.h.b16 %v3247
          %v4409 = vunpack.c.l.b16 %v3248
          %v4410 = vunpack.c.h.b16 %v3248
          %v4411 = vunpack.c.l.b16 %v3249
          %v4412 = vunpack.c.h.b16 %v3249
          %v4413 = vunpack.c.l.b16 %v3250
          %v4414 = vunpack.c.h.b16 %v3250
          %v4415 = vunpack.c.l.b16 %v3251
          %v4416 = vunpack.c.h.b16 %v3251
          %v4417 = vunpack.c.l.b16 %v3252
          %v4418 = vunpack.c.h.b16 %v3252
          %v4419 = vunpack.c.l.b16 %v3253
          %v4420 = vunpack.c.h.b16 %v3253
          %v4421 = vunpack.c.l.b16 %v3254
          %v4422 = vunpack.c.h.b16 %v3254
          %v4423 = vunpack.c.l.b16 %v3255
          %v4424 = vunpack.c.h.b16 %v3255
          %v4425 = vunpack.c.l.b16 %v3256
          %v4426 = vunpack.c.h.b16 %v3256
          %v4427 = vunpack.c.l.b16 %v3257
          %v4428 = vunpack.c.h.b16 %v3257
          %v4429 = vunpack.c.l.b16 %v3258
          %v4430 = vunpack.c.h.b16 %v3258
          %v4431 = vunpack.c.l.b16 %v3259
          %v4432 = vunpack.c.h.b16 %v3259
          %v4433 = vunpack.c.l.b16 %v3260
          %v4434 = vunpack.c.h.b16 %v3260
          %v4435 = vunpack.c.l.b16 %v3261
          %v4436 = vunpack.c.h.b16 %v3261
          %v4437 = vunpack.c.l.b16 %v3262
          %v4438 = vunpack.c.h.b16 %v3262
          %v4439 = vunpack.c.l.b16 %v3263
          %v4440 = vunpack.c.h.b16 %v3263
          %v4441 = vunpack.c.l.b16 %v3264
          %v4442 = vunpack.c.h.b16 %v3264
          %v4443 = vunpack.c.l.b16 %v3265
          %v4444 = vunpack.c.h.b16 %v3265
          %v4445 = vunpack.c.l.b16 %v3266
          %v4446 = vunpack.c.h.b16 %v3266
          %v4447 = vunpack.c.l.b16 %v3267
          %v4448 = vunpack.c.h.b16 %v3267
          %v4449 = vunpack.c.l.b16 %v3268
          %v4450 = vunpack.c.h.b16 %v3268
          %v4451 = vunpack.c.l.b16 %v3269
          %v4452 = vunpack.c.h.b16 %v3269
          %v4453 = vunpack.c.l.b16 %v3270
          %v4454 = vunpack.c.h.b16 %v3270
          %v4455 = vunpack.c.l.b16 %v3271
          %v4456 = vunpack.c.h.b16 %v3271
          %v4457 = vunpack.c.l.b16 %v3272
          %v4458 = vunpack.c.h.b16 %v3272
          %v4459 = vunpack.c.l.b16 %v3273
          %v4460 = vunpack.c.h.b16 %v3273
          %v4461 = vunpack.c.l.b16 %v3274
          %v4462 = vunpack.c.h.b16 %v3274
          %v4463 = vunpack.c.l.b16 %v3275
          %v4464 = vunpack.c.h.b16 %v3275
          %v4465 = vunpack.c.l.b16 %v3276
          %v4466 = vunpack.c.h.b16 %v3276
          %v4467 = vunpack.c.l.b16 %v3277
          %v4468 = vunpack.c.h.b16 %v3277
          %v4469 = vunpack.c.l.b16 %v3278
          %v4470 = vunpack.c.h.b16 %v3278
          %v4471 = vunpack.c.l.b16 %v3279
          %v4472 = vunpack.c.h.b16 %v3279
          %v4473 = vunpack.c.l.b16 %v3280
          %v4474 = vunpack.c.h.b16 %v3280
          %v4475 = vunpack.c.l.b16 %v3281
          %v4476 = vunpack.c.h.b16 %v3281
          %v4477 = vunpack.c.l.b16 %v3282
          %v4478 = vunpack.c.h.b16 %v3282
          %v4479 = vunpack.c.l.b16 %v3283
          %v4480 = vunpack.c.h.b16 %v3283
          %v4481 = vunpack.c.l.b16 %v3284
          %v4482 = vunpack.c.h.b16 %v3284
          %v4483 = vunpack.c.l.b16 %v3285
          %v4484 = vunpack.c.h.b16 %v3285
          %v4485 = vunpack.c.l.b16 %v3286
          %v4486 = vunpack.c.h.b16 %v3286
          %v4487 = vunpack.c.l.b16 %v3287
          %v4488 = vunpack.c.h.b16 %v3287
          %v4489 = vunpack.c.l.b16 %v3288
          %v4490 = vunpack.c.h.b16 %v3288
          %v4491 = vunpack.c.l.b16 %v3289
          %v4492 = vunpack.c.h.b16 %v3289
          %v4493 = vunpack.c.l.b16 %v3290
          %v4494 = vunpack.c.h.b16 %v3290
          %v4495 = vunpack.c.l.b16 %v3291
          %v4496 = vunpack.c.h.b16 %v3291
          %v4497 = vunpack.c.l.b16 %v3292
          %v4498 = vunpack.c.h.b16 %v3292
          %v4499 = vunpack.c.l.b16 %v3293
          %v4500 = vunpack.c.h.b16 %v3293
          %v4501 = vunpack.c.l.b16 %v3294
          %v4502 = vunpack.c.h.b16 %v3294
          %v4503 = vunpack.c.l.b16 %v3295
          %v4504 = vunpack.c.h.b16 %v3295
          %v4505 = vunpack.c.l.b16 %v3296
          %v4506 = vunpack.c.h.b16 %v3296
          %v4507 = vunpack.c.l.b16 %v3297
          %v4508 = vunpack.c.h.b16 %v3297
          %v4509 = vunpack.c.l.b16 %v3298
          %v4510 = vunpack.c.h.b16 %v3298
          %v4511 = vunpack.c.l.b16 %v3299
          %v4512 = vunpack.c.h.b16 %v3299
          %v4513 = vunpack.c.l.b16 %v3300
          %v4514 = vunpack.c.h.b16 %v3300
          %v4515 = vunpack.c.l.b16 %v3301
          %v4516 = vunpack.c.h.b16 %v3301
          %v4517 = vunpack.c.l.b16 %v3302
          %v4518 = vunpack.c.h.b16 %v3302
          %v4519 = vunpack.c.l.b16 %v3303
          %v4520 = vunpack.c.h.b16 %v3303
          %v4521 = vunpack.c.l.b16 %v3304
          %v4522 = vunpack.c.h.b16 %v3304
          %v4523 = vunpack.c.l.b16 %v3305
          %v4524 = vunpack.c.h.b16 %v3305
          %v4525 = vunpack.c.l.b16 %v3306
          %v4526 = vunpack.c.h.b16 %v3306
          %v4527 = vunpack.c.l.b16 %v3307
          %v4528 = vunpack.c.h.b16 %v3307
          %v4529 = vunpack.c.l.b16 %v3308
          %v4530 = vunpack.c.h.b16 %v3308
          %v4531 = vunpack.c.l.b16 %v3309
          %v4532 = vunpack.c.h.b16 %v3309
          %v4533 = vunpack.c.l.b16 %v3310
          %v4534 = vunpack.c.h.b16 %v3310
          %v4535 = vunpack.c.l.b16 %v3311
          %v4536 = vunpack.c.h.b16 %v3311
          %v4537 = vunpack.c.l.b16 %v3312
          %v4538 = vunpack.c.h.b16 %v3312
          %v4539 = vunpack.c.l.b16 %v3313
          %v4540 = vunpack.c.h.b16 %v3313
          %v4541 = vunpack.c.l.b16 %v3314
          %v4542 = vunpack.c.h.b16 %v3314
          %v4543 = vunpack.c.l.b16 %v3315
          %v4544 = vunpack.c.h.b16 %v3315
          %v4545 = vunpack.c.l.b16 %v3316
          %v4546 = vunpack.c.h.b16 %v3316
          %v4547 = vunpack.c.l.b16 %v3317
          %v4548 = vunpack.c.h.b16 %v3317
          %v4549 = vunpack.c.l.b16 %v3318
          %v4550 = vunpack.c.h.b16 %v3318
          %v4551 = vunpack.c.l.b16 %v3319
          %v4552 = vunpack.c.h.b16 %v3319
          %v4553 = vunpack.c.l.b16 %v3320
          %v4554 = vunpack.c.h.b16 %v3320
          %v4555 = vunpack.c.l.b16 %v3321
          %v4556 = vunpack.c.h.b16 %v3321
          %v4557 = vpack.c.b16 %v3921, %v3917
          %v4558 = vpack.c.b16 %v3922, %v3918
          %v4559 = vpack.c.b16 %v3923, %v3919
          %v4560 = vpack.c.b16 %v3924, %v3920
          %v4561 = vpack.c.b16 %v3929, %v3925
          %v4562 = vpack.c.b16 %v3930, %v3926
          %v4563 = vpack.c.b16 %v3931, %v3927
          %v4564 = vpack.c.b16 %v3932, %v3928
          %v4565 = vpack.c.b16 %v3937, %v3933
          %v4566 = vpack.c.b16 %v3938, %v3934
          %v4567 = vpack.c.b16 %v3939, %v3935
          %v4568 = vpack.c.b16 %v3940, %v3936
          %v4569 = vpack.c.b16 %v3945, %v3941
          %v4570 = vpack.c.b16 %v3946, %v3942
          %v4571 = vpack.c.b16 %v3947, %v3943
          %v4572 = vpack.c.b16 %v3948, %v3944
          %v4573 = vpack.c.b16 %v3953, %v3949
          %v4574 = vpack.c.b16 %v3954, %v3950
          %v4575 = vpack.c.b16 %v3955, %v3951
          %v4576 = vpack.c.b16 %v3956, %v3952
          %v4577 = vpack.c.b16 %v3961, %v3957
          %v4578 = vpack.c.b16 %v3962, %v3958
          %v4579 = vpack.c.b16 %v3963, %v3959
          %v4580 = vpack.c.b16 %v3964, %v3960
          %v4581 = vpack.c.b16 %v3969, %v3965
          %v4582 = vpack.c.b16 %v3970, %v3966
          %v4583 = vpack.c.b16 %v3971, %v3967
          %v4584 = vpack.c.b16 %v3972, %v3968
          %v4585 = vpack.c.b16 %v3977, %v3973
          %v4586 = vpack.c.b16 %v3978, %v3974
          %v4587 = vpack.c.b16 %v3979, %v3975
          %v4588 = vpack.c.b16 %v3980, %v3976
          %v4589 = vpack.c.b16 %v3985, %v3981
          %v4590 = vpack.c.b16 %v3986, %v3982
          %v4591 = vpack.c.b16 %v3987, %v3983
          %v4592 = vpack.c.b16 %v3988, %v3984
          %v4593 = vpack.c.b16 %v3993, %v3989
          %v4594 = vpack.c.b16 %v3994, %v3990
          %v4595 = vpack.c.b16 %v3995, %v3991
          %v4596 = vpack.c.b16 %v3996, %v3992
          %v4597 = vpack.c.b16 %v4001, %v3997
          %v4598 = vpack.c.b16 %v4002, %v3998
          %v4599 = vpack.c.b16 %v4003, %v3999
          %v4600 = vpack.c.b16 %v4004, %v4000
          %v4601 = vpack.c.b16 %v4009, %v4005
          %v4602 = vpack.c.b16 %v4010, %v4006
          %v4603 = vpack.c.b16 %v4011, %v4007
          %v4604 = vpack.c.b16 %v4012, %v4008
          %v4605 = vpack.c.b16 %v4017, %v4013
          %v4606 = vpack.c.b16 %v4018, %v4014
          %v4607 = vpack.c.b16 %v4019, %v4015
          %v4608 = vpack.c.b16 %v4020, %v4016
          %v4609 = vpack.c.b16 %v4025, %v4021
          %v4610 = vpack.c.b16 %v4026, %v4022
          %v4611 = vpack.c.b16 %v4027, %v4023
          %v4612 = vpack.c.b16 %v4028, %v4024
          %v4613 = vpack.c.b16 %v4033, %v4029
          %v4614 = vpack.c.b16 %v4034, %v4030
          %v4615 = vpack.c.b16 %v4035, %v4031
          %v4616 = vpack.c.b16 %v4036, %v4032
          %v4617 = vpack.c.b16 %v4041, %v4037
          %v4618 = vpack.c.b16 %v4042, %v4038
          %v4619 = vpack.c.b16 %v4043, %v4039
          %v4620 = vpack.c.b16 %v4044, %v4040
          %v4621 = vpack.c.b16 %v4049, %v4045
          %v4622 = vpack.c.b16 %v4050, %v4046
          %v4623 = vpack.c.b16 %v4051, %v4047
          %v4624 = vpack.c.b16 %v4052, %v4048
          %v4625 = vpack.c.b16 %v4057, %v4053
          %v4626 = vpack.c.b16 %v4058, %v4054
          %v4627 = vpack.c.b16 %v4059, %v4055
          %v4628 = vpack.c.b16 %v4060, %v4056
          %v4629 = vpack.c.b16 %v4065, %v4061
          %v4630 = vpack.c.b16 %v4066, %v4062
          %v4631 = vpack.c.b16 %v4067, %v4063
          %v4632 = vpack.c.b16 %v4068, %v4064
          %v4633 = vpack.c.b16 %v4073, %v4069
          %v4634 = vpack.c.b16 %v4074, %v4070
          %v4635 = vpack.c.b16 %v4075, %v4071
          %v4636 = vpack.c.b16 %v4076, %v4072
          %v4637 = vpack.c.b16 %v4081, %v4077
          %v4638 = vpack.c.b16 %v4082, %v4078
          %v4639 = vpack.c.b16 %v4083, %v4079
          %v4640 = vpack.c.b16 %v4084, %v4080
          %v4641 = vpack.c.b16 %v4089, %v4085
          %v4642 = vpack.c.b16 %v4090, %v4086
          %v4643 = vpack.c.b16 %v4091, %v4087
          %v4644 = vpack.c.b16 %v4092, %v4088
          %v4645 = vpack.c.b16 %v4097, %v4093
          %v4646 = vpack.c.b16 %v4098, %v4094
          %v4647 = vpack.c.b16 %v4099, %v4095
          %v4648 = vpack.c.b16 %v4100, %v4096
          %v4649 = vpack.c.b16 %v4105, %v4101
          %v4650 = vpack.c.b16 %v4106, %v4102
          %v4651 = vpack.c.b16 %v4107, %v4103
          %v4652 = vpack.c.b16 %v4108, %v4104
          %v4653 = vpack.c.b16 %v4113, %v4109
          %v4654 = vpack.c.b16 %v4114, %v4110
          %v4655 = vpack.c.b16 %v4115, %v4111
          %v4656 = vpack.c.b16 %v4116, %v4112
          %v4657 = vpack.c.b16 %v4121, %v4117
          %v4658 = vpack.c.b16 %v4122, %v4118
          %v4659 = vpack.c.b16 %v4123, %v4119
          %v4660 = vpack.c.b16 %v4124, %v4120
          %v4661 = vpack.c.b16 %v4129, %v4125
          %v4662 = vpack.c.b16 %v4130, %v4126
          %v4663 = vpack.c.b16 %v4131, %v4127
          %v4664 = vpack.c.b16 %v4132, %v4128
          %v4665 = vpack.c.b16 %v4137, %v4133
          %v4666 = vpack.c.b16 %v4138, %v4134
          %v4667 = vpack.c.b16 %v4139, %v4135
          %v4668 = vpack.c.b16 %v4140, %v4136
          %v4669 = vpack.c.b16 %v4145, %v4141
          %v4670 = vpack.c.b16 %v4146, %v4142
          %v4671 = vpack.c.b16 %v4147, %v4143
          %v4672 = vpack.c.b16 %v4148, %v4144
          %v4673 = vpack.c.b16 %v4153, %v4149
          %v4674 = vpack.c.b16 %v4154, %v4150
          %v4675 = vpack.c.b16 %v4155, %v4151
          %v4676 = vpack.c.b16 %v4156, %v4152
          %v4677 = vpack.c.b16 %v4161, %v4157
          %v4678 = vpack.c.b16 %v4162, %v4158
          %v4679 = vpack.c.b16 %v4163, %v4159
          %v4680 = vpack.c.b16 %v4164, %v4160
          %v4681 = vpack.c.b16 %v4169, %v4165
          %v4682 = vpack.c.b16 %v4170, %v4166
          %v4683 = vpack.c.b16 %v4171, %v4167
          %v4684 = vpack.c.b16 %v4172, %v4168
          %v4685 = vpack.c.b16 %v4177, %v4173
          %v4686 = vpack.c.b16 %v4178, %v4174
          %v4687 = vpack.c.b16 %v4179, %v4175
          %v4688 = vpack.c.b16 %v4180, %v4176
          %v4689 = vpack.c.b16 %v4185, %v4181
          %v4690 = vpack.c.b16 %v4186, %v4182
          %v4691 = vpack.c.b16 %v4187, %v4183
          %v4692 = vpack.c.b16 %v4188, %v4184
          %v4693 = vpack.c.b16 %v4193, %v4189
          %v4694 = vpack.c.b16 %v4194, %v4190
          %v4695 = vpack.c.b16 %v4195, %v4191
          %v4696 = vpack.c.b16 %v4196, %v4192
          %v4697 = vpack.c.b16 %v4201, %v4197
          %v4698 = vpack.c.b16 %v4202, %v4198
          %v4699 = vpack.c.b16 %v4203, %v4199
          %v4700 = vpack.c.b16 %v4204, %v4200
          %v4701 = vpack.c.b16 %v4209, %v4205
          %v4702 = vpack.c.b16 %v4210, %v4206
          %v4703 = vpack.c.b16 %v4211, %v4207
          %v4704 = vpack.c.b16 %v4212, %v4208
          %v4705 = vpack.c.b16 %v4217, %v4213
          %v4706 = vpack.c.b16 %v4218, %v4214
          %v4707 = vpack.c.b16 %v4219, %v4215
          %v4708 = vpack.c.b16 %v4220, %v4216
          %v4709 = vpack.c.b16 %v4225, %v4221
          %v4710 = vpack.c.b16 %v4226, %v4222
          %v4711 = vpack.c.b16 %v4227, %v4223
          %v4712 = vpack.c.b16 %v4228, %v4224
          %v4713 = vpack.c.b16 %v4233, %v4229
          %v4714 = vpack.c.b16 %v4234, %v4230
          %v4715 = vpack.c.b16 %v4235, %v4231
          %v4716 = vpack.c.b16 %v4236, %v4232
          %v4717 = vpack.c.b16 %v4241, %v4237
          %v4718 = vpack.c.b16 %v4242, %v4238
          %v4719 = vpack.c.b16 %v4243, %v4239
          %v4720 = vpack.c.b16 %v4244, %v4240
          %v4721 = vpack.c.b16 %v4249, %v4245
          %v4722 = vpack.c.b16 %v4250, %v4246
          %v4723 = vpack.c.b16 %v4251, %v4247
          %v4724 = vpack.c.b16 %v4252, %v4248
          %v4725 = vpack.c.b16 %v4257, %v4253
          %v4726 = vpack.c.b16 %v4258, %v4254
          %v4727 = vpack.c.b16 %v4259, %v4255
          %v4728 = vpack.c.b16 %v4260, %v4256
          %v4729 = vpack.c.b16 %v4265, %v4261
          %v4730 = vpack.c.b16 %v4266, %v4262
          %v4731 = vpack.c.b16 %v4267, %v4263
          %v4732 = vpack.c.b16 %v4268, %v4264
          %v4733 = vpack.c.b16 %v4273, %v4269
          %v4734 = vpack.c.b16 %v4274, %v4270
          %v4735 = vpack.c.b16 %v4275, %v4271
          %v4736 = vpack.c.b16 %v4276, %v4272
          %v4737 = vpack.c.b16 %v4281, %v4277
          %v4738 = vpack.c.b16 %v4282, %v4278
          %v4739 = vpack.c.b16 %v4283, %v4279
          %v4740 = vpack.c.b16 %v4284, %v4280
          %v4741 = vpack.c.b16 %v4289, %v4285
          %v4742 = vpack.c.b16 %v4290, %v4286
          %v4743 = vpack.c.b16 %v4291, %v4287
          %v4744 = vpack.c.b16 %v4292, %v4288
          %v4745 = vpack.c.b16 %v4297, %v4293
          %v4746 = vpack.c.b16 %v4298, %v4294
          %v4747 = vpack.c.b16 %v4299, %v4295
          %v4748 = vpack.c.b16 %v4300, %v4296
          %v4749 = vpack.c.b16 %v4305, %v4301
          %v4750 = vpack.c.b16 %v4306, %v4302
          %v4751 = vpack.c.b16 %v4307, %v4303
          %v4752 = vpack.c.b16 %v4308, %v4304
          %v4753 = vpack.c.b16 %v4313, %v4309
          %v4754 = vpack.c.b16 %v4314, %v4310
          %v4755 = vpack.c.b16 %v4315, %v4311
          %v4756 = vpack.c.b16 %v4316, %v4312
          %v4757 = vpack.c.b16 %v4321, %v4317
          %v4758 = vpack.c.b16 %v4322, %v4318
          %v4759 = vpack.c.b16 %v4323, %v4319
          %v4760 = vpack.c.b16 %v4324, %v4320
          %v4761 = vpack.c.b16 %v4329, %v4325
          %v4762 = vpack.c.b16 %v4330, %v4326
          %v4763 = vpack.c.b16 %v4331, %v4327
          %v4764 = vpack.c.b16 %v4332, %v4328
          %v4765 = vpack.c.b16 %v4337, %v4333
          %v4766 = vpack.c.b16 %v4338, %v4334
          %v4767 = vpack.c.b16 %v4339, %v4335
          %v4768 = vpack.c.b16 %v4340, %v4336
          %v4769 = vpack.c.b16 %v4345, %v4341
          %v4770 = vpack.c.b16 %v4346, %v4342
          %v4771 = vpack.c.b16 %v4347, %v4343
          %v4772 = vpack.c.b16 %v4348, %v4344
          %v4773 = vpack.c.b16 %v4353, %v4349
          %v4774 = vpack.c.b16 %v4354, %v4350
          %v4775 = vpack.c.b16 %v4355, %v4351
          %v4776 = vpack.c.b16 %v4356, %v4352
          %v4777 = vpack.c.b16 %v4361, %v4357
          %v4778 = vpack.c.b16 %v4362, %v4358
          %v4779 = vpack.c.b16 %v4363, %v4359
          %v4780 = vpack.c.b16 %v4364, %v4360
          %v4781 = vpack.c.b16 %v4369, %v4365
          %v4782 = vpack.c.b16 %v4370, %v4366
          %v4783 = vpack.c.b16 %v4371, %v4367
          %v4784 = vpack.c.b16 %v4372, %v4368
          %v4785 = vpack.c.b16 %v4377, %v4373
          %v4786 = vpack.c.b16 %v4378, %v4374
          %v4787 = vpack.c.b16 %v4379, %v4375
          %v4788 = vpack.c.b16 %v4380, %v4376
          %v4789 = vpack.c.b16 %v4385, %v4381
          %v4790 = vpack.c.b16 %v4386, %v4382
          %v4791 = vpack.c.b16 %v4387, %v4383
          %v4792 = vpack.c.b16 %v4388, %v4384
          %v4793 = vpack.c.b16 %v4393, %v4389
          %v4794 = vpack.c.b16 %v4394, %v4390
          %v4795 = vpack.c.b16 %v4395, %v4391
          %v4796 = vpack.c.b16 %v4396, %v4392
          %v4797 = vpack.c.b16 %v4401, %v4397
          %v4798 = vpack.c.b16 %v4402, %v4398
          %v4799 = vpack.c.b16 %v4403, %v4399
          %v4800 = vpack.c.b16 %v4404, %v4400
          %v4801 = vpack.c.b16 %v4409, %v4405
          %v4802 = vpack.c.b16 %v4410, %v4406
          %v4803 = vpack.c.b16 %v4411, %v4407
          %v4804 = vpack.c.b16 %v4412, %v4408
          %v4805 = vpack.c.b16 %v4417, %v4413
          %v4806 = vpack.c.b16 %v4418, %v4414
          %v4807 = vpack.c.b16 %v4419, %v4415
          %v4808 = vpack.c.b16 %v4420, %v4416
          %v4809 = vpack.c.b16 %v4425, %v4421
          %v4810 = vpack.c.b16 %v4426, %v4422
          %v4811 = vpack.c.b16 %v4427, %v4423
          %v4812 = vpack.c.b16 %v4428, %v4424
          %v4813 = vpack.c.b16 %v4433, %v4429
          %v4814 = vpack.c.b16 %v4434, %v4430
          %v4815 = vpack.c.b16 %v4435, %v4431
          %v4816 = vpack.c.b16 %v4436, %v4432
          %v4817 = vpack.c.b16 %v4441, %v4437
          %v4818 = vpack.c.b16 %v4442, %v4438
          %v4819 = vpack.c.b16 %v4443, %v4439
          %v4820 = vpack.c.b16 %v4444, %v4440
          %v4821 = vpack.c.b16 %v4449, %v4445
          %v4822 = vpack.c.b16 %v4450, %v4446
          %v4823 = vpack.c.b16 %v4451, %v4447
          %v4824 = vpack.c.b16 %v4452, %v4448
          %v4825 = vpack.c.b16 %v4457, %v4453
          %v4826 = vpack.c.b16 %v4458, %v4454
          %v4827 = vpack.c.b16 %v4459, %v4455
          %v4828 = vpack.c.b16 %v4460, %v4456
          %v4829 = vpack.c.b16 %v4465, %v4461
          %v4830 = vpack.c.b16 %v4466, %v4462
          %v4831 = vpack.c.b16 %v4467, %v4463
          %v4832 = vpack.c.b16 %v4468, %v4464
          %v4833 = vpack.c.b16 %v4473, %v4469
          %v4834 = vpack.c.b16 %v4474, %v4470
          %v4835 = vpack.c.b16 %v4475, %v4471
          %v4836 = vpack.c.b16 %v4476, %v4472
          %v4837 = vpack.c.b16 %v4481, %v4477
          %v4838 = vpack.c.b16 %v4482, %v4478
          %v4839 = vpack.c.b16 %v4483, %v4479
          %v4840 = vpack.c.b16 %v4484, %v4480
          %v4841 = vpack.c.b16 %v4489, %v4485
          %v4842 = vpack.c.b16 %v4490, %v4486
          %v4843 = vpack.c.b16 %v4491, %v4487
          %v4844 = vpack.c.b16 %v4492, %v4488
          %v4845 = vpack.c.b16 %v4497, %v4493
          %v4846 = vpack.c.b16 %v4498, %v4494
          %v4847 = vpack.c.b16 %v4499, %v4495
          %v4848 = vpack.c.b16 %v4500, %v4496
          %v4849 = vpack.c.b16 %v4505, %v4501
          %v4850 = vpack.c.b16 %v4506, %v4502
          %v4851 = vpack.c.b16 %v4507, %v4503
          %v4852 = vpack.c.b16 %v4508, %v4504
          %v4853 = vpack.c.b16 %v4513, %v4509
          %v4854 = vpack.c.b16 %v4514, %v4510
          %v4855 = vpack.c.b16 %v4515, %v4511
          %v4856 = vpack.c.b16 %v4516, %v4512
          %v4857 = vpack.c.b16 %v4521, %v4517
          %v4858 = vpack.c.b16 %v4522, %v4518
          %v4859 = vpack.c.b16 %v4523, %v4519
          %v4860 = vpack.c.b16 %v4524, %v4520
          %v4861 = vpack.c.b16 %v4529, %v4525
          %v4862 = vpack.c.b16 %v4530, %v4526
          %v4863 = vpack.c.b16 %v4531, %v4527
          %v4864 = vpack.c.b16 %v4532, %v4528
          %v4865 = vpack.c.b16 %v4537, %v4533
          %v4866 = vpack.c.b16 %v4538, %v4534
          %v4867 = vpack.c.b16 %v4539, %v4535
          %v4868 = vpack.c.b16 %v4540, %v4536
          %v4869 = vpack.c.b16 %v4545, %v4541
          %v4870 = vpack.c.b16 %v4546, %v4542
          %v4871 = vpack.c.b16 %v4547, %v4543
          %v4872 = vpack.c.b16 %v4548, %v4544
          %v4873 = vpack.c.b16 %v4553, %v4549
          %v4874 = vpack.c.b16 %v4554, %v4550
          %v4875 = vpack.c.b16 %v4555, %v4551
          %v4876 = vpack.c.b16 %v4556, %v4552
          %5197 = vmatprep.subr.bf16.mxu0 %v4558
          %5198 = vmatpush1.bf16.msra.mxu0 %v4557
          %5199 = vmatprep.subr.bf16.mxu0 %v4562
          %5200 = vmatpush1.bf16.msra.mxu0 %v4561
          %5201 = vmatprep.subr.bf16.mxu0 %v4566
          %5202 = vmatpush1.bf16.msra.mxu0 %v4565
          %5203 = vmatprep.subr.bf16.mxu0 %v4570
          %5204 = vmatpush1.bf16.msra.mxu0 %v4569
          %5205 = vmatprep.subr.bf16.mxu0 %v4574
          %5206 = vmatpush1.bf16.msra.mxu0 %v4573
          %5207 = vmatprep.subr.bf16.mxu0 %v4578
          %5208 = vmatpush1.bf16.msra.mxu0 %v4577
          %5209 = vmatprep.subr.bf16.mxu0 %v4582
          %5210 = vmatpush1.bf16.msra.mxu0 %v4581
          %5211 = vmatprep.subr.bf16.mxu0 %v4586
          %5212 = vmatpush1.bf16.msra.mxu0 %v4585
          %5213 = vmatprep.subr.bf16.mxu0 %v4590
          %5214 = vmatpush1.bf16.msra.mxu0 %v4589
          %5215 = vmatprep.subr.bf16.mxu0 %v4594
          %5216 = vmatpush1.bf16.msra.mxu0 %v4593
          %5217 = vmatprep.subr.bf16.mxu0 %v4598
          %5218 = vmatpush1.bf16.msra.mxu0 %v4597
          %5219 = vmatprep.subr.bf16.mxu0 %v4602
          %5220 = vmatpush1.bf16.msra.mxu0 %v4601
          %5221 = vmatprep.subr.bf16.mxu0 %v4606
          %5222 = vmatpush1.bf16.msra.mxu0 %v4605
          %5223 = vmatprep.subr.bf16.mxu0 %v4610
          %5224 = vmatpush1.bf16.msra.mxu0 %v4609
          %5225 = vmatprep.subr.bf16.mxu0 %v4614
          %5226 = vmatpush1.bf16.msra.mxu0 %v4613
          %5227 = vmatprep.subr.bf16.mxu0 %v4618
          %5228 = vmatpush1.bf16.msra.mxu0 %v4617
          %5229 = vmatprep.mubr.bf16.mxu0 %v2993
          %5230 = vmatmul.mubr.bf16.gmra.mrb[0].mxu0 %v2992
          %v5231 = vpop.f32.mrb[0].mxu0
          %v5232 = vadd.f32 %v3550, %v5231
          %v5233 = vpop.f32.mrb[0].mxu0
          %v5234 = vadd.f32 %v3552, %v5233
          %v5235 = vpop.f32.mrb[0].mxu0
          %v5236 = vpop.f32.mrb[0].mxu0
          %5237 = vdwg.mxu0
          %5238 = vmatprep.subr.bf16.mxu0 %v4622
          %5239 = vmatpush1.bf16.msra.mxu0 %v4621
          %5240 = vmatprep.subr.bf16.mxu0 %v4626
          %5241 = vmatpush1.bf16.msra.mxu0 %v4625
          %5242 = vmatprep.subr.bf16.mxu0 %v4630
          %5243 = vmatpush1.bf16.msra.mxu0 %v4629
          %5244 = vmatprep.subr.bf16.mxu0 %v4634
          %5245 = vmatpush1.bf16.msra.mxu0 %v4633
          %5246 = vmatprep.subr.bf16.mxu0 %v4638
          %5247 = vmatpush1.bf16.msra.mxu0 %v4637
          %5248 = vmatprep.subr.bf16.mxu0 %v4642
          %5249 = vmatpush1.bf16.msra.mxu0 %v4641
          %5250 = vmatprep.subr.bf16.mxu0 %v4646
          %5251 = vmatpush1.bf16.msra.mxu0 %v4645
          %5252 = vmatprep.subr.bf16.mxu0 %v4650
          %5253 = vmatpush1.bf16.msra.mxu0 %v4649
          %5254 = vmatprep.subr.bf16.mxu0 %v4654
          %5255 = vmatpush1.bf16.msra.mxu0 %v4653
          %5256 = vmatprep.subr.bf16.mxu0 %v4658
          %5257 = vmatpush1.bf16.msra.mxu0 %v4657
          %5258 = vmatprep.subr.bf16.mxu0 %v4662
          %5259 = vmatpush1.bf16.msra.mxu0 %v4661
          %5260 = vmatprep.subr.bf16.mxu0 %v4666
          %5261 = vmatpush1.bf16.msra.mxu0 %v4665
          %5262 = vmatprep.subr.bf16.mxu0 %v4670
          %5263 = vmatpush1.bf16.msra.mxu0 %v4669
          %5264 = vmatprep.subr.bf16.mxu0 %v4674
          %5265 = vmatpush1.bf16.msra.mxu0 %v4673
          %5266 = vmatprep.subr.bf16.mxu0 %v4678
          %5267 = vmatpush1.bf16.msra.mxu0 %v4677
          %5268 = vmatprep.subr.bf16.mxu0 %v4682
          %5269 = vmatpush1.bf16.msra.mxu0 %v4681
          %5270 = vmatprep.mubr.bf16.mxu0 %v2995
          %5271 = vmatmul.mubr.bf16.gmra.mrb[0].mxu0 %v2994
          %v5272 = vpop.f32.mrb[0].mxu0
          %v5273 = vadd.f32 %v5232, %v5272
          %v5274 = vpop.f32.mrb[0].mxu0
          %v5275 = vadd.f32 %v5234, %v5274
          %v5276 = vpop.f32.mrb[0].mxu0
          %v5277 = vpop.f32.mrb[0].mxu0
          %5278 = vdwg.mxu0
          %5279 = vmatprep.subr.bf16.mxu0 %v4686
          %5280 = vmatpush1.bf16.msra.mxu0 %v4685
          %5281 = vmatprep.subr.bf16.mxu0 %v4690
          %5282 = vmatpush1.bf16.msra.mxu0 %v4689
          %5283 = vmatprep.subr.bf16.mxu0 %v4694
          %5284 = vmatpush1.bf16.msra.mxu0 %v4693
          %5285 = vmatprep.subr.bf16.mxu0 %v4698
          %5286 = vmatpush1.bf16.msra.mxu0 %v4697
          %5287 = vmatprep.subr.bf16.mxu0 %v4702
          %5288 = vmatpush1.bf16.msra.mxu0 %v4701
          %5289 = vmatprep.subr.bf16.mxu0 %v4706
          %5290 = vmatpush1.bf16.msra.mxu0 %v4705
          %5291 = vmatprep.subr.bf16.mxu0 %v4710
          %5292 = vmatpush1.bf16.msra.mxu0 %v4709
          %5293 = vmatprep.subr.bf16.mxu0 %v4714
          %5294 = vmatpush1.bf16.msra.mxu0 %v4713
          %5295 = vmatprep.subr.bf16.mxu0 %v4718
          %5296 = vmatpush1.bf16.msra.mxu0 %v4717
          %5297 = vmatprep.subr.bf16.mxu0 %v4722
          %5298 = vmatpush1.bf16.msra.mxu0 %v4721
          %5299 = vmatprep.subr.bf16.mxu0 %v4726
          %5300 = vmatpush1.bf16.msra.mxu0 %v4725
          %5301 = vmatprep.subr.bf16.mxu0 %v4730
          %5302 = vmatpush1.bf16.msra.mxu0 %v4729
          %5303 = vmatprep.subr.bf16.mxu0 %v4734
          %5304 = vmatpush1.bf16.msra.mxu0 %v4733
          %5305 = vmatprep.subr.bf16.mxu0 %v4738
          %5306 = vmatpush1.bf16.msra.mxu0 %v4737
          %5307 = vmatprep.subr.bf16.mxu0 %v4742
          %5308 = vmatpush1.bf16.msra.mxu0 %v4741
          %5309 = vmatprep.subr.bf16.mxu0 %v4746
          %5310 = vmatpush1.bf16.msra.mxu0 %v4745
          %5311 = vmatprep.mubr.bf16.mxu0 %v2997
          %5312 = vmatmul.mubr.bf16.gmra.mrb[0].mxu0 %v2996
          %v5313 = vpop.f32.mrb[0].mxu0
          %v5314 = vadd.f32 %v5273, %v5313
          %v5315 = vpop.f32.mrb[0].mxu0
          %v5316 = vadd.f32 %v5275, %v5315
          %v5317 = vpop.f32.mrb[0].mxu0
          %v5318 = vpop.f32.mrb[0].mxu0
          %5319 = vdwg.mxu0
          %5320 = vmatprep.subr.bf16.mxu0 %v4750
          %5321 = vmatpush1.bf16.msra.mxu0 %v4749
          %5322 = vmatprep.subr.bf16.mxu0 %v4754
          %5323 = vmatpush1.bf16.msra.mxu0 %v4753
          %5324 = vmatprep.subr.bf16.mxu0 %v4758
          %5325 = vmatpush1.bf16.msra.mxu0 %v4757
          %5326 = vmatprep.subr.bf16.mxu0 %v4762
          %5327 = vmatpush1.bf16.msra.mxu0 %v4761
          %5328 = vmatprep.subr.bf16.mxu0 %v4766
          %5329 = vmatpush1.bf16.msra.mxu0 %v4765
          %5330 = vmatprep.subr.bf16.mxu0 %v4770
          %5331 = vmatpush1.bf16.msra.mxu0 %v4769
          %5332 = vmatprep.subr.bf16.mxu0 %v4774
          %5333 = vmatpush1.bf16.msra.mxu0 %v4773
          %5334 = vmatprep.subr.bf16.mxu0 %v4778
          %5335 = vmatpush1.bf16.msra.mxu0 %v4777
          %5336 = vmatprep.subr.bf16.mxu0 %v4782
          %5337 = vmatpush1.bf16.msra.mxu0 %v4781
          %5338 = vmatprep.subr.bf16.mxu0 %v4786
          %5339 = vmatpush1.bf16.msra.mxu0 %v4785
          %5340 = vmatprep.subr.bf16.mxu0 %v4790
          %5341 = vmatpush1.bf16.msra.mxu0 %v4789
          %5342 = vmatprep.subr.bf16.mxu0 %v4794
          %5343 = vmatpush1.bf16.msra.mxu0 %v4793
          %5344 = vmatprep.subr.bf16.mxu0 %v4798
          %5345 = vmatpush1.bf16.msra.mxu0 %v4797
          %5346 = vmatprep.subr.bf16.mxu0 %v4802
          %5347 = vmatpush1.bf16.msra.mxu0 %v4801
          %5348 = vmatprep.subr.bf16.mxu0 %v4806
          %5349 = vmatpush1.bf16.msra.mxu0 %v4805
          %5350 = vmatprep.subr.bf16.mxu0 %v4810
          %5351 = vmatpush1.bf16.msra.mxu0 %v4809
          %5352 = vmatprep.mubr.bf16.mxu0 %v2999
          %5353 = vmatmul.mubr.bf16.gmra.mrb[0].mxu0 %v2998
          %v5354 = vpop.f32.mrb[0].mxu0
          %v5355 = vadd.f32 %v5314, %v5354
          %v5356 = vpop.f32.mrb[0].mxu0
          %v5357 = vadd.f32 %v5316, %v5356
          %v5358 = vpop.f32.mrb[0].mxu0
          %v5359 = vpop.f32.mrb[0].mxu0
          %5360 = vdwg.mxu0
          %5361 = vmatprep.subr.bf16.mxu0 %v4814
          %5362 = vmatpush1.bf16.msra.mxu0 %v4813
          %5363 = vmatprep.subr.bf16.mxu0 %v4818
          %5364 = vmatpush1.bf16.msra.mxu0 %v4817
          %5365 = vmatprep.subr.bf16.mxu0 %v4822
          %5366 = vmatpush1.bf16.msra.mxu0 %v4821
          %5367 = vmatprep.subr.bf16.mxu0 %v4826
          %5368 = vmatpush1.bf16.msra.mxu0 %v4825
          %5369 = vmatprep.subr.bf16.mxu0 %v4830
          %5370 = vmatpush1.bf16.msra.mxu0 %v4829
          %5371 = vmatprep.subr.bf16.mxu0 %v4834
          %5372 = vmatpush1.bf16.msra.mxu0 %v4833
          %5373 = vmatprep.subr.bf16.mxu0 %v4838
          %5374 = vmatpush1.bf16.msra.mxu0 %v4837
          %5375 = vmatprep.subr.bf16.mxu0 %v4842
          %5376 = vmatpush1.bf16.msra.mxu0 %v4841
          %5377 = vmatprep.subr.bf16.mxu0 %v4846
          %5378 = vmatpush1.bf16.msra.mxu0 %v4845
          %5379 = vmatprep.subr.bf16.mxu0 %v4850
          %5380 = vmatpush1.bf16.msra.mxu0 %v4849
          %5381 = vmatprep.subr.bf16.mxu0 %v4854
          %5382 = vmatpush1.bf16.msra.mxu0 %v4853
          %5383 = vmatprep.subr.bf16.mxu0 %v4858
          %5384 = vmatpush1.bf16.msra.mxu0 %v4857
          %5385 = vmatprep.subr.bf16.mxu0 %v4862
          %5386 = vmatpush1.bf16.msra.mxu0 %v4861
          %5387 = vmatprep.subr.bf16.mxu0 %v4866
          %5388 = vmatpush1.bf16.msra.mxu0 %v4865
          %5389 = vmatprep.subr.bf16.mxu0 %v4870
          %5390 = vmatpush1.bf16.msra.mxu0 %v4869
          %5391 = vmatprep.subr.bf16.mxu0 %v4874
          %5392 = vmatpush1.bf16.msra.mxu0 %v4873
          %5393 = vmatprep.mubr.bf16.mxu0 %v3001
          %5394 = vmatmul.mubr.bf16.gmra.mrb[0].mxu0 %v3000
          %v5395 = vpop.f32.mrb[0].mxu0
          %v5396 = vadd.f32 %v5355, %v5395
          %v5397 = vpop.f32.mrb[0].mxu0
          %v5398 = vadd.f32 %v5357, %v5397
          %v5399 = vpop.f32.mrb[0].mxu0
          %v5400 = vpop.f32.mrb[0].mxu0
          %5401 = vdwg.mxu0
          %5402 = vmatprep.subr.bf16.mxu0 %v4560
          %5403 = vmatpush1.bf16.msra.mxu0 %v4559
          %5404 = vmatprep.subr.bf16.mxu0 %v4564
          %5405 = vmatpush1.bf16.msra.mxu0 %v4563
          %5406 = vmatprep.subr.bf16.mxu0 %v4568
          %5407 = vmatpush1.bf16.msra.mxu0 %v4567
          %5408 = vmatprep.subr.bf16.mxu0 %v4572
          %5409 = vmatpush1.bf16.msra.mxu0 %v4571
          %5410 = vmatprep.subr.bf16.mxu0 %v4576
          %5411 = vmatpush1.bf16.msra.mxu0 %v4575
          %5412 = vmatprep.subr.bf16.mxu0 %v4580
          %5413 = vmatpush1.bf16.msra.mxu0 %v4579
          %5414 = vmatprep.subr.bf16.mxu0 %v4584
          %5415 = vmatpush1.bf16.msra.mxu0 %v4583
          %5416 = vmatprep.subr.bf16.mxu0 %v4588
          %5417 = vmatpush1.bf16.msra.mxu0 %v4587
          %5418 = vmatprep.subr.bf16.mxu0 %v4592
          %5419 = vmatpush1.bf16.msra.mxu0 %v4591
          %5420 = vmatprep.subr.bf16.mxu0 %v4596
          %5421 = vmatpush1.bf16.msra.mxu0 %v4595
          %5422 = vmatprep.subr.bf16.mxu0 %v4600
          %5423 = vmatpush1.bf16.msra.mxu0 %v4599
          %5424 = vmatprep.subr.bf16.mxu0 %v4604
          %5425 = vmatpush1.bf16.msra.mxu0 %v4603
          %5426 = vmatprep.subr.bf16.mxu0 %v4608
          %5427 = vmatpush1.bf16.msra.mxu0 %v4607
          %5428 = vmatprep.subr.bf16.mxu0 %v4612
          %5429 = vmatpush1.bf16.msra.mxu0 %v4611
          %5430 = vmatprep.subr.bf16.mxu0 %v4616
          %5431 = vmatpush1.bf16.msra.mxu0 %v4615
          %5432 = vmatprep.subr.bf16.mxu0 %v4620
          %5433 = vmatpush1.bf16.msra.mxu0 %v4619
          %5434 = vmatprep.mubr.bf16.mxu0 %v2993
          %5435 = vmatmul.mubr.bf16.gmra.mrb[0].mxu0 %v2992
          %v5436 = vpop.f32.mrb[0].mxu0
          %v5437 = vadd.f32 %v3591, %v5436
          %v5438 = vpop.f32.mrb[0].mxu0
          %v5439 = vadd.f32 %v3593, %v5438
          %v5440 = vpop.f32.mrb[0].mxu0
          %v5441 = vpop.f32.mrb[0].mxu0
          %5442 = vdwg.mxu0
          %5443 = vmatprep.subr.bf16.mxu0 %v4624
          %5444 = vmatpush1.bf16.msra.mxu0 %v4623
          %5445 = vmatprep.subr.bf16.mxu0 %v4628
          %5446 = vmatpush1.bf16.msra.mxu0 %v4627
          %5447 = vmatprep.subr.bf16.mxu0 %v4632
          %5448 = vmatpush1.bf16.msra.mxu0 %v4631
          %5449 = vmatprep.subr.bf16.mxu0 %v4636
          %5450 = vmatpush1.bf16.msra.mxu0 %v4635
          %5451 = vmatprep.subr.bf16.mxu0 %v4640
          %5452 = vmatpush1.bf16.msra.mxu0 %v4639
          %5453 = vmatprep.subr.bf16.mxu0 %v4644
          %5454 = vmatpush1.bf16.msra.mxu0 %v4643
          %5455 = vmatprep.subr.bf16.mxu0 %v4648
          %5456 = vmatpush1.bf16.msra.mxu0 %v4647
          %5457 = vmatprep.subr.bf16.mxu0 %v4652
          %5458 = vmatpush1.bf16.msra.mxu0 %v4651
          %5459 = vmatprep.subr.bf16.mxu0 %v4656
          %5460 = vmatpush1.bf16.msra.mxu0 %v4655
          %5461 = vmatprep.subr.bf16.mxu0 %v4660
          %5462 = vmatpush1.bf16.msra.mxu0 %v4659
          %5463 = vmatprep.subr.bf16.mxu0 %v4664
          %5464 = vmatpush1.bf16.msra.mxu0 %v4663
          %5465 = vmatprep.subr.bf16.mxu0 %v4668
          %5466 = vmatpush1.bf16.msra.mxu0 %v4667
          %5467 = vmatprep.subr.bf16.mxu0 %v4672
          %5468 = vmatpush1.bf16.msra.mxu0 %v4671
          %5469 = vmatprep.subr.bf16.mxu0 %v4676
          %5470 = vmatpush1.bf16.msra.mxu0 %v4675
          %5471 = vmatprep.subr.bf16.mxu0 %v4680
          %5472 = vmatpush1.bf16.msra.mxu0 %v4679
          %5473 = vmatprep.subr.bf16.mxu0 %v4684
          %5474 = vmatpush1.bf16.msra.mxu0 %v4683
          %5475 = vmatprep.mubr.bf16.mxu0 %v2995
          %5476 = vmatmul.mubr.bf16.gmra.mrb[0].mxu0 %v2994
          %v5477 = vpop.f32.mrb[0].mxu0
          %v5478 = vadd.f32 %v5437, %v5477
          %v5479 = vpop.f32.mrb[0].mxu0
          %v5480 = vadd.f32 %v5439, %v5479
          %v5481 = vpop.f32.mrb[0].mxu0
          %v5482 = vpop.f32.mrb[0].mxu0
          %5483 = vdwg.mxu0
          %5484 = vmatprep.subr.bf16.mxu0 %v4688
          %5485 = vmatpush1.bf16.msra.mxu0 %v4687
          %5486 = vmatprep.subr.bf16.mxu0 %v4692
          %5487 = vmatpush1.bf16.msra.mxu0 %v4691
          %5488 = vmatprep.subr.bf16.mxu0 %v4696
          %5489 = vmatpush1.bf16.msra.mxu0 %v4695
          %5490 = vmatprep.subr.bf16.mxu0 %v4700
          %5491 = vmatpush1.bf16.msra.mxu0 %v4699
          %5492 = vmatprep.subr.bf16.mxu0 %v4704
          %5493 = vmatpush1.bf16.msra.mxu0 %v4703
          %5494 = vmatprep.subr.bf16.mxu0 %v4708
          %5495 = vmatpush1.bf16.msra.mxu0 %v4707
          %5496 = vmatprep.subr.bf16.mxu0 %v4712
          %5497 = vmatpush1.bf16.msra.mxu0 %v4711
          %5498 = vmatprep.subr.bf16.mxu0 %v4716
          %5499 = vmatpush1.bf16.msra.mxu0 %v4715
          %5500 = vmatprep.subr.bf16.mxu0 %v4720
          %5501 = vmatpush1.bf16.msra.mxu0 %v4719
          %5502 = vmatprep.subr.bf16.mxu0 %v4724
          %5503 = vmatpush1.bf16.msra.mxu0 %v4723
          %5504 = vmatprep.subr.bf16.mxu0 %v4728
          %5505 = vmatpush1.bf16.msra.mxu0 %v4727
          %5506 = vmatprep.subr.bf16.mxu0 %v4732
          %5507 = vmatpush1.bf16.msra.mxu0 %v4731
          %5508 = vmatprep.subr.bf16.mxu0 %v4736
          %5509 = vmatpush1.bf16.msra.mxu0 %v4735
          %5510 = vmatprep.subr.bf16.mxu0 %v4740
          %5511 = vmatpush1.bf16.msra.mxu0 %v4739
          %5512 = vmatprep.subr.bf16.mxu0 %v4744
          %5513 = vmatpush1.bf16.msra.mxu0 %v4743
          %5514 = vmatprep.subr.bf16.mxu0 %v4748
          %5515 = vmatpush1.bf16.msra.mxu0 %v4747
          %5516 = vmatprep.mubr.bf16.mxu0 %v2997
          %5517 = vmatmul.mubr.bf16.gmra.mrb[0].mxu0 %v2996
          %v5518 = vpop.f32.mrb[0].mxu0
          %v5519 = vadd.f32 %v5478, %v5518
          %v5520 = vpop.f32.mrb[0].mxu0
          %v5521 = vadd.f32 %v5480, %v5520
          %v5522 = vpop.f32.mrb[0].mxu0
          %v5523 = vpop.f32.mrb[0].mxu0
          %5524 = vdwg.mxu0
          %5525 = vmatprep.subr.bf16.mxu0 %v4752
          %5526 = vmatpush1.bf16.msra.mxu0 %v4751
          %5527 = vmatprep.subr.bf16.mxu0 %v4756
          %5528 = vmatpush1.bf16.msra.mxu0 %v4755
          %5529 = vmatprep.subr.bf16.mxu0 %v4760
          %5530 = vmatpush1.bf16.msra.mxu0 %v4759
          %5531 = vmatprep.subr.bf16.mxu0 %v4764
          %5532 = vmatpush1.bf16.msra.mxu0 %v4763
          %5533 = vmatprep.subr.bf16.mxu0 %v4768
          %5534 = vmatpush1.bf16.msra.mxu0 %v4767
          %5535 = vmatprep.subr.bf16.mxu0 %v4772
          %5536 = vmatpush1.bf16.msra.mxu0 %v4771
          %5537 = vmatprep.subr.bf16.mxu0 %v4776
          %5538 = vmatpush1.bf16.msra.mxu0 %v4775
          %5539 = vmatprep.subr.bf16.mxu0 %v4780
          %5540 = vmatpush1.bf16.msra.mxu0 %v4779
          %5541 = vmatprep.subr.bf16.mxu0 %v4784
          %5542 = vmatpush1.bf16.msra.mxu0 %v4783
          %5543 = vmatprep.subr.bf16.mxu0 %v4788
          %5544 = vmatpush1.bf16.msra.mxu0 %v4787
          %5545 = vmatprep.subr.bf16.mxu0 %v4792
          %5546 = vmatpush1.bf16.msra.mxu0 %v4791
          %5547 = vmatprep.subr.bf16.mxu0 %v4796
          %5548 = vmatpush1.bf16.msra.mxu0 %v4795
          %5549 = vmatprep.subr.bf16.mxu0 %v4800
          %5550 = vmatpush1.bf16.msra.mxu0 %v4799
          %5551 = vmatprep.subr.bf16.mxu0 %v4804
          %5552 = vmatpush1.bf16.msra.mxu0 %v4803
          %5553 = vmatprep.subr.bf16.mxu0 %v4808
          %5554 = vmatpush1.bf16.msra.mxu0 %v4807
          %5555 = vmatprep.subr.bf16.mxu0 %v4812
          %5556 = vmatpush1.bf16.msra.mxu0 %v4811
          %5557 = vmatprep.mubr.bf16.mxu0 %v2999
          %5558 = vmatmul.mubr.bf16.gmra.mrb[0].mxu0 %v2998
          %v5559 = vpop.f32.mrb[0].mxu0
          %v5560 = vadd.f32 %v5519, %v5559
          %v5561 = vpop.f32.mrb[0].mxu0
          %v5562 = vadd.f32 %v5521, %v5561
          %v5563 = vpop.f32.mrb[0].mxu0
          %v5564 = vpop.f32.mrb[0].mxu0
          %5565 = vdwg.mxu0
          %5566 = vmatprep.subr.bf16.mxu0 %v4816
          %5567 = vmatpush1.bf16.msra.mxu0 %v4815
          %5568 = vmatprep.subr.bf16.mxu0 %v4820
          %5569 = vmatpush1.bf16.msra.mxu0 %v4819
          %5570 = vmatprep.subr.bf16.mxu0 %v4824
          %5571 = vmatpush1.bf16.msra.mxu0 %v4823
          %5572 = vmatprep.subr.bf16.mxu0 %v4828
          %5573 = vmatpush1.bf16.msra.mxu0 %v4827
          %5574 = vmatprep.subr.bf16.mxu0 %v4832
          %5575 = vmatpush1.bf16.msra.mxu0 %v4831
          %5576 = vmatprep.subr.bf16.mxu0 %v4836
          %5577 = vmatpush1.bf16.msra.mxu0 %v4835
          %5578 = vmatprep.subr.bf16.mxu0 %v4840
          %5579 = vmatpush1.bf16.msra.mxu0 %v4839
          %5580 = vmatprep.subr.bf16.mxu0 %v4844
          %5581 = vmatpush1.bf16.msra.mxu0 %v4843
          %5582 = vmatprep.subr.bf16.mxu0 %v4848
          %5583 = vmatpush1.bf16.msra.mxu0 %v4847
          %5584 = vmatprep.subr.bf16.mxu0 %v4852
          %5585 = vmatpush1.bf16.msra.mxu0 %v4851
          %5586 = vmatprep.subr.bf16.mxu0 %v4856
          %5587 = vmatpush1.bf16.msra.mxu0 %v4855
          %5588 = vmatprep.subr.bf16.mxu0 %v4860
          %5589 = vmatpush1.bf16.msra.mxu0 %v4859
          %5590 = vmatprep.subr.bf16.mxu0 %v4864
          %5591 = vmatpush1.bf16.msra.mxu0 %v4863
          %5592 = vmatprep.subr.bf16.mxu0 %v4868
          %5593 = vmatpush1.bf16.msra.mxu0 %v4867
          %5594 = vmatprep.subr.bf16.mxu0 %v4872
          %5595 = vmatpush1.bf16.msra.mxu0 %v4871
          %5596 = vmatprep.subr.bf16.mxu0 %v4876
          %5597 = vmatpush1.bf16.msra.mxu0 %v4875
          %5598 = vmatprep.mubr.bf16.mxu0 %v3001
          %5599 = vmatmul.mubr.bf16.gmra.mrb[0].mxu0 %v3000
          %v5600 = vpop.f32.mrb[0].mxu0
          %v5601 = vadd.f32 %v5560, %v5600
          %v5602 = vpop.f32.mrb[0].mxu0
          %v5603 = vadd.f32 %v5562, %v5602
          %v5604 = vpop.f32.mrb[0].mxu0
          %v5605 = vpop.f32.mrb[0].mxu0
          %5606 = vdwg.mxu0
          %v5607 = vld [vmem:[#allocation17] sm:$0xf]
          %v5609 = vlaneseq
          %v5610 = vshrl.u32 %v5609, 7
          %v5611 = vsub.s32 0, %v5610
          %v5612 = vrot.slane %v5607, %v5611
          %v5613 = vlaneseq
          %v5614 = vshrl.u32 %v5613, 7
          %v5615 = vsub.s32 1, %v5614
          %v5616 = vrot.slane %v5607, %v5615
          %v5617 = vlaneseq
          %v5618 = vshrl.u32 %v5617, 7
          %v5619 = vsub.s32 2, %v5618
          %v5620 = vrot.slane %v5607, %v5619
          %v5621 = vlaneseq
          %v5622 = vshrl.u32 %v5621, 7
          %v5623 = vsub.s32 3, %v5622
          %v5624 = vrot.slane %v5607, %v5623
          %v5629 = vadd.f32 %v5396, %v5612
          %v5630 = vadd.f32 %v5398, %v5616
          %v5631 = vadd.f32 %v5601, %v5620
          %v5632 = vadd.f32 %v5603, %v5624
          %v5633 = vmax.f32 %v5629, 0.0
          %v5634 = vmax.f32 %v5630, 0.0
          %v5635 = vmax.f32 %v5631, 0.0
          %v5636 = vmax.f32 %v5632, 0.0
          %v5637 = vpack.c.bf16 %v5633, %v5633
          %v5638 = vpack.c.bf16 %v5634, %v5634
          %v5639 = vpack.c.bf16 %v5635, %v5635
          %v5640 = vpack.c.bf16 %v5636, %v5636
          %v5641 = vld [vmem:[#allocation18] sm:$0xff]
          %v5642 = vld [vmem:[#allocation18 + $0x8] sm:$0xff]
          %v5643 = vld [vmem:[#allocation18 + $0x10] sm:$0xff]
          %v5644 = vld [vmem:[#allocation18 + $0x18] sm:$0xff]
          %v5645 = vld [vmem:[#allocation18 + $0x20] sm:$0xff]
          %v5646 = vld [vmem:[#allocation18 + $0x28] sm:$0xff]
          %v5647 = vld [vmem:[#allocation18 + $0x30] sm:$0xff]
          %v5648 = vld [vmem:[#allocation18 + $0x38] sm:$0xff]
          %v5649 = vld [vmem:[#allocation18 + $0x40] sm:$0xff]
          %v5650 = vld [vmem:[#allocation18 + $0x48] sm:$0xff]
          %v5651 = vld [vmem:[#allocation18 + $0x50] sm:$0xff]
          %v5652 = vld [vmem:[#allocation18 + $0x58] sm:$0xff]
          %v5653 = vld [vmem:[#allocation18 + $0x60] sm:$0xff]
          %v5654 = vld [vmem:[#allocation18 + $0x68] sm:$0xff]
          %v5655 = vld [vmem:[#allocation18 + $0x70] sm:$0xff]
          %v5656 = vld [vmem:[#allocation18 + $0x78] sm:$0xff]
          %v5657 = vld [vmem:[#allocation18 + $0x80] sm:$0xff]
          %v5658 = vld [vmem:[#allocation18 + $0x88] sm:$0xff]
          %v5659 = vld [vmem:[#allocation18 + $0x90] sm:$0xff]
          %v5660 = vld [vmem:[#allocation18 + $0x98] sm:$0xff]
          %v5661 = vld [vmem:[#allocation18 + $0xa0] sm:$0xff]
          %v5662 = vld [vmem:[#allocation18 + $0xa8] sm:$0xff]
          %v5663 = vld [vmem:[#allocation18 + $0xb0] sm:$0xff]
          %v5664 = vld [vmem:[#allocation18 + $0xb8] sm:$0xff]
          %v5665 = vld [vmem:[#allocation18 + $0xc0] sm:$0xff]
          %v5666 = vld [vmem:[#allocation18 + $0xc8] sm:$0xff]
          %v5667 = vld [vmem:[#allocation18 + $0xd0] sm:$0xff]
          %v5668 = vld [vmem:[#allocation18 + $0xd8] sm:$0xff]
          %v5669 = vld [vmem:[#allocation18 + $0xe0] sm:$0xff]
          %v5670 = vld [vmem:[#allocation18 + $0xe8] sm:$0xff]
          %v5671 = vld [vmem:[#allocation18 + $0xf0] sm:$0xff]
          %v5672 = vld [vmem:[#allocation18 + $0xf8] sm:$0xff]
          %v5673 = vld [vmem:[#allocation18 + $0x100] sm:$0xff]
          %v5674 = vld [vmem:[#allocation18 + $0x108] sm:$0xff]
          %v5675 = vld [vmem:[#allocation18 + $0x110] sm:$0xff]
          %v5676 = vld [vmem:[#allocation18 + $0x118] sm:$0xff]
          %v5677 = vld [vmem:[#allocation18 + $0x120] sm:$0xff]
          %v5678 = vld [vmem:[#allocation18 + $0x128] sm:$0xff]
          %v5679 = vld [vmem:[#allocation18 + $0x130] sm:$0xff]
          %v5680 = vld [vmem:[#allocation18 + $0x138] sm:$0xff]
          %v5681 = vld [vmem:[#allocation18 + $0x140] sm:$0xff]
          %v5682 = vld [vmem:[#allocation18 + $0x148] sm:$0xff]
          %v5683 = vld [vmem:[#allocation18 + $0x150] sm:$0xff]
          %v5684 = vld [vmem:[#allocation18 + $0x158] sm:$0xff]
          %v5685 = vld [vmem:[#allocation18 + $0x160] sm:$0xff]
          %v5686 = vld [vmem:[#allocation18 + $0x168] sm:$0xff]
          %v5687 = vld [vmem:[#allocation18 + $0x170] sm:$0xff]
          %v5688 = vld [vmem:[#allocation18 + $0x178] sm:$0xff]
          %v5689 = vld [vmem:[#allocation18 + $0x180] sm:$0xff]
          %v5690 = vld [vmem:[#allocation18 + $0x188] sm:$0xff]
          %v5691 = vld [vmem:[#allocation18 + $0x190] sm:$0xff]
          %v5692 = vld [vmem:[#allocation18 + $0x198] sm:$0xff]
          %v5693 = vld [vmem:[#allocation18 + $0x1a0] sm:$0xff]
          %v5694 = vld [vmem:[#allocation18 + $0x1a8] sm:$0xff]
          %v5695 = vld [vmem:[#allocation18 + $0x1b0] sm:$0xff]
          %v5696 = vld [vmem:[#allocation18 + $0x1b8] sm:$0xff]
          %v5697 = vld [vmem:[#allocation18 + $0x1c0] sm:$0xff]
          %v5698 = vld [vmem:[#allocation18 + $0x1c8] sm:$0xff]
          %v5699 = vld [vmem:[#allocation18 + $0x1d0] sm:$0xff]
          %v5700 = vld [vmem:[#allocation18 + $0x1d8] sm:$0xff]
          %v5701 = vld [vmem:[#allocation18 + $0x1e0] sm:$0xff]
          %v5702 = vld [vmem:[#allocation18 + $0x1e8] sm:$0xff]
          %v5703 = vld [vmem:[#allocation18 + $0x1f0] sm:$0xff]
          %v5704 = vld [vmem:[#allocation18 + $0x1f8] sm:$0xff]
          %v5705 = vld [vmem:[#allocation20] sm:$0x3]
          %v5770 = vunpack.c.l.b16 %v5641
          %v5771 = vunpack.c.h.b16 %v5641
          %v5772 = vunpack.c.l.b16 %v5642
          %v5773 = vunpack.c.h.b16 %v5642
          %v5774 = vunpack.c.l.b16 %v5643
          %v5775 = vunpack.c.h.b16 %v5643
          %v5776 = vunpack.c.l.b16 %v5644
          %v5777 = vunpack.c.h.b16 %v5644
          %v5778 = vunpack.c.l.b16 %v5645
          %v5779 = vunpack.c.h.b16 %v5645
          %v5780 = vunpack.c.l.b16 %v5646
          %v5781 = vunpack.c.h.b16 %v5646
          %v5782 = vunpack.c.l.b16 %v5647
          %v5783 = vunpack.c.h.b16 %v5647
          %v5784 = vunpack.c.l.b16 %v5648
          %v5785 = vunpack.c.h.b16 %v5648
          %v5786 = vunpack.c.l.b16 %v5649
          %v5787 = vunpack.c.h.b16 %v5649
          %v5788 = vunpack.c.l.b16 %v5650
          %v5789 = vunpack.c.h.b16 %v5650
          %v5790 = vunpack.c.l.b16 %v5651
          %v5791 = vunpack.c.h.b16 %v5651
          %v5792 = vunpack.c.l.b16 %v5652
          %v5793 = vunpack.c.h.b16 %v5652
          %v5794 = vunpack.c.l.b16 %v5653
          %v5795 = vunpack.c.h.b16 %v5653
          %v5796 = vunpack.c.l.b16 %v5654
          %v5797 = vunpack.c.h.b16 %v5654
          %v5798 = vunpack.c.l.b16 %v5655
          %v5799 = vunpack.c.h.b16 %v5655
          %v5800 = vunpack.c.l.b16 %v5656
          %v5801 = vunpack.c.h.b16 %v5656
          %v5802 = vunpack.c.l.b16 %v5657
          %v5803 = vunpack.c.h.b16 %v5657
          %v5804 = vunpack.c.l.b16 %v5658
          %v5805 = vunpack.c.h.b16 %v5658
          %v5806 = vunpack.c.l.b16 %v5659
          %v5807 = vunpack.c.h.b16 %v5659
          %v5808 = vunpack.c.l.b16 %v5660
          %v5809 = vunpack.c.h.b16 %v5660
          %v5810 = vunpack.c.l.b16 %v5661
          %v5811 = vunpack.c.h.b16 %v5661
          %v5812 = vunpack.c.l.b16 %v5662
          %v5813 = vunpack.c.h.b16 %v5662
          %v5814 = vunpack.c.l.b16 %v5663
          %v5815 = vunpack.c.h.b16 %v5663
          %v5816 = vunpack.c.l.b16 %v5664
          %v5817 = vunpack.c.h.b16 %v5664
          %v5818 = vunpack.c.l.b16 %v5665
          %v5819 = vunpack.c.h.b16 %v5665
          %v5820 = vunpack.c.l.b16 %v5666
          %v5821 = vunpack.c.h.b16 %v5666
          %v5822 = vunpack.c.l.b16 %v5667
          %v5823 = vunpack.c.h.b16 %v5667
          %v5824 = vunpack.c.l.b16 %v5668
          %v5825 = vunpack.c.h.b16 %v5668
          %v5826 = vunpack.c.l.b16 %v5669
          %v5827 = vunpack.c.h.b16 %v5669
          %v5828 = vunpack.c.l.b16 %v5670
          %v5829 = vunpack.c.h.b16 %v5670
          %v5830 = vunpack.c.l.b16 %v5671
          %v5831 = vunpack.c.h.b16 %v5671
          %v5832 = vunpack.c.l.b16 %v5672
          %v5833 = vunpack.c.h.b16 %v5672
          %v5834 = vunpack.c.l.b16 %v5673
          %v5835 = vunpack.c.h.b16 %v5673
          %v5836 = vunpack.c.l.b16 %v5674
          %v5837 = vunpack.c.h.b16 %v5674
          %v5838 = vunpack.c.l.b16 %v5675
          %v5839 = vunpack.c.h.b16 %v5675
          %v5840 = vunpack.c.l.b16 %v5676
          %v5841 = vunpack.c.h.b16 %v5676
          %v5842 = vunpack.c.l.b16 %v5677
          %v5843 = vunpack.c.h.b16 %v5677
          %v5844 = vunpack.c.l.b16 %v5678
          %v5845 = vunpack.c.h.b16 %v5678
          %v5846 = vunpack.c.l.b16 %v5679
          %v5847 = vunpack.c.h.b16 %v5679
          %v5848 = vunpack.c.l.b16 %v5680
          %v5849 = vunpack.c.h.b16 %v5680
          %v5850 = vunpack.c.l.b16 %v5681
          %v5851 = vunpack.c.h.b16 %v5681
          %v5852 = vunpack.c.l.b16 %v5682
          %v5853 = vunpack.c.h.b16 %v5682
          %v5854 = vunpack.c.l.b16 %v5683
          %v5855 = vunpack.c.h.b16 %v5683
          %v5856 = vunpack.c.l.b16 %v5684
          %v5857 = vunpack.c.h.b16 %v5684
          %v5858 = vunpack.c.l.b16 %v5685
          %v5859 = vunpack.c.h.b16 %v5685
          %v5860 = vunpack.c.l.b16 %v5686
          %v5861 = vunpack.c.h.b16 %v5686
          %v5862 = vunpack.c.l.b16 %v5687
          %v5863 = vunpack.c.h.b16 %v5687
          %v5864 = vunpack.c.l.b16 %v5688
          %v5865 = vunpack.c.h.b16 %v5688
          %v5866 = vunpack.c.l.b16 %v5689
          %v5867 = vunpack.c.h.b16 %v5689
          %v5868 = vunpack.c.l.b16 %v5690
          %v5869 = vunpack.c.h.b16 %v5690
          %v5870 = vunpack.c.l.b16 %v5691
          %v5871 = vunpack.c.h.b16 %v5691
          %v5872 = vunpack.c.l.b16 %v5692
          %v5873 = vunpack.c.h.b16 %v5692
          %v5874 = vunpack.c.l.b16 %v5693
          %v5875 = vunpack.c.h.b16 %v5693
          %v5876 = vunpack.c.l.b16 %v5694
          %v5877 = vunpack.c.h.b16 %v5694
          %v5878 = vunpack.c.l.b16 %v5695
          %v5879 = vunpack.c.h.b16 %v5695
          %v5880 = vunpack.c.l.b16 %v5696
          %v5881 = vunpack.c.h.b16 %v5696
          %v5882 = vunpack.c.l.b16 %v5697
          %v5883 = vunpack.c.h.b16 %v5697
          %v5884 = vunpack.c.l.b16 %v5698
          %v5885 = vunpack.c.h.b16 %v5698
          %v5886 = vunpack.c.l.b16 %v5699
          %v5887 = vunpack.c.h.b16 %v5699
          %v5888 = vunpack.c.l.b16 %v5700
          %v5889 = vunpack.c.h.b16 %v5700
          %v5890 = vunpack.c.l.b16 %v5701
          %v5891 = vunpack.c.h.b16 %v5701
          %v5892 = vunpack.c.l.b16 %v5702
          %v5893 = vunpack.c.h.b16 %v5702
          %v5894 = vunpack.c.l.b16 %v5703
          %v5895 = vunpack.c.h.b16 %v5703
          %v5896 = vunpack.c.l.b16 %v5704
          %v5897 = vunpack.c.h.b16 %v5704
          %v5898 = vpack.c.b16 %v5772, %v5770
          %v5899 = vpack.c.b16 %v5773, %v5771
          %v5900 = vpack.c.b16 %v5776, %v5774
          %v5901 = vpack.c.b16 %v5777, %v5775
          %v5902 = vpack.c.b16 %v5780, %v5778
          %v5903 = vpack.c.b16 %v5781, %v5779
          %v5904 = vpack.c.b16 %v5784, %v5782
          %v5905 = vpack.c.b16 %v5785, %v5783
          %v5906 = vpack.c.b16 %v5788, %v5786
          %v5907 = vpack.c.b16 %v5789, %v5787
          %v5908 = vpack.c.b16 %v5792, %v5790
          %v5909 = vpack.c.b16 %v5793, %v5791
          %v5910 = vpack.c.b16 %v5796, %v5794
          %v5911 = vpack.c.b16 %v5797, %v5795
          %v5912 = vpack.c.b16 %v5800, %v5798
          %v5913 = vpack.c.b16 %v5801, %v5799
          %v5914 = vpack.c.b16 %v5804, %v5802
          %v5915 = vpack.c.b16 %v5805, %v5803
          %v5916 = vpack.c.b16 %v5808, %v5806
          %v5917 = vpack.c.b16 %v5809, %v5807
          %v5918 = vpack.c.b16 %v5812, %v5810
          %v5919 = vpack.c.b16 %v5813, %v5811
          %v5920 = vpack.c.b16 %v5816, %v5814
          %v5921 = vpack.c.b16 %v5817, %v5815
          %v5922 = vpack.c.b16 %v5820, %v5818
          %v5923 = vpack.c.b16 %v5821, %v5819
          %v5924 = vpack.c.b16 %v5824, %v5822
          %v5925 = vpack.c.b16 %v5825, %v5823
          %v5926 = vpack.c.b16 %v5828, %v5826
          %v5927 = vpack.c.b16 %v5829, %v5827
          %v5928 = vpack.c.b16 %v5832, %v5830
          %v5929 = vpack.c.b16 %v5833, %v5831
          %v5930 = vpack.c.b16 %v5836, %v5834
          %v5931 = vpack.c.b16 %v5837, %v5835
          %v5932 = vpack.c.b16 %v5840, %v5838
          %v5933 = vpack.c.b16 %v5841, %v5839
          %v5934 = vpack.c.b16 %v5844, %v5842
          %v5935 = vpack.c.b16 %v5845, %v5843
          %v5936 = vpack.c.b16 %v5848, %v5846
          %v5937 = vpack.c.b16 %v5849, %v5847
          %v5938 = vpack.c.b16 %v5852, %v5850
          %v5939 = vpack.c.b16 %v5853, %v5851
          %v5940 = vpack.c.b16 %v5856, %v5854
          %v5941 = vpack.c.b16 %v5857, %v5855
          %v5942 = vpack.c.b16 %v5860, %v5858
          %v5943 = vpack.c.b16 %v5861, %v5859
          %v5944 = vpack.c.b16 %v5864, %v5862
          %v5945 = vpack.c.b16 %v5865, %v5863
          %v5946 = vpack.c.b16 %v5868, %v5866
          %v5947 = vpack.c.b16 %v5869, %v5867
          %v5948 = vpack.c.b16 %v5872, %v5870
          %v5949 = vpack.c.b16 %v5873, %v5871
          %v5950 = vpack.c.b16 %v5876, %v5874
          %v5951 = vpack.c.b16 %v5877, %v5875
          %v5952 = vpack.c.b16 %v5880, %v5878
          %v5953 = vpack.c.b16 %v5881, %v5879
          %v5954 = vpack.c.b16 %v5884, %v5882
          %v5955 = vpack.c.b16 %v5885, %v5883
          %v5956 = vpack.c.b16 %v5888, %v5886
          %v5957 = vpack.c.b16 %v5889, %v5887
          %v5958 = vpack.c.b16 %v5892, %v5890
          %v5959 = vpack.c.b16 %v5893, %v5891
          %v5960 = vpack.c.b16 %v5896, %v5894
          %v5961 = vpack.c.b16 %v5897, %v5895
          %v6027 = vlaneseq
          %v6028 = vshrl.u32 %v6027, 7
          %v6029 = vsub.s32 0, %v6028
          %v6030 = vrot.slane %v5705, %v6029
          %v6031 = vlaneseq
          %v6032 = vshrl.u32 %v6031, 7
          %v6033 = vsub.s32 1, %v6032
          %v6034 = vrot.slane %v5705, %v6033
          %6037 = vmatprep.subr.bf16.mxu0 %v5899
          %6038 = vmatpush1.bf16.msra.mxu0 %v5898
          %6039 = vmatprep.subr.bf16.mxu0 %v5901
          %6040 = vmatpush1.bf16.msra.mxu0 %v5900
          %6041 = vmatprep.subr.bf16.mxu0 %v5903
          %6042 = vmatpush1.bf16.msra.mxu0 %v5902
          %6043 = vmatprep.subr.bf16.mxu0 %v5905
          %6044 = vmatpush1.bf16.msra.mxu0 %v5904
          %6045 = vmatprep.subr.bf16.mxu0 %v5907
          %6046 = vmatpush1.bf16.msra.mxu0 %v5906
          %6047 = vmatprep.subr.bf16.mxu0 %v5909
          %6048 = vmatpush1.bf16.msra.mxu0 %v5908
          %6049 = vmatprep.subr.bf16.mxu0 %v5911
          %6050 = vmatpush1.bf16.msra.mxu0 %v5910
          %6051 = vmatprep.subr.bf16.mxu0 %v5913
          %6052 = vmatpush1.bf16.msra.mxu0 %v5912
          %6053 = vmatprep.subr.bf16.mxu0 %v5915
          %6054 = vmatpush1.bf16.msra.mxu0 %v5914
          %6055 = vmatprep.subr.bf16.mxu0 %v5917
          %6056 = vmatpush1.bf16.msra.mxu0 %v5916
          %6057 = vmatprep.subr.bf16.mxu0 %v5919
          %6058 = vmatpush1.bf16.msra.mxu0 %v5918
          %6059 = vmatprep.subr.bf16.mxu0 %v5921
          %6060 = vmatpush1.bf16.msra.mxu0 %v5920
          %6061 = vmatprep.subr.bf16.mxu0 %v5923
          %6062 = vmatpush1.bf16.msra.mxu0 %v5922
          %6063 = vmatprep.subr.bf16.mxu0 %v5925
          %6064 = vmatpush1.bf16.msra.mxu0 %v5924
          %6065 = vmatprep.subr.bf16.mxu0 %v5927
          %6066 = vmatpush1.bf16.msra.mxu0 %v5926
          %6067 = vmatprep.subr.bf16.mxu0 %v5929
          %6068 = vmatpush1.bf16.msra.mxu0 %v5928
          %6069 = vmatprep.mubr.bf16.mxu0 %v5638
          %6070 = vmatmul.mubr.bf16.gmra.mrb[0].mxu0 %v5637
          %v6071 = vpop.f32.mrb[0].mxu0
          %v6072 = vadd.f32 %v6030, %v6071
          %v6073 = vpop.f32.mrb[0].mxu0
          %v6074 = vadd.f32 %v6034, %v6073
          %v6075 = vpop.f32.mrb[0].mxu0
          %v6076 = vpop.f32.mrb[0].mxu0
          %6077 = vdwg.mxu0
          %6078 = vmatprep.subr.bf16.mxu0 %v5931
          %6079 = vmatpush1.bf16.msra.mxu0 %v5930
          %6080 = vmatprep.subr.bf16.mxu0 %v5933
          %6081 = vmatpush1.bf16.msra.mxu0 %v5932
          %6082 = vmatprep.subr.bf16.mxu0 %v5935
          %6083 = vmatpush1.bf16.msra.mxu0 %v5934
          %6084 = vmatprep.subr.bf16.mxu0 %v5937
          %6085 = vmatpush1.bf16.msra.mxu0 %v5936
          %6086 = vmatprep.subr.bf16.mxu0 %v5939
          %6087 = vmatpush1.bf16.msra.mxu0 %v5938
          %6088 = vmatprep.subr.bf16.mxu0 %v5941
          %6089 = vmatpush1.bf16.msra.mxu0 %v5940
          %6090 = vmatprep.subr.bf16.mxu0 %v5943
          %6091 = vmatpush1.bf16.msra.mxu0 %v5942
          %6092 = vmatprep.subr.bf16.mxu0 %v5945
          %6093 = vmatpush1.bf16.msra.mxu0 %v5944
          %6094 = vmatprep.subr.bf16.mxu0 %v5947
          %6095 = vmatpush1.bf16.msra.mxu0 %v5946
          %6096 = vmatprep.subr.bf16.mxu0 %v5949
          %6097 = vmatpush1.bf16.msra.mxu0 %v5948
          %6098 = vmatprep.subr.bf16.mxu0 %v5951
          %6099 = vmatpush1.bf16.msra.mxu0 %v5950
          %6100 = vmatprep.subr.bf16.mxu0 %v5953
          %6101 = vmatpush1.bf16.msra.mxu0 %v5952
          %6102 = vmatprep.subr.bf16.mxu0 %v5955
          %6103 = vmatpush1.bf16.msra.mxu0 %v5954
          %6104 = vmatprep.subr.bf16.mxu0 %v5957
          %6105 = vmatpush1.bf16.msra.mxu0 %v5956
          %6106 = vmatprep.subr.bf16.mxu0 %v5959
          %6107 = vmatpush1.bf16.msra.mxu0 %v5958
          %6108 = vmatprep.subr.bf16.mxu0 %v5961
          %6109 = vmatpush1.bf16.msra.mxu0 %v5960
          %6110 = vmatprep.mubr.bf16.mxu0 %v5640
          %6111 = vmatmul.mubr.bf16.gmra.mrb[0].mxu0 %v5639
          %v6112 = vpop.f32.mrb[0].mxu0
          %v6113 = vadd.f32 %v6072, %v6112
          %v6114 = vpop.f32.mrb[0].mxu0
          %v6115 = vadd.f32 %v6074, %v6114
          %v6116 = vpop.f32.mrb[0].mxu0
          %v6117 = vpop.f32.mrb[0].mxu0
          %6118 = vdwg.mxu0
          %v6119 = vmax.f32 %v6113, 0.0
          %v6120 = vmax.f32 %v6115, 0.0
          %v6121 = vpack.c.bf16 %v6119, %v6119
          %v6122 = vpack.c.bf16 %v6120, %v6120
          %v6123 = vld [vmem:[#allocation21] sm:$0xf]
          %v6124 = vld [vmem:[#allocation21 + $0x4] sm:$0xf]
          %v6125 = vld [vmem:[#allocation21 + $0x8] sm:$0xf]
          %v6126 = vld [vmem:[#allocation21 + $0xc] sm:$0xf]
          %v6127 = vld [vmem:[#allocation21 + $0x10] sm:$0xf]
          %v6128 = vld [vmem:[#allocation21 + $0x14] sm:$0xf]
          %v6129 = vld [vmem:[#allocation21 + $0x18] sm:$0xf]
          %v6130 = vld [vmem:[#allocation21 + $0x1c] sm:$0xf]
          %v6131 = vld [vmem:[#allocation21 + $0x20] sm:$0xf]
          %v6132 = vld [vmem:[#allocation21 + $0x24] sm:$0xf]
          %v6133 = vld [vmem:[#allocation21 + $0x28] sm:$0xf]
          %v6134 = vld [vmem:[#allocation21 + $0x2c] sm:$0xf]
          %v6135 = vld [vmem:[#allocation21 + $0x30] sm:$0xf]
          %v6136 = vld [vmem:[#allocation21 + $0x34] sm:$0xf]
          %v6137 = vld [vmem:[#allocation21 + $0x38] sm:$0xf]
          %v6138 = vld [vmem:[#allocation21 + $0x3c] sm:$0xf]
          %v6139 = vld [vmem:[#allocation21 + $0x40] sm:$0xf]
          %v6140 = vld [vmem:[#allocation21 + $0x44] sm:$0xf]
          %v6141 = vld [vmem:[#allocation21 + $0x48] sm:$0xf]
          %v6142 = vld [vmem:[#allocation21 + $0x4c] sm:$0xf]
          %v6143 = vld [vmem:[#allocation21 + $0x50] sm:$0xf]
          %v6144 = vld [vmem:[#allocation21 + $0x54] sm:$0xf]
          %v6145 = vld [vmem:[#allocation21 + $0x58] sm:$0xf]
          %v6146 = vld [vmem:[#allocation21 + $0x5c] sm:$0xf]
          %v6147 = vld [vmem:[#allocation21 + $0x60] sm:$0xf]
          %v6148 = vld [vmem:[#allocation21 + $0x64] sm:$0xf]
          %v6149 = vld [vmem:[#allocation21 + $0x68] sm:$0xf]
          %v6150 = vld [vmem:[#allocation21 + $0x6c] sm:$0xf]
          %v6151 = vld [vmem:[#allocation21 + $0x70] sm:$0xf]
          %v6152 = vld [vmem:[#allocation21 + $0x74] sm:$0xf]
          %v6153 = vld [vmem:[#allocation21 + $0x78] sm:$0xf]
          %v6154 = vld [vmem:[#allocation21 + $0x7c] sm:$0xf]
          %v6155 = vld [vmem:[#allocation23] sm:$0x1]
          %v6188 = vunpack.c.l.b16 %v6123
          %v6189 = vunpack.c.l.b16 %v6124
          %v6190 = vunpack.c.l.b16 %v6125
          %v6191 = vunpack.c.l.b16 %v6126
          %v6192 = vunpack.c.l.b16 %v6127
          %v6193 = vunpack.c.l.b16 %v6128
          %v6194 = vunpack.c.l.b16 %v6129
          %v6195 = vunpack.c.l.b16 %v6130
          %v6196 = vunpack.c.l.b16 %v6131
          %v6197 = vunpack.c.l.b16 %v6132
          %v6198 = vunpack.c.l.b16 %v6133
          %v6199 = vunpack.c.l.b16 %v6134
          %v6200 = vunpack.c.l.b16 %v6135
          %v6201 = vunpack.c.l.b16 %v6136
          %v6202 = vunpack.c.l.b16 %v6137
          %v6203 = vunpack.c.l.b16 %v6138
          %v6204 = vunpack.c.l.b16 %v6139
          %v6205 = vunpack.c.l.b16 %v6140
          %v6206 = vunpack.c.l.b16 %v6141
          %v6207 = vunpack.c.l.b16 %v6142
          %v6208 = vunpack.c.l.b16 %v6143
          %v6209 = vunpack.c.l.b16 %v6144
          %v6210 = vunpack.c.l.b16 %v6145
          %v6211 = vunpack.c.l.b16 %v6146
          %v6212 = vunpack.c.l.b16 %v6147
          %v6213 = vunpack.c.l.b16 %v6148
          %v6214 = vunpack.c.l.b16 %v6149
          %v6215 = vunpack.c.l.b16 %v6150
          %v6216 = vunpack.c.l.b16 %v6151
          %v6217 = vunpack.c.l.b16 %v6152
          %v6218 = vunpack.c.l.b16 %v6153
          %v6219 = vunpack.c.l.b16 %v6154
          %v6220 = vpack.c.b16 %v6189, %v6188
          %v6221 = vpack.c.b16 %v6191, %v6190
          %v6222 = vpack.c.b16 %v6193, %v6192
          %v6223 = vpack.c.b16 %v6195, %v6194
          %v6224 = vpack.c.b16 %v6197, %v6196
          %v6225 = vpack.c.b16 %v6199, %v6198
          %v6226 = vpack.c.b16 %v6201, %v6200
          %v6227 = vpack.c.b16 %v6203, %v6202
          %v6228 = vpack.c.b16 %v6205, %v6204
          %v6229 = vpack.c.b16 %v6207, %v6206
          %v6230 = vpack.c.b16 %v6209, %v6208
          %v6231 = vpack.c.b16 %v6211, %v6210
          %v6232 = vpack.c.b16 %v6213, %v6212
          %v6233 = vpack.c.b16 %v6215, %v6214
          %v6234 = vpack.c.b16 %v6217, %v6216
          %v6235 = vpack.c.b16 %v6219, %v6218
          %6252 = vmatprep.subr.bf16.mxu0 0
          %6253 = vmatpush1.bf16.msra.mxu0 %v6220
          %6254 = vmatprep.subr.bf16.mxu0 0
          %6255 = vmatpush1.bf16.msra.mxu0 %v6221
          %6256 = vmatprep.subr.bf16.mxu0 0
          %6257 = vmatpush1.bf16.msra.mxu0 %v6222
          %6258 = vmatprep.subr.bf16.mxu0 0
          %6259 = vmatpush1.bf16.msra.mxu0 %v6223
          %6260 = vmatprep.subr.bf16.mxu0 0
          %6261 = vmatpush1.bf16.msra.mxu0 %v6224
          %6262 = vmatprep.subr.bf16.mxu0 0
          %6263 = vmatpush1.bf16.msra.mxu0 %v6225
          %6264 = vmatprep.subr.bf16.mxu0 0
          %6265 = vmatpush1.bf16.msra.mxu0 %v6226
          %6266 = vmatprep.subr.bf16.mxu0 0
          %6267 = vmatpush1.bf16.msra.mxu0 %v6227
          %6268 = vmatprep.subr.bf16.mxu0 0
          %6269 = vmatpush1.bf16.msra.mxu0 %v6228
          %6270 = vmatprep.subr.bf16.mxu0 0
          %6271 = vmatpush1.bf16.msra.mxu0 %v6229
          %6272 = vmatprep.subr.bf16.mxu0 0
          %6273 = vmatpush1.bf16.msra.mxu0 %v6230
          %6274 = vmatprep.subr.bf16.mxu0 0
          %6275 = vmatpush1.bf16.msra.mxu0 %v6231
          %6276 = vmatprep.subr.bf16.mxu0 0
          %6277 = vmatpush1.bf16.msra.mxu0 %v6232
          %6278 = vmatprep.subr.bf16.mxu0 0
          %6279 = vmatpush1.bf16.msra.mxu0 %v6233
          %6280 = vmatprep.subr.bf16.mxu0 0
          %6281 = vmatpush1.bf16.msra.mxu0 %v6234
          %6282 = vmatprep.subr.bf16.mxu0 0
          %6283 = vmatpush1.bf16.msra.mxu0 %v6235
          %6284 = vmatprep.mubr.bf16.mxu0 %v6122
          %6285 = vmatmul.mubr.bf16.gmra.mrb[0].mxu0 %v6121
          %v6286 = vpop.f32.mrb[0].mxu0
          %v6287 = vadd.f32 %v6155, %v6286
          %v6288 = vpop.f32.mrb[0].mxu0
          %v6289 = vpop.f32.mrb[0].mxu0
          %v6290 = vpop.f32.mrb[0].mxu0
          %6291 = vdwg.mxu0
          %vm6292 = vcmask 8192
          %6293 = vst.msk [vmem:[%s656] sm:$0x1] %vm6292, %v6287
        $region132: #{forward.1} parent=71 // pred_fallthru
          _
        %s6294 = sand.u32 %s343, 1
        %s6295 = scalar_lea.sflag [#allocation5], %s6294
        %s6296 = sand.u32 %s343, 1
        %s6297 = scalar_lea.vmem [#allocation24], %s6296
        // Predicated region
        $region133: #{forward.1} parent=71 // pred_check
          %p6298 = pneg %p353
        $region134: #{forward.1} parent=71 // pred_check_branch
          %6300 = sbr.rel (%p6298) target = $region136
        $region135: #{forward.1} parent=71 // pred_region
          %s6302 = ssub.s32 16, 16
          %6303 = vsyncadd %s6295, %s6302
          %s6304 = smul.addr %s42, 16
          %s6305 = scalar_lea.hbm %s13, %s6304
          %s6307 = sshll.u32 %s6297, 4
          %s6308 = int_to_ptr.vmem [resolvable:$true] %s6307
          %6310 = dma.vmem_to_hbm [thread:$0]  %s6308, 16, %s6305, %s6295
        $region136: #{forward.1} parent=71 // pred_fallthru
          _
      $region72: #{forward.1} parent=5 // pred_fallthru
        _
      %p6311 = scmp.le.s32.totalorder 2, %s33
      // Predicated region
      $region137: #{forward.1} parent=5 // pred_check
        %p6312 = pneg %p6311
      $region138: #{forward.1} parent=5 // pred_check_branch
        %6314 = sbr.rel (%p6312) target = $region140
      $region139: #{forward.1} parent=5 // pred_region
        %s6315 = ssub.s32 %s33, 2
        // Predicated region
        $region141: #{forward.1} parent=139 // pred_check
          %p6316 = pneg %p359
        $region142: #{forward.1} parent=139 // pred_check_branch
          %6318 = sbr.rel (%p6316) target = $region144
        $region143: #{forward.1} parent=139 // pred_region
          %s6319 = sand.u32 %s344, 1
          %s6320 = scalar_lea.sflag [#allocation5], %s6319
          %s6321 = sand.u32 %s344, 1
          %s6322 = scalar_lea.vmem [#allocation24], %s6321
          %6323 = dma.done %s6320, 16
        $region144: #{forward.1} parent=139 // pred_fallthru
          _
      $region140: #{forward.1} parent=5 // pred_fallthru
        _
    $region6: #{forward.1} parent=1 // loop_footer
      %s37 = sadd.s32 1, %s33
    $region7: #{forward.1} parent=1 // loop_footer_branch
      %32 = sbr.rel target = $region3
    $region8: #{forward.1} parent=1 // loop_exit
      _
    %6324 = vsyncpa [#allocation4], 1
    %s6325 = scalar_lea.sflag [#allocation4], 1
    %6326 = vsyncpa %s6325, 1
    %6327 = vsyncpa [#allocation7], 1
    %6328 = vsyncpa [#allocation10], 1
    %6329 = vsyncpa [#allocation13], 1
    %s6330 = scalar_lea.sflag [#allocation13], 1
    %6331 = vsyncpa %s6330, 1
    %6332 = vsyncpa [#allocation16], 1
    %6333 = vsyncpa [#allocation19], 1
    %6334 = vsyncpa [#allocation22], 1
    %6335 = vsyncpa [#allocation5], 1
    %s6336 = scalar_lea.sflag [#allocation5], 1
    %6337 = vsyncpa %s6336, 1

</llo_original>
